<compile_context>
chip_gen: v7x
topology: tpu7x:2x2x1
jax: 0.10.0
libtpu: 0.0.40
codegen_flags: <defaults>
</compile_context>

<pallas_src>
import functools

import numpy as np
import jax
import jax.numpy as jnp
from jax import lax
from jax.experimental import pallas as pl
from jax.experimental.pallas import tpu as pltpu


_CP = 16          # padded channel count (sublane multiple); real channels = 10.
_TB = 8           # samples per grid step (block sublane dims stay multiples of 8)
_OUT_LANES = 128  # lane-dense head output (cols 10..127 are zero, sliced off)

# (input spatial size, stride, padding) for conv1..conv4 at a 28x28 MNIST input.
_LAYER_CFG = ((28, 2, 1), (14, 2, 1), (7, 2, 0), (3, 1, 0))


# ------------------------------ Pallas kernel -------------------------------

def _fused_kernel(*refs, num_layers, with_head):
    """Entire MNISTClassifier forward for one TB-sample tile.

    refs = [x, (sel, m, bias) * num_layers, (lin_wT, lin_b if with_head), out]
      x    : (TB*28, 28)                 flat input rows (b, h), lanes = w
      sel  : (3, TB*Hout, TB*Hin)        block-diag 0/1 batched row selection
      m    : (3, Cin_p*Win, CP*Wout)     col selection fused with channel mixing
      bias : (1, CP*Wout)
    Activations live entirely in VMEM/vregs as flat (TB*H, CP*W) values.
    """
    x_ref = refs[0]
    layer_refs = [refs[1 + 3 * l: 4 + 3 * l] for l in range(num_layers)]
    pos = 1 + 3 * num_layers
    if with_head:
        linw_ref, linb_ref = refs[pos], refs[pos + 1]
        out_ref = refs[pos + 2]
    else:
        out_ref = refs[pos]

    a = x_ref[...]                                      # (TB*Hin, Cin*Win)
    for l, (s_ref, m_ref, b_ref) in enumerate(layer_refs):
        acc = None
        for i in range(3):                              # 3x3 kernel rows
            v = jnp.dot(s_ref[i], a, preferred_element_type=jnp.float32)
            t = jnp.dot(v, m_ref[i], preferred_element_type=jnp.float32)
            acc = t if acc is None else acc + t
        acc = acc + b_ref[...]
        a = jax.nn.sigmoid(acc) if l != 3 else acc      # conv4: no sigmoid

    if with_head:
        # conv4 output is 1x1 spatial -> mean is a no-op; a is (TB, CP).
        s = jax.nn.sigmoid(a)
        logits = (jnp.dot(s, linw_ref[...], preferred_element_type=jnp.float32)
                  + linb_ref[...])
        out_ref[...] = logits.astype(out_ref.dtype)     # one dense (TB,128) store
    else:
        out_ref[...] = a.astype(out_ref.dtype)


# ------------------------------ wrapper / call -------------------------------

@functools.partial(jax.jit, static_argnames=("k",))
def mnist_forward(x, prepped, k=-1):
    """k == -1: (N, 10) logits.  k in {1,2,3}: NCHW activation after conv{k}."""
    n = x.shape[0]
    n_pad = ((n + _TB - 1) // _TB) * _TB
    xin = x[:, 0, :, :]                                 # native (N, H, W) layout
    if n_pad != n:
        xin = jnp.pad(xin, ((0, n_pad - n), (0, 0), (0, 0)))
    x_flat = xin.reshape(n_pad * 28, 28)                # rows (b, h), lanes = w

    num_layers = 4 if k == -1 else k
    with_head = (k == -1)
    grid = (n_pad // _TB,)

    inputs = [x_flat]
    in_specs = [pl.BlockSpec((_TB * 28, 28), lambda b: (b, 0))]
    for (s, m, bias) in prepped["layers"][:num_layers]:
        inputs += [s, m, bias]
        # Weights: full-array blocks, constant index map -> fetched once, resident.
        in_specs += [pl.BlockSpec(s.shape, lambda b: (0, 0, 0)),
                     pl.BlockSpec(m.shape, lambda b: (0, 0, 0)),
                     pl.BlockSpec(bias.shape, lambda b: (0, 0))]

    if with_head:
        inputs += [prepped["lin_wT"], prepped["lin_b"]]
        in_specs += [pl.BlockSpec(prepped["lin_wT"].shape, lambda b: (0, 0)),
                     pl.BlockSpec(prepped["lin_b"].shape, lambda b: (0, 0))]
        out_shape = jax.ShapeDtypeStruct((n_pad, _OUT_LANES), jnp.float32)
        out_spec = pl.BlockSpec((_TB, _OUT_LANES), lambda b: (b, 0))
        hout = None
    else:
        hin, stride, pad = _LAYER_CFG[num_layers - 1]
        hout = (hin + 2 * pad - 3) // stride + 1
        lanes = _CP * hout
        out_shape = jax.ShapeDtypeStruct((n_pad * hout, lanes), jnp.float32)
        out_spec = pl.BlockSpec((_TB * hout, lanes), lambda b: (b, 0))

    kern = functools.partial(_fused_kernel, num_layers=num_layers,
                             with_head=with_head)
    out = pl.pallas_call(
        kern,
        out_shape=out_shape,
        grid=grid,
        in_specs=in_specs,
        out_specs=out_spec,
        compiler_params=pltpu.CompilerParams(
            dimension_semantics=("parallel",)),   # megacore-shard the batch
    )(*inputs)

    if with_head:
        return out[:n, :10]
    # Debug (early-exit) path only: un-flatten the lane-dense intermediate back
    # to NCHW and drop channel padding (wrapper-side XLA, off the hot path).
    out = out.reshape(n_pad, hout, _CP, hout).transpose(0, 2, 1, 3)
    return out[:n, :10]


# ----------------------- one-time weight-side prep (numpy) -------------------

def _selection(hin, stride, pad, ksize=3):
    """sel[t, o, src] = 1 iff src == stride*o + t - pad (zero padding = zero row)."""
    hout = (hin + 2 * pad - ksize) // stride + 1
    sel = np.zeros((ksize, hout, hin), np.float32)
    for t in range(ksize):
        for o in range(hout):
            src = stride * o + t - pad
            if 0 <= src < hin:
                sel[t, o, src] = 1.0
    return sel, hout


def prepare_params(params, tb=_TB):
    """Per-layer (SEL, M, bias) kernel constants, channels padded to 16, batched
    row selection block-diagonal over tb samples."""
    prepped = {"layers": []}
    eye = np.eye(tb, dtype=np.float32)
    for idx, (hin, stride, pad) in enumerate(_LAYER_CFG):
        w = np.asarray(params[f"conv{idx + 1}_w"], np.float32)   # (Cout, Cin, 3, 3)
        b = np.asarray(params[f"conv{idx + 1}_b"], np.float32)
        cout, cin, kh, kw = w.shape
        cin_p = cin if cin == 1 else _CP
        sel, hout = _selection(hin, stride, pad, kh)              # (3, hout, hin)

        # Batched (block-diagonal) row selection per kernel-row tap i.
        s = np.stack([np.kron(eye, sel[i]) for i in range(kh)])   # (3, tb*hout, tb*hin)

        # Column selection + channel mixing fused: rows (ci, win), cols (co, wout).
        m = np.zeros((kh, cin_p * hin, _CP * hout), np.float32)
        for i in range(kh):
            for j in range(kw):
                wij_t = np.zeros((cin_p, _CP), np.float32)
                wij_t[:cin, :cout] = w[:, :, i, j].T
                m[i] += np.kron(wij_t, sel[j].T)

        bexp = np.zeros((_CP,), np.float32)
        bexp[:cout] = b
        bexp = np.repeat(bexp, hout).reshape(1, _CP * hout)

        prepped["layers"].append(
            (jnp.asarray(s), jnp.asarray(m), jnp.asarray(bexp)))

    lw = np.asarray(params["lin1_w"], np.float32)                 # (10, 10)
    lb = np.asarray(params["lin1_b"], np.float32)
    lw_t = np.zeros((_CP, _OUT_LANES), np.float32)
    lw_t[:lw.shape[1], :lw.shape[0]] = lw.T                       # padded rows/cols = 0
    lbp = np.zeros((1, _OUT_LANES), np.float32)
    lbp[0, :lb.shape[0]] = lb
    prepped["lin_wT"] = jnp.asarray(lw_t)
    prepped["lin_b"] = jnp.asarray(lbp)
    return prepped


# --------------------------- pure-JAX reference ------------------------------

def mnist_forward_ref(x, p, k=-1):
    def conv(y, w, b, s, pad):
        z = lax.conv_general_dilated(
            y, w, (s, s), [(pad, pad), (pad, pad)],
            dimension_numbers=("NCHW", "OIHW", "NCHW"),
            precision=lax.Precision.HIGHEST)
        return z + b.reshape(1, -1, 1, 1)

    out = jax.nn.sigmoid(conv(x, p["conv1_w"], p["conv1_b"], 2, 1))
    if k == 1:
        return out
    out = jax.nn.sigmoid(conv(out, p["conv2_w"], p["conv2_b"], 2, 1))
    if k == 2:
        return out
    out = jax.nn.sigmoid(conv(out, p["conv3_w"], p["conv3_b"], 2, 0))
    if k == 3:
        return out
    out = conv(out, p["conv4_w"], p["conv4_b"], 1, 0)
    m = jax.nn.sigmoid(jnp.mean(out, axis=(2, 3)))
    return jnp.dot(m, p["lin1_w"].T, precision=lax.Precision.HIGHEST) + p["lin1_b"]


# -------------------------------- param init ---------------------------------

def init_params(key):
    """Deterministic PyTorch-default-style (uniform +/- 1/sqrt(fan_in)) init."""
    ks = jax.random.split(key, 10)

    def conv_wb(k1, k2, cout, cin, kh, kw):
        bound = 1.0 / np.sqrt(cin * kh * kw)
        w = jax.random.uniform(k1, (cout, cin, kh, kw), jnp.float32, -bound, bound)
        b = jax.random.uniform(k2, (cout,), jnp.float32, -bound, bound)
        return w, b

    p = {}
    p["conv1_w"], p["conv1_b"] = conv_wb(ks[0], ks[1], 10, 1, 3, 3)
    p["conv2_w"], p["conv2_b"] = conv_wb(ks[2], ks[3], 10, 10, 3, 3)
    p["conv3_w"], p["conv3_b"] = conv_wb(ks[4], ks[5], 10, 10, 3, 3)
    p["conv4_w"], p["conv4_b"] = conv_wb(ks[6], ks[7], 10, 10, 3, 3)
    bound = 1.0 / np.sqrt(10)
    p["lin1_w"] = jax.random.uniform(ks[8], (10, 10), jnp.float32, -bound, bound)
    p["lin1_b"] = jax.random.uniform(ks[9], (10,), jnp.float32, -bound, bound)
    return p


if __name__ == "__main__":
    root = jax.random.PRNGKey(0)
    k_params, k_x = jax.random.split(root)
    params = init_params(k_params)
    # MNIST-shaped input: batch=2, 1 channel, 28x28 (NCHW)
    x = jax.random.normal(k_x, (2, 1, 28, 28), jnp.float32)

    prepped = prepare_params(params)

    # Full forward (single fused kernel) vs. reference.
    out = jax.block_until_ready(mnist_forward(x, prepped, k=-1))
    assert out.shape == (2, 10), out.shape
    ref = jax.block_until_ready(mnist_forward_ref(x, params, k=-1))
    if not np.allclose(np.asarray(out), np.asarray(ref), rtol=1e-3, atol=1e-3):
        raise AssertionError(
            f"Pallas output mismatch (k=-1): max abs err "
            f"{np.max(np.abs(np.asarray(out) - np.asarray(ref)))}")

    # Early-exit path (k=2) vs. reference.
    mid = jax.block_until_ready(mnist_forward(x, prepped, k=2))
    mid_ref = jax.block_until_ready(mnist_forward_ref(x, params, k=2))
    assert mid.shape == mid_ref.shape, (mid.shape, mid_ref.shape)
    if not np.allclose(np.asarray(mid), np.asarray(mid_ref), rtol=1e-3, atol=1e-3):
        raise AssertionError(
            f"Pallas output mismatch (k=2): max abs err "
            f"{np.max(np.abs(np.asarray(mid) - np.asarray(mid_ref)))}")

    print("KERNEL_OK")
</pallas_src>

<mosaic_0001>
module attributes {stable_mosaic.version = 11 : i64} {
  func.func @_fused_kernel(%arg0: i32, %arg1: memref<224x28xf32, #tpu.memory_space<vmem>>, %arg2: memref<3x112x224xf32, #tpu.memory_space<vmem>>, %arg3: memref<3x28x224xf32, #tpu.memory_space<vmem>>, %arg4: memref<1x224xf32, #tpu.memory_space<vmem>>, %arg5: memref<3x56x112xf32, #tpu.memory_space<vmem>>, %arg6: memref<3x224x112xf32, #tpu.memory_space<vmem>>, %arg7: memref<1x112xf32, #tpu.memory_space<vmem>>, %arg8: memref<3x24x56xf32, #tpu.memory_space<vmem>>, %arg9: memref<3x112x48xf32, #tpu.memory_space<vmem>>, %arg10: memref<1x48xf32, #tpu.memory_space<vmem>>, %arg11: memref<3x8x24xf32, #tpu.memory_space<vmem>>, %arg12: memref<3x48x16xf32, #tpu.memory_space<vmem>>, %arg13: memref<1x16xf32, #tpu.memory_space<vmem>>, %arg14: memref<16x128xf32, #tpu.memory_space<vmem>>, %arg15: memref<1x128xf32, #tpu.memory_space<vmem>>, %arg16: memref<8x128xf32, #tpu.memory_space<vmem>>) attributes {dimension_semantics = [#tpu.dimension_semantics<parallel>], iteration_bounds = array<i64: 1>, scalar_prefetch = 0 : i64, scratch_operands = 0 : i64, tpu.core_type = #tpu.core_type<tc>, window_params = [{transform_indices = @transform_0, window_bounds = array<i64: 224, 28>}, {pipeline_mode = #tpu.pipeline_mode<synchronous>, transform_indices = @transform_1, window_bounds = array<i64: 3, 112, 224>}, {pipeline_mode = #tpu.pipeline_mode<synchronous>, transform_indices = @transform_2, window_bounds = array<i64: 3, 28, 224>}, {pipeline_mode = #tpu.pipeline_mode<synchronous>, transform_indices = @transform_3, window_bounds = array<i64: 1, 224>}, {pipeline_mode = #tpu.pipeline_mode<synchronous>, transform_indices = @transform_4, window_bounds = array<i64: 3, 56, 112>}, {pipeline_mode = #tpu.pipeline_mode<synchronous>, transform_indices = @transform_5, window_bounds = array<i64: 3, 224, 112>}, {pipeline_mode = #tpu.pipeline_mode<synchronous>, transform_indices = @transform_6, window_bounds = array<i64: 1, 112>}, {pipeline_mode = #tpu.pipeline_mode<synchronous>, transform_indices = @transform_7, window_bounds = array<i64: 3, 24, 56>}, {pipeline_mode = #tpu.pipeline_mode<synchronous>, transform_indices = @transform_8, window_bounds = array<i64: 3, 112, 48>}, {pipeline_mode = #tpu.pipeline_mode<synchronous>, transform_indices = @transform_9, window_bounds = array<i64: 1, 48>}, {pipeline_mode = #tpu.pipeline_mode<synchronous>, transform_indices = @transform_10, window_bounds = array<i64: 3, 8, 24>}, {pipeline_mode = #tpu.pipeline_mode<synchronous>, transform_indices = @transform_11, window_bounds = array<i64: 3, 48, 16>}, {pipeline_mode = #tpu.pipeline_mode<synchronous>, transform_indices = @transform_12, window_bounds = array<i64: 1, 16>}, {pipeline_mode = #tpu.pipeline_mode<synchronous>, transform_indices = @transform_13, window_bounds = array<i64: 16, 128>}, {pipeline_mode = #tpu.pipeline_mode<synchronous>, transform_indices = @transform_14, window_bounds = array<i64: 1, 128>}, {transform_indices = @transform_15, window_bounds = array<i64: 8, 128>}]} {
    %c0 = arith.constant 0 : index
    %c0_0 = arith.constant 0 : index
    %0 = vector.load %arg1[%c0, %c0_0] : memref<224x28xf32, #tpu.memory_space<vmem>>, vector<224x28xf32>
    %c0_1 = arith.constant 0 : index
    %c0_2 = arith.constant 0 : index
    %c0_3 = arith.constant 0 : index
    %1 = vector.load %arg2[%c0_1, %c0_2, %c0_3] : memref<3x112x224xf32, #tpu.memory_space<vmem>>, vector<1x112x224xf32>
    %2 = vector.shape_cast %1 : vector<1x112x224xf32> to vector<112x224xf32>
    %cst = arith.constant dense<0.000000e+00> : vector<112x28xf32>
    %3 = tpu.matmul %2, %0, %cst {dimension_numbers = #tpu.dot_dimension_numbers<[1], [0], [0], [1], [0, 0, 1, 1], [], []>} : vector<112x224xf32>, vector<224x28xf32>, vector<112x28xf32> -> vector<112x28xf32>
    %c0_4 = arith.constant 0 : index
    %c0_5 = arith.constant 0 : index
    %c0_6 = arith.constant 0 : index
    %4 = vector.load %arg3[%c0_4, %c0_5, %c0_6] : memref<3x28x224xf32, #tpu.memory_space<vmem>>, vector<1x28x224xf32>
    %5 = vector.shape_cast %4 : vector<1x28x224xf32> to vector<28x224xf32>
    %cst_7 = arith.constant dense<0.000000e+00> : vector<112x224xf32>
    %6 = tpu.matmul %3, %5, %cst_7 {dimension_numbers = #tpu.dot_dimension_numbers<[1], [0], [0], [1], [0, 0, 1, 1], [], []>} : vector<112x28xf32>, vector<28x224xf32>, vector<112x224xf32> -> vector<112x224xf32>
    %c1 = arith.constant 1 : index
    %c0_8 = arith.constant 0 : index
    %c0_9 = arith.constant 0 : index
    %7 = vector.load %arg2[%c1, %c0_8, %c0_9] : memref<3x112x224xf32, #tpu.memory_space<vmem>>, vector<1x112x224xf32>
    %8 = vector.shape_cast %7 : vector<1x112x224xf32> to vector<112x224xf32>
    %cst_10 = arith.constant dense<0.000000e+00> : vector<112x28xf32>
    %9 = tpu.matmul %8, %0, %cst_10 {dimension_numbers = #tpu.dot_dimension_numbers<[1], [0], [0], [1], [0, 0, 1, 1], [], []>} : vector<112x224xf32>, vector<224x28xf32>, vector<112x28xf32> -> vector<112x28xf32>
    %c1_11 = arith.constant 1 : index
    %c0_12 = arith.constant 0 : index
    %c0_13 = arith.constant 0 : index
    %10 = vector.load %arg3[%c1_11, %c0_12, %c0_13] : memref<3x28x224xf32, #tpu.memory_space<vmem>>, vector<1x28x224xf32>
    %11 = vector.shape_cast %10 : vector<1x28x224xf32> to vector<28x224xf32>
    %cst_14 = arith.constant dense<0.000000e+00> : vector<112x224xf32>
    %12 = tpu.matmul %9, %11, %cst_14 {dimension_numbers = #tpu.dot_dimension_numbers<[1], [0], [0], [1], [0, 0, 1, 1], [], []>} : vector<112x28xf32>, vector<28x224xf32>, vector<112x224xf32> -> vector<112x224xf32>
    %13 = arith.addf %6, %12 : vector<112x224xf32>
    %c2 = arith.constant 2 : index
    %c0_15 = arith.constant 0 : index
    %c0_16 = arith.constant 0 : index
    %14 = vector.load %arg2[%c2, %c0_15, %c0_16] : memref<3x112x224xf32, #tpu.memory_space<vmem>>, vector<1x112x224xf32>
    %15 = vector.shape_cast %14 : vector<1x112x224xf32> to vector<112x224xf32>
    %cst_17 = arith.constant dense<0.000000e+00> : vector<112x28xf32>
    %16 = tpu.matmul %15, %0, %cst_17 {dimension_numbers = #tpu.dot_dimension_numbers<[1], [0], [0], [1], [0, 0, 1, 1], [], []>} : vector<112x224xf32>, vector<224x28xf32>, vector<112x28xf32> -> vector<112x28xf32>
    %c2_18 = arith.constant 2 : index
    %c0_19 = arith.constant 0 : index
    %c0_20 = arith.constant 0 : index
    %17 = vector.load %arg3[%c2_18, %c0_19, %c0_20] : memref<3x28x224xf32, #tpu.memory_space<vmem>>, vector<1x28x224xf32>
    %18 = vector.shape_cast %17 : vector<1x28x224xf32> to vector<28x224xf32>
    %cst_21 = arith.constant dense<0.000000e+00> : vector<112x224xf32>
    %19 = tpu.matmul %16, %18, %cst_21 {dimension_numbers = #tpu.dot_dimension_numbers<[1], [0], [0], [1], [0, 0, 1, 1], [], []>} : vector<112x28xf32>, vector<28x224xf32>, vector<112x224xf32> -> vector<112x224xf32>
    %20 = arith.addf %13, %19 : vector<112x224xf32>
    %c0_22 = arith.constant 0 : index
    %c0_23 = arith.constant 0 : index
    %21 = vector.load %arg4[%c0_22, %c0_23] : memref<1x224xf32, #tpu.memory_space<vmem>>, vector<1x224xf32>
    %22 = vector.broadcast %21 : vector<1x224xf32> to vector<112x224xf32>
    %23 = arith.addf %20, %22 : vector<112x224xf32>
    %24 = arith.negf %23 : vector<112x224xf32>
    %25 = math.exp %24 : vector<112x224xf32>
    %cst_24 = arith.constant 1.000000e+00 : f32
    %26 = vector.broadcast %cst_24 : f32 to vector<112x224xf32>
    %27 = arith.addf %26, %25 : vector<112x224xf32>
    %28 = arith.divf %26, %27 : vector<112x224xf32>
    %c0_25 = arith.constant 0 : index
    %c0_26 = arith.constant 0 : index
    %c0_27 = arith.constant 0 : index
    %29 = vector.load %arg5[%c0_25, %c0_26, %c0_27] : memref<3x56x112xf32, #tpu.memory_space<vmem>>, vector<1x56x112xf32>
    %30 = vector.shape_cast %29 : vector<1x56x112xf32> to vector<56x112xf32>
    %cst_28 = arith.constant dense<0.000000e+00> : vector<56x224xf32>
    %31 = tpu.matmul %30, %28, %cst_28 {dimension_numbers = #tpu.dot_dimension_numbers<[1], [0], [0], [1], [0, 0, 1, 1], [], []>} : vector<56x112xf32>, vector<112x224xf32>, vector<56x224xf32> -> vector<56x224xf32>
    %c0_29 = arith.constant 0 : index
    %c0_30 = arith.constant 0 : index
    %c0_31 = arith.constant 0 : index
    %32 = vector.load %arg6[%c0_29, %c0_30, %c0_31] : memref<3x224x112xf32, #tpu.memory_space<vmem>>, vector<1x224x112xf32>
    %33 = vector.shape_cast %32 : vector<1x224x112xf32> to vector<224x112xf32>
    %cst_32 = arith.constant dense<0.000000e+00> : vector<56x112xf32>
    %34 = tpu.matmul %31, %33, %cst_32 {dimension_numbers = #tpu.dot_dimension_numbers<[1], [0], [0], [1], [0, 0, 1, 1], [], []>} : vector<56x224xf32>, vector<224x112xf32>, vector<56x112xf32> -> vector<56x112xf32>
    %c1_33 = arith.constant 1 : index
    %c0_34 = arith.constant 0 : index
    %c0_35 = arith.constant 0 : index
    %35 = vector.load %arg5[%c1_33, %c0_34, %c0_35] : memref<3x56x112xf32, #tpu.memory_space<vmem>>, vector<1x56x112xf32>
    %36 = vector.shape_cast %35 : vector<1x56x112xf32> to vector<56x112xf32>
    %cst_36 = arith.constant dense<0.000000e+00> : vector<56x224xf32>
    %37 = tpu.matmul %36, %28, %cst_36 {dimension_numbers = #tpu.dot_dimension_numbers<[1], [0], [0], [1], [0, 0, 1, 1], [], []>} : vector<56x112xf32>, vector<112x224xf32>, vector<56x224xf32> -> vector<56x224xf32>
    %c1_37 = arith.constant 1 : index
    %c0_38 = arith.constant 0 : index
    %c0_39 = arith.constant 0 : index
    %38 = vector.load %arg6[%c1_37, %c0_38, %c0_39] : memref<3x224x112xf32, #tpu.memory_space<vmem>>, vector<1x224x112xf32>
    %39 = vector.shape_cast %38 : vector<1x224x112xf32> to vector<224x112xf32>
    %cst_40 = arith.constant dense<0.000000e+00> : vector<56x112xf32>
    %40 = tpu.matmul %37, %39, %cst_40 {dimension_numbers = #tpu.dot_dimension_numbers<[1], [0], [0], [1], [0, 0, 1, 1], [], []>} : vector<56x224xf32>, vector<224x112xf32>, vector<56x112xf32> -> vector<56x112xf32>
    %41 = arith.addf %34, %40 : vector<56x112xf32>
    %c2_41 = arith.constant 2 : index
    %c0_42 = arith.constant 0 : index
    %c0_43 = arith.constant 0 : index
    %42 = vector.load %arg5[%c2_41, %c0_42, %c0_43] : memref<3x56x112xf32, #tpu.memory_space<vmem>>, vector<1x56x112xf32>
    %43 = vector.shape_cast %42 : vector<1x56x112xf32> to vector<56x112xf32>
    %cst_44 = arith.constant dense<0.000000e+00> : vector<56x224xf32>
    %44 = tpu.matmul %43, %28, %cst_44 {dimension_numbers = #tpu.dot_dimension_numbers<[1], [0], [0], [1], [0, 0, 1, 1], [], []>} : vector<56x112xf32>, vector<112x224xf32>, vector<56x224xf32> -> vector<56x224xf32>
    %c2_45 = arith.constant 2 : index
    %c0_46 = arith.constant 0 : index
    %c0_47 = arith.constant 0 : index
    %45 = vector.load %arg6[%c2_45, %c0_46, %c0_47] : memref<3x224x112xf32, #tpu.memory_space<vmem>>, vector<1x224x112xf32>
    %46 = vector.shape_cast %45 : vector<1x224x112xf32> to vector<224x112xf32>
    %cst_48 = arith.constant dense<0.000000e+00> : vector<56x112xf32>
    %47 = tpu.matmul %44, %46, %cst_48 {dimension_numbers = #tpu.dot_dimension_numbers<[1], [0], [0], [1], [0, 0, 1, 1], [], []>} : vector<56x224xf32>, vector<224x112xf32>, vector<56x112xf32> -> vector<56x112xf32>
    %48 = arith.addf %41, %47 : vector<56x112xf32>
    %c0_49 = arith.constant 0 : index
    %c0_50 = arith.constant 0 : index
    %49 = vector.load %arg7[%c0_49, %c0_50] : memref<1x112xf32, #tpu.memory_space<vmem>>, vector<1x112xf32>
    %50 = vector.broadcast %49 : vector<1x112xf32> to vector<56x112xf32>
    %51 = arith.addf %48, %50 : vector<56x112xf32>
    %52 = arith.negf %51 : vector<56x112xf32>
    %53 = math.exp %52 : vector<56x112xf32>
    %cst_51 = arith.constant 1.000000e+00 : f32
    %54 = vector.broadcast %cst_51 : f32 to vector<56x112xf32>
    %55 = arith.addf %54, %53 : vector<56x112xf32>
    %56 = arith.divf %54, %55 : vector<56x112xf32>
    %c0_52 = arith.constant 0 : index
    %c0_53 = arith.constant 0 : index
    %c0_54 = arith.constant 0 : index
    %57 = vector.load %arg8[%c0_52, %c0_53, %c0_54] : memref<3x24x56xf32, #tpu.memory_space<vmem>>, vector<1x24x56xf32>
    %58 = vector.shape_cast %57 : vector<1x24x56xf32> to vector<24x56xf32>
    %cst_55 = arith.constant dense<0.000000e+00> : vector<24x112xf32>
    %59 = tpu.matmul %58, %56, %cst_55 {dimension_numbers = #tpu.dot_dimension_numbers<[1], [0], [0], [1], [0, 0, 1, 1], [], []>} : vector<24x56xf32>, vector<56x112xf32>, vector<24x112xf32> -> vector<24x112xf32>
    %c0_56 = arith.constant 0 : index
    %c0_57 = arith.constant 0 : index
    %c0_58 = arith.constant 0 : index
    %60 = vector.load %arg9[%c0_56, %c0_57, %c0_58] : memref<3x112x48xf32, #tpu.memory_space<vmem>>, vector<1x112x48xf32>
    %61 = vector.shape_cast %60 : vector<1x112x48xf32> to vector<112x48xf32>
    %cst_59 = arith.constant dense<0.000000e+00> : vector<24x48xf32>
    %62 = tpu.matmul %59, %61, %cst_59 {dimension_numbers = #tpu.dot_dimension_numbers<[1], [0], [0], [1], [0, 0, 1, 1], [], []>} : vector<24x112xf32>, vector<112x48xf32>, vector<24x48xf32> -> vector<24x48xf32>
    %c1_60 = arith.constant 1 : index
    %c0_61 = arith.constant 0 : index
    %c0_62 = arith.constant 0 : index
    %63 = vector.load %arg8[%c1_60, %c0_61, %c0_62] : memref<3x24x56xf32, #tpu.memory_space<vmem>>, vector<1x24x56xf32>
    %64 = vector.shape_cast %63 : vector<1x24x56xf32> to vector<24x56xf32>
    %cst_63 = arith.constant dense<0.000000e+00> : vector<24x112xf32>
    %65 = tpu.matmul %64, %56, %cst_63 {dimension_numbers = #tpu.dot_dimension_numbers<[1], [0], [0], [1], [0, 0, 1, 1], [], []>} : vector<24x56xf32>, vector<56x112xf32>, vector<24x112xf32> -> vector<24x112xf32>
    %c1_64 = arith.constant 1 : index
    %c0_65 = arith.constant 0 : index
    %c0_66 = arith.constant 0 : index
    %66 = vector.load %arg9[%c1_64, %c0_65, %c0_66] : memref<3x112x48xf32, #tpu.memory_space<vmem>>, vector<1x112x48xf32>
    %67 = vector.shape_cast %66 : vector<1x112x48xf32> to vector<112x48xf32>
    %cst_67 = arith.constant dense<0.000000e+00> : vector<24x48xf32>
    %68 = tpu.matmul %65, %67, %cst_67 {dimension_numbers = #tpu.dot_dimension_numbers<[1], [0], [0], [1], [0, 0, 1, 1], [], []>} : vector<24x112xf32>, vector<112x48xf32>, vector<24x48xf32> -> vector<24x48xf32>
    %69 = arith.addf %62, %68 : vector<24x48xf32>
    %c2_68 = arith.constant 2 : index
    %c0_69 = arith.constant 0 : index
    %c0_70 = arith.constant 0 : index
    %70 = vector.load %arg8[%c2_68, %c0_69, %c0_70] : memref<3x24x56xf32, #tpu.memory_space<vmem>>, vector<1x24x56xf32>
    %71 = vector.shape_cast %70 : vector<1x24x56xf32> to vector<24x56xf32>
    %cst_71 = arith.constant dense<0.000000e+00> : vector<24x112xf32>
    %72 = tpu.matmul %71, %56, %cst_71 {dimension_numbers = #tpu.dot_dimension_numbers<[1], [0], [0], [1], [0, 0, 1, 1], [], []>} : vector<24x56xf32>, vector<56x112xf32>, vector<24x112xf32> -> vector<24x112xf32>
    %c2_72 = arith.constant 2 : index
    %c0_73 = arith.constant 0 : index
    %c0_74 = arith.constant 0 : index
    %73 = vector.load %arg9[%c2_72, %c0_73, %c0_74] : memref<3x112x48xf32, #tpu.memory_space<vmem>>, vector<1x112x48xf32>
    %74 = vector.shape_cast %73 : vector<1x112x48xf32> to vector<112x48xf32>
    %cst_75 = arith.constant dense<0.000000e+00> : vector<24x48xf32>
    %75 = tpu.matmul %72, %74, %cst_75 {dimension_numbers = #tpu.dot_dimension_numbers<[1], [0], [0], [1], [0, 0, 1, 1], [], []>} : vector<24x112xf32>, vector<112x48xf32>, vector<24x48xf32> -> vector<24x48xf32>
    %76 = arith.addf %69, %75 : vector<24x48xf32>
    %c0_76 = arith.constant 0 : index
    %c0_77 = arith.constant 0 : index
    %77 = vector.load %arg10[%c0_76, %c0_77] : memref<1x48xf32, #tpu.memory_space<vmem>>, vector<1x48xf32>
    %78 = vector.broadcast %77 : vector<1x48xf32> to vector<24x48xf32>
    %79 = arith.addf %76, %78 : vector<24x48xf32>
    %80 = arith.negf %79 : vector<24x48xf32>
    %81 = math.exp %80 : vector<24x48xf32>
    %cst_78 = arith.constant 1.000000e+00 : f32
    %82 = vector.broadcast %cst_78 : f32 to vector<24x48xf32>
    %83 = arith.addf %82, %81 : vector<24x48xf32>
    %84 = arith.divf %82, %83 : vector<24x48xf32>
    %c0_79 = arith.constant 0 : index
    %c0_80 = arith.constant 0 : index
    %c0_81 = arith.constant 0 : index
    %85 = vector.load %arg11[%c0_79, %c0_80, %c0_81] : memref<3x8x24xf32, #tpu.memory_space<vmem>>, vector<1x8x24xf32>
    %86 = vector.shape_cast %85 : vector<1x8x24xf32> to vector<8x24xf32>
    %cst_82 = arith.constant dense<0.000000e+00> : vector<8x48xf32>
    %87 = tpu.matmul %86, %84, %cst_82 {dimension_numbers = #tpu.dot_dimension_numbers<[1], [0], [0], [1], [0, 0, 1, 1], [], []>} : vector<8x24xf32>, vector<24x48xf32>, vector<8x48xf32> -> vector<8x48xf32>
    %c0_83 = arith.constant 0 : index
    %c0_84 = arith.constant 0 : index
    %c0_85 = arith.constant 0 : index
    %88 = vector.load %arg12[%c0_83, %c0_84, %c0_85] : memref<3x48x16xf32, #tpu.memory_space<vmem>>, vector<1x48x16xf32>
    %89 = vector.shape_cast %88 : vector<1x48x16xf32> to vector<48x16xf32>
    %cst_86 = arith.constant dense<0.000000e+00> : vector<8x16xf32>
    %90 = tpu.matmul %87, %89, %cst_86 {dimension_numbers = #tpu.dot_dimension_numbers<[1], [0], [0], [1], [0, 0, 1, 1], [], []>} : vector<8x48xf32>, vector<48x16xf32>, vector<8x16xf32> -> vector<8x16xf32>
    %c1_87 = arith.constant 1 : index
    %c0_88 = arith.constant 0 : index
    %c0_89 = arith.constant 0 : index
    %91 = vector.load %arg11[%c1_87, %c0_88, %c0_89] : memref<3x8x24xf32, #tpu.memory_space<vmem>>, vector<1x8x24xf32>
    %92 = vector.shape_cast %91 : vector<1x8x24xf32> to vector<8x24xf32>
    %cst_90 = arith.constant dense<0.000000e+00> : vector<8x48xf32>
    %93 = tpu.matmul %92, %84, %cst_90 {dimension_numbers = #tpu.dot_dimension_numbers<[1], [0], [0], [1], [0, 0, 1, 1], [], []>} : vector<8x24xf32>, vector<24x48xf32>, vector<8x48xf32> -> vector<8x48xf32>
    %c1_91 = arith.constant 1 : index
    %c0_92 = arith.constant 0 : index
    %c0_93 = arith.constant 0 : index
    %94 = vector.load %arg12[%c1_91, %c0_92, %c0_93] : memref<3x48x16xf32, #tpu.memory_space<vmem>>, vector<1x48x16xf32>
    %95 = vector.shape_cast %94 : vector<1x48x16xf32> to vector<48x16xf32>
    %cst_94 = arith.constant dense<0.000000e+00> : vector<8x16xf32>
    %96 = tpu.matmul %93, %95, %cst_94 {dimension_numbers = #tpu.dot_dimension_numbers<[1], [0], [0], [1], [0, 0, 1, 1], [], []>} : vector<8x48xf32>, vector<48x16xf32>, vector<8x16xf32> -> vector<8x16xf32>
    %97 = arith.addf %90, %96 : vector<8x16xf32>
    %c2_95 = arith.constant 2 : index
    %c0_96 = arith.constant 0 : index
    %c0_97 = arith.constant 0 : index
    %98 = vector.load %arg11[%c2_95, %c0_96, %c0_97] : memref<3x8x24xf32, #tpu.memory_space<vmem>>, vector<1x8x24xf32>
    %99 = vector.shape_cast %98 : vector<1x8x24xf32> to vector<8x24xf32>
    %cst_98 = arith.constant dense<0.000000e+00> : vector<8x48xf32>
    %100 = tpu.matmul %99, %84, %cst_98 {dimension_numbers = #tpu.dot_dimension_numbers<[1], [0], [0], [1], [0, 0, 1, 1], [], []>} : vector<8x24xf32>, vector<24x48xf32>, vector<8x48xf32> -> vector<8x48xf32>
    %c2_99 = arith.constant 2 : index
    %c0_100 = arith.constant 0 : index
    %c0_101 = arith.constant 0 : index
    %101 = vector.load %arg12[%c2_99, %c0_100, %c0_101] : memref<3x48x16xf32, #tpu.memory_space<vmem>>, vector<1x48x16xf32>
    %102 = vector.shape_cast %101 : vector<1x48x16xf32> to vector<48x16xf32>
    %cst_102 = arith.constant dense<0.000000e+00> : vector<8x16xf32>
    %103 = tpu.matmul %100, %102, %cst_102 {dimension_numbers = #tpu.dot_dimension_numbers<[1], [0], [0], [1], [0, 0, 1, 1], [], []>} : vector<8x48xf32>, vector<48x16xf32>, vector<8x16xf32> -> vector<8x16xf32>
    %104 = arith.addf %97, %103 : vector<8x16xf32>
    %c0_103 = arith.constant 0 : index
    %c0_104 = arith.constant 0 : index
    %105 = vector.load %arg13[%c0_103, %c0_104] : memref<1x16xf32, #tpu.memory_space<vmem>>, vector<1x16xf32>
    %106 = vector.broadcast %105 : vector<1x16xf32> to vector<8x16xf32>
    %107 = arith.addf %104, %106 : vector<8x16xf32>
    %108 = arith.negf %107 : vector<8x16xf32>
    %109 = math.exp %108 : vector<8x16xf32>
    %cst_105 = arith.constant 1.000000e+00 : f32
    %110 = vector.broadcast %cst_105 : f32 to vector<8x16xf32>
    %111 = arith.addf %110, %109 : vector<8x16xf32>
    %112 = arith.divf %110, %111 : vector<8x16xf32>
    %c0_106 = arith.constant 0 : index
    %c0_107 = arith.constant 0 : index
    %113 = vector.load %arg14[%c0_106, %c0_107] : memref<16x128xf32, #tpu.memory_space<vmem>>, vector<16x128xf32>
    %cst_108 = arith.constant dense<0.000000e+00> : vector<8x128xf32>
    %114 = tpu.matmul %112, %113, %cst_108 {dimension_numbers = #tpu.dot_dimension_numbers<[1], [0], [0], [1], [0, 0, 1, 1], [], []>} : vector<8x16xf32>, vector<16x128xf32>, vector<8x128xf32> -> vector<8x128xf32>
    %c0_109 = arith.constant 0 : index
    %c0_110 = arith.constant 0 : index
    %115 = vector.load %arg15[%c0_109, %c0_110] : memref<1x128xf32, #tpu.memory_space<vmem>>, vector<1x128xf32>
    %116 = vector.broadcast %115 : vector<1x128xf32> to vector<8x128xf32>
    %117 = arith.addf %114, %116 : vector<8x128xf32>
    %c0_111 = arith.constant 0 : index
    %c0_112 = arith.constant 0 : index
    %118 = vector.load %arg16[%c0_111, %c0_112] : memref<8x128xf32, #tpu.memory_space<vmem>>, vector<8x128xf32>
    tpu.vector_store %arg16[%c0_111, %c0_112], %117 {strides = array<i32>} : memref<8x128xf32, #tpu.memory_space<vmem>>, vector<8x128xf32>,
    return
  }
  func.func @transform_0(%arg0: i32) -> (i32, i32) {
    %c0_i32 = arith.constant 0 : i32
    %c0_i32_0 = arith.constant 0 : i32
    return %arg0, %c0_i32 : i32, i32
  }
  func.func @transform_1(%arg0: i32) -> (i32, i32, i32) {
    %c0_i32 = arith.constant 0 : i32
    %c0_i32_0 = arith.constant 0 : i32
    %c0_i32_1 = arith.constant 0 : i32
    %c0_i32_2 = arith.constant 0 : i32
    return %c0_i32, %c0_i32_0, %c0_i32_1 : i32, i32, i32
  }
  func.func @transform_2(%arg0: i32) -> (i32, i32, i32) {
    %c0_i32 = arith.constant 0 : i32
    %c0_i32_0 = arith.constant 0 : i32
    %c0_i32_1 = arith.constant 0 : i32
    %c0_i32_2 = arith.constant 0 : i32
    return %c0_i32, %c0_i32_0, %c0_i32_1 : i32, i32, i32
  }
  func.func @transform_3(%arg0: i32) -> (i32, i32) {
    %c0_i32 = arith.constant 0 : i32
    %c0_i32_0 = arith.constant 0 : i32
    %c0_i32_1 = arith.constant 0 : i32
    return %c0_i32, %c0_i32_0 : i32, i32
  }
  func.func @transform_4(%arg0: i32) -> (i32, i32, i32) {
    %c0_i32 = arith.constant 0 : i32
    %c0_i32_0 = arith.constant 0 : i32
    %c0_i32_1 = arith.constant 0 : i32
    %c0_i32_2 = arith.constant 0 : i32
    return %c0_i32, %c0_i32_0, %c0_i32_1 : i32, i32, i32
  }
  func.func @transform_5(%arg0: i32) -> (i32, i32, i32) {
    %c0_i32 = arith.constant 0 : i32
    %c0_i32_0 = arith.constant 0 : i32
    %c0_i32_1 = arith.constant 0 : i32
    %c0_i32_2 = arith.constant 0 : i32
    return %c0_i32, %c0_i32_0, %c0_i32_1 : i32, i32, i32
  }
  func.func @transform_6(%arg0: i32) -> (i32, i32) {
    %c0_i32 = arith.constant 0 : i32
    %c0_i32_0 = arith.constant 0 : i32
    %c0_i32_1 = arith.constant 0 : i32
    return %c0_i32, %c0_i32_0 : i32, i32
  }
  func.func @transform_7(%arg0: i32) -> (i32, i32, i32) {
    %c0_i32 = arith.constant 0 : i32
    %c0_i32_0 = arith.constant 0 : i32
    %c0_i32_1 = arith.constant 0 : i32
    %c0_i32_2 = arith.constant 0 : i32
    return %c0_i32, %c0_i32_0, %c0_i32_1 : i32, i32, i32
  }
  func.func @transform_8(%arg0: i32) -> (i32, i32, i32) {
    %c0_i32 = arith.constant 0 : i32
    %c0_i32_0 = arith.constant 0 : i32
    %c0_i32_1 = arith.constant 0 : i32
    %c0_i32_2 = arith.constant 0 : i32
    return %c0_i32, %c0_i32_0, %c0_i32_1 : i32, i32, i32
  }
  func.func @transform_9(%arg0: i32) -> (i32, i32) {
    %c0_i32 = arith.constant 0 : i32
    %c0_i32_0 = arith.constant 0 : i32
    %c0_i32_1 = arith.constant 0 : i32
    return %c0_i32, %c0_i32_0 : i32, i32
  }
  func.func @transform_10(%arg0: i32) -> (i32, i32, i32) {
    %c0_i32 = arith.constant 0 : i32
    %c0_i32_0 = arith.constant 0 : i32
    %c0_i32_1 = arith.constant 0 : i32
    %c0_i32_2 = arith.constant 0 : i32
    return %c0_i32, %c0_i32_0, %c0_i32_1 : i32, i32, i32
  }
  func.func @transform_11(%arg0: i32) -> (i32, i32, i32) {
    %c0_i32 = arith.constant 0 : i32
    %c0_i32_0 = arith.constant 0 : i32
    %c0_i32_1 = arith.constant 0 : i32
    %c0_i32_2 = arith.constant 0 : i32
    return %c0_i32, %c0_i32_0, %c0_i32_1 : i32, i32, i32
  }
  func.func @transform_12(%arg0: i32) -> (i32, i32) {
    %c0_i32 = arith.constant 0 : i32
    %c0_i32_0 = arith.constant 0 : i32
    %c0_i32_1 = arith.constant 0 : i32
    return %c0_i32, %c0_i32_0 : i32, i32
  }
  func.func @transform_13(%arg0: i32) -> (i32, i32) {
    %c0_i32 = arith.constant 0 : i32
    %c0_i32_0 = arith.constant 0 : i32
    %c0_i32_1 = arith.constant 0 : i32
    return %c0_i32, %c0_i32_0 : i32, i32
  }
  func.func @transform_14(%arg0: i32) -> (i32, i32) {
    %c0_i32 = arith.constant 0 : i32
    %c0_i32_0 = arith.constant 0 : i32
    %c0_i32_1 = arith.constant 0 : i32
    return %c0_i32, %c0_i32_0 : i32, i32
  }
  func.func @transform_15(%arg0: i32) -> (i32, i32) {
    %c0_i32 = arith.constant 0 : i32
    %c0_i32_0 = arith.constant 0 : i32
    return %arg0, %c0_i32 : i32, i32
  }
}

</mosaic_0001>

<llo_original>
// kernel: mnist_forward.1
$region0: #{mnist_forward.1}
  #allocation0 [shape = 'u32[]', space=smem, size = 0x4, offset = 0x4, fixed_abs, tag = 'smem constant byte address 0x4 - core index']
  #allocation1 [shape = 'u32[144,128]{1,0:T(1,128)}', space=vmem, size = 0x12000, scoped, tag = 'internal scratch']
  %s0 = inlined_call_operand.vmem [shape: f32[224,28], index: 0, kind: input, shape index: {}]
  %s1 = inlined_call_operand.vmem [shape: f32[3,112,224], index: 1, kind: input, shape index: {}]
  %s2 = inlined_call_operand.vmem [shape: f32[3,28,224], index: 2, kind: input, shape index: {}]
  %s3 = inlined_call_operand.hbm [shape: f32[1,224], index: 3, kind: input, shape index: {}]
  %s4 = inlined_call_operand.vmem [shape: f32[3,56,112], index: 4, kind: input, shape index: {}]
  %s5 = inlined_call_operand.vmem [shape: f32[3,224,112], index: 5, kind: input, shape index: {}]
  %s6 = inlined_call_operand.vmem [shape: f32[1,112], index: 6, kind: input, shape index: {}]
  %s7 = inlined_call_operand.hbm [shape: f32[3,24,56], index: 7, kind: input, shape index: {}]
  %s8 = inlined_call_operand.vmem [shape: f32[3,112,48], index: 8, kind: input, shape index: {}]
  %s9 = inlined_call_operand.vmem [shape: f32[1,48], index: 9, kind: input, shape index: {}]
  %s10 = inlined_call_operand.vmem [shape: f32[3,8,24], index: 10, kind: input, shape index: {}]
  %s11 = inlined_call_operand.vmem [shape: f32[3,48,16], index: 11, kind: input, shape index: {}]
  %s12 = inlined_call_operand.vmem [shape: f32[1,16], index: 12, kind: input, shape index: {}]
  %s13 = inlined_call_operand.hbm [shape: f32[16,128], index: 13, kind: input, shape index: {}]
  %s14 = inlined_call_operand.vmem [shape: f32[1,128], index: 14, kind: input, shape index: {}]
  %s15 = inlined_call_operand.vmem [shape: f32[8,128], index: 15, kind: output, shape index: {}]
  %s16 = sld [smem:[#allocation0]]
  $region82: #{mnist_forward.1} parent=0
    _
  %s18 = ssub.s32 1, %s16
  %s19 = scalar_select 0, %s18, %s16
  $region1: #{mnist_forward.1} parent=0
    #allocation2 [shape = 'u8[1024]{0}', space=vmem, size = 0x400, scoped, tag = 'input window, operand 3, single buffered']
    #allocation3 [shape = 's32[1]{0}', space=sflag, size = 0x4, scoped, tag = 'scoped memory for mnist_forward.1']
    #allocation4 [shape = 'u8[36864]{0}', space=vmem, size = 0x9000, scoped, tag = 'input window, operand 7, single buffered']
    #allocation5 [shape = 's32[1]{0}', space=sflag, size = 0x4, scoped, tag = 'scoped memory for mnist_forward.1']
    #allocation6 [shape = 'u8[8192]{0}', space=vmem, size = 0x2000, scoped, tag = 'input window, operand 13, single buffered']
    %20 = vsyncpa [#allocation3], 0
    %21 = vsyncpa [#allocation5], 0
    // Predicated region
    $region2: #{mnist_forward.1} parent=1 // pred_check
      _
    $region3: #{mnist_forward.1} parent=1 // pred_check_branch
      %23 = sbr.rel (0) target = $region5
    $region4: #{mnist_forward.1} parent=1 // pred_region
      _
    $region5: #{mnist_forward.1} parent=1 // pred_fallthru
      _
    // Predicated region
    $region6: #{mnist_forward.1} parent=1 // pred_check
      _
    $region7: #{mnist_forward.1} parent=1 // pred_check_branch
      %25 = sbr.rel (0) target = $region9
    $region8: #{mnist_forward.1} parent=1 // pred_region
      _
    $region9: #{mnist_forward.1} parent=1 // pred_fallthru
      _
    // Predicated region
    $region10: #{mnist_forward.1} parent=1 // pred_check
      _
    $region11: #{mnist_forward.1} parent=1 // pred_check_branch
      %27 = sbr.rel (0) target = $region13
    $region12: #{mnist_forward.1} parent=1 // pred_region
      _
    $region13: #{mnist_forward.1} parent=1 // pred_fallthru
      _
    // Predicated region
    $region14: #{mnist_forward.1} parent=1 // pred_check
      _
    $region15: #{mnist_forward.1} parent=1 // pred_check_branch
      %29 = sbr.rel (0) target = $region17
    $region16: #{mnist_forward.1} parent=1 // pred_region
      %s31 = ssub.s32 32, 32
      %32 = vsyncadd [#allocation3], %s31
      %s34 = sshll.u32 [#allocation2], 4
      %s35 = int_to_ptr.vmem [resolvable:$true] %s34
      %37 = dma.hbm_to_vmem [thread:$0]  %s3, 32, %s35, [#allocation3]
    $region17: #{mnist_forward.1} parent=1 // pred_fallthru
      _
    // Predicated region
    $region18: #{mnist_forward.1} parent=1 // pred_check
      _
    $region19: #{mnist_forward.1} parent=1 // pred_check_branch
      %39 = sbr.rel (0) target = $region21
    $region20: #{mnist_forward.1} parent=1 // pred_region
      _
    $region21: #{mnist_forward.1} parent=1 // pred_fallthru
      _
    // Predicated region
    $region22: #{mnist_forward.1} parent=1 // pred_check
      _
    $region23: #{mnist_forward.1} parent=1 // pred_check_branch
      %41 = sbr.rel (0) target = $region25
    $region24: #{mnist_forward.1} parent=1 // pred_region
      _
    $region25: #{mnist_forward.1} parent=1 // pred_fallthru
      _
    // Predicated region
    $region26: #{mnist_forward.1} parent=1 // pred_check
      _
    $region27: #{mnist_forward.1} parent=1 // pred_check_branch
      %43 = sbr.rel (0) target = $region29
    $region28: #{mnist_forward.1} parent=1 // pred_region
      _
    $region29: #{mnist_forward.1} parent=1 // pred_fallthru
      _
    // Predicated region
    $region30: #{mnist_forward.1} parent=1 // pred_check
      _
    $region31: #{mnist_forward.1} parent=1 // pred_check_branch
      %45 = sbr.rel (0) target = $region33
    $region32: #{mnist_forward.1} parent=1 // pred_region
      %s47 = ssub.s32 1152, 1152
      %48 = vsyncadd [#allocation5], %s47
      %s49 = sshll.u32 [#allocation4], 4
      %s50 = int_to_ptr.vmem [resolvable:$true] %s49
      %55 = dma.hbm_to_vmem [thread:$0]  %s7, 1152, %s50, [#allocation5], 128, 128, 8
    $region33: #{mnist_forward.1} parent=1 // pred_fallthru
      _
    // Predicated region
    $region34: #{mnist_forward.1} parent=1 // pred_check
      _
    $region35: #{mnist_forward.1} parent=1 // pred_check_branch
      %57 = sbr.rel (0) target = $region37
    $region36: #{mnist_forward.1} parent=1 // pred_region
      _
    $region37: #{mnist_forward.1} parent=1 // pred_fallthru
      _
    // Predicated region
    $region38: #{mnist_forward.1} parent=1 // pred_check
      _
    $region39: #{mnist_forward.1} parent=1 // pred_check_branch
      %59 = sbr.rel (0) target = $region41
    $region40: #{mnist_forward.1} parent=1 // pred_region
      _
    $region41: #{mnist_forward.1} parent=1 // pred_fallthru
      _
    // Predicated region
    $region42: #{mnist_forward.1} parent=1 // pred_check
      _
    $region43: #{mnist_forward.1} parent=1 // pred_check_branch
      %61 = sbr.rel (0) target = $region45
    $region44: #{mnist_forward.1} parent=1 // pred_region
      _
    $region45: #{mnist_forward.1} parent=1 // pred_fallthru
      _
    // Predicated region
    $region46: #{mnist_forward.1} parent=1 // pred_check
      _
    $region47: #{mnist_forward.1} parent=1 // pred_check_branch
      %63 = sbr.rel (0) target = $region49
    $region48: #{mnist_forward.1} parent=1 // pred_region
      _
    $region49: #{mnist_forward.1} parent=1 // pred_fallthru
      _
    // Predicated region
    $region50: #{mnist_forward.1} parent=1 // pred_check
      _
    $region51: #{mnist_forward.1} parent=1 // pred_check_branch
      %65 = sbr.rel (0) target = $region53
    $region52: #{mnist_forward.1} parent=1 // pred_region
      _
    $region53: #{mnist_forward.1} parent=1 // pred_fallthru
      _
    // Predicated region
    $region54: #{mnist_forward.1} parent=1 // pred_check
      _
    $region55: #{mnist_forward.1} parent=1 // pred_check_branch
      %67 = sbr.rel (0) target = $region57
    $region56: #{mnist_forward.1} parent=1 // pred_region
      %s69 = ssub.s32 256, 256
      %70 = vsyncadd [#allocation5], %s69
      %s71 = sshll.u32 [#allocation6], 4
      %s72 = int_to_ptr.vmem [resolvable:$true] %s71
      %77 = dma.hbm_to_vmem [thread:$0]  %s13, 256, %s72, [#allocation5], 128, 128, 8
    $region57: #{mnist_forward.1} parent=1 // pred_fallthru
      _
    // Predicated region
    $region58: #{mnist_forward.1} parent=1 // pred_check
      _
    $region59: #{mnist_forward.1} parent=1 // pred_check_branch
      %79 = sbr.rel (0) target = $region61
    $region60: #{mnist_forward.1} parent=1 // pred_region
      _
    $region61: #{mnist_forward.1} parent=1 // pred_fallthru
      _
    // Predicated region
    $region62: #{mnist_forward.1} parent=1 // pred_check
      _
    $region63: #{mnist_forward.1} parent=1 // pred_check_branch
      %81 = sbr.rel (0) target = $region65
    $region64: #{mnist_forward.1} parent=1 // pred_region
      %82 = dma.done [#allocation3], 32
    $region65: #{mnist_forward.1} parent=1 // pred_fallthru
      _
    // Predicated region
    $region66: #{mnist_forward.1} parent=1 // pred_check
      _
    $region67: #{mnist_forward.1} parent=1 // pred_check_branch
      %84 = sbr.rel (0) target = $region69
    $region68: #{mnist_forward.1} parent=1 // pred_region
      %85 = dma.done [#allocation5], 1152
    $region69: #{mnist_forward.1} parent=1 // pred_fallthru
      _
    // Predicated region
    $region70: #{mnist_forward.1} parent=1 // pred_check
      _
    $region71: #{mnist_forward.1} parent=1 // pred_check_branch
      %87 = sbr.rel (0) target = $region73
    $region72: #{mnist_forward.1} parent=1 // pred_region
      %88 = dma.done [#allocation5], 256
    $region73: #{mnist_forward.1} parent=1 // pred_fallthru
      _
    %v89 = vld [vmem:[%s0] sm:$0xff]
    %v90 = vld [vmem:[%s0 + $0x8] sm:$0xff]
    %v91 = vld [vmem:[%s0 + $0x10] sm:$0xff]
    %v92 = vld [vmem:[%s0 + $0x18] sm:$0xff]
    %v93 = vld [vmem:[%s0 + $0x20] sm:$0xff]
    %v94 = vld [vmem:[%s0 + $0x28] sm:$0xff]
    %v95 = vld [vmem:[%s0 + $0x30] sm:$0xff]
    %v96 = vld [vmem:[%s0 + $0x38] sm:$0xff]
    %v97 = vld [vmem:[%s0 + $0x40] sm:$0xff]
    %v98 = vld [vmem:[%s0 + $0x48] sm:$0xff]
    %v99 = vld [vmem:[%s0 + $0x50] sm:$0xff]
    %v100 = vld [vmem:[%s0 + $0x58] sm:$0xff]
    %v101 = vld [vmem:[%s0 + $0x60] sm:$0xff]
    %v102 = vld [vmem:[%s0 + $0x68] sm:$0xff]
    %v103 = vld [vmem:[%s0 + $0x70] sm:$0xff]
    %v104 = vld [vmem:[%s0 + $0x78] sm:$0xff]
    %v105 = vld [vmem:[%s0 + $0x80] sm:$0xff]
    %v106 = vld [vmem:[%s0 + $0x88] sm:$0xff]
    %v107 = vld [vmem:[%s0 + $0x90] sm:$0xff]
    %v108 = vld [vmem:[%s0 + $0x98] sm:$0xff]
    %v109 = vld [vmem:[%s0 + $0xa0] sm:$0xff]
    %v110 = vld [vmem:[%s0 + $0xa8] sm:$0xff]
    %v111 = vld [vmem:[%s0 + $0xb0] sm:$0xff]
    %v112 = vld [vmem:[%s0 + $0xb8] sm:$0xff]
    %v113 = vld [vmem:[%s0 + $0xc0] sm:$0xff]
    %v114 = vld [vmem:[%s0 + $0xc8] sm:$0xff]
    %v115 = vld [vmem:[%s0 + $0xd0] sm:$0xff]
    %v116 = vld [vmem:[%s0 + $0xd8] sm:$0xff]
    %v117 = vld [vmem:[%s1] sm:$0xff]
    %v118 = vld [vmem:[%s1 + $0x8] sm:$0xff]
    %v119 = vld [vmem:[%s1 + $0x10] sm:$0xff]
    %v120 = vld [vmem:[%s1 + $0x18] sm:$0xff]
    %v121 = vld [vmem:[%s1 + $0x20] sm:$0xff]
    %v122 = vld [vmem:[%s1 + $0x28] sm:$0xff]
    %v123 = vld [vmem:[%s1 + $0x30] sm:$0xff]
    %v124 = vld [vmem:[%s1 + $0x38] sm:$0xff]
    %v125 = vld [vmem:[%s1 + $0x40] sm:$0xff]
    %v126 = vld [vmem:[%s1 + $0x48] sm:$0xff]
    %v127 = vld [vmem:[%s1 + $0x50] sm:$0xff]
    %v128 = vld [vmem:[%s1 + $0x58] sm:$0xff]
    %v129 = vld [vmem:[%s1 + $0x60] sm:$0xff]
    %v130 = vld [vmem:[%s1 + $0x68] sm:$0xff]
    %v131 = vld [vmem:[%s1 + $0x70] sm:$0xff]
    %v132 = vld [vmem:[%s1 + $0x78] sm:$0xff]
    %v133 = vld [vmem:[%s1 + $0x80] sm:$0xff]
    %v134 = vld [vmem:[%s1 + $0x88] sm:$0xff]
    %v135 = vld [vmem:[%s1 + $0x90] sm:$0xff]
    %v136 = vld [vmem:[%s1 + $0x98] sm:$0xff]
    %v137 = vld [vmem:[%s1 + $0xa0] sm:$0xff]
    %v138 = vld [vmem:[%s1 + $0xa8] sm:$0xff]
    %v139 = vld [vmem:[%s1 + $0xb0] sm:$0xff]
    %v140 = vld [vmem:[%s1 + $0xb8] sm:$0xff]
    %v141 = vld [vmem:[%s1 + $0xc0] sm:$0xff]
    %v142 = vld [vmem:[%s1 + $0xc8] sm:$0xff]
    %v143 = vld [vmem:[%s1 + $0xd0] sm:$0xff]
    %v144 = vld [vmem:[%s1 + $0xd8] sm:$0xff]
    %vm145 = vcmask 785408
    %v147 = vsel %vm145, %v118, 0
    %v150 = vsel %vm145, %v120, 0
    %v153 = vsel %vm145, %v122, 0
    %v156 = vsel %vm145, %v124, 0
    %v159 = vsel %vm145, %v126, 0
    %v162 = vsel %vm145, %v128, 0
    %v165 = vsel %vm145, %v130, 0
    %v168 = vsel %vm145, %v132, 0
    %v171 = vsel %vm145, %v134, 0
    %v174 = vsel %vm145, %v136, 0
    %v177 = vsel %vm145, %v138, 0
    %v180 = vsel %vm145, %v140, 0
    %v183 = vsel %vm145, %v142, 0
    %v186 = vsel %vm145, %v144, 0
    %188 = vmatprep.subr.mxu0 0.0
    %189 = vmatpush1.msra.mxu0 %v89
    %190 = vmatprep.subr.mxu0 0.0
    %191 = vmatpush1.msra.mxu0 %v90
    %192 = vmatprep.subr.mxu0 0.0
    %193 = vmatpush1.msra.mxu0 %v91
    %194 = vmatprep.subr.mxu0 0.0
    %195 = vmatpush1.msra.mxu0 %v92
    %196 = vmatprep.subr.mxu0 0.0
    %197 = vmatpush1.msra.mxu0 %v93
    %198 = vmatprep.subr.mxu0 0.0
    %199 = vmatpush1.msra.mxu0 %v94
    %200 = vmatprep.subr.mxu0 0.0
    %201 = vmatpush1.msra.mxu0 %v95
    %202 = vmatprep.subr.mxu0 0.0
    %203 = vmatpush1.msra.mxu0 %v96
    %204 = vmatprep.subr.mxu0 0.0
    %205 = vmatpush1.msra.mxu0 %v97
    %206 = vmatprep.subr.mxu0 0.0
    %207 = vmatpush1.msra.mxu0 %v98
    %208 = vmatprep.subr.mxu0 0.0
    %209 = vmatpush1.msra.mxu0 %v99
    %210 = vmatprep.subr.mxu0 0.0
    %211 = vmatpush1.msra.mxu0 %v100
    %212 = vmatprep.subr.mxu0 0.0
    %213 = vmatpush1.msra.mxu0 %v101
    %214 = vmatprep.subr.mxu0 0.0
    %215 = vmatpush1.msra.mxu0 %v102
    %216 = vmatprep.subr.mxu0 0.0
    %217 = vmatpush1.msra.mxu0 %v103
    %218 = vmatprep.subr.mxu0 0.0
    %219 = vmatpush1.msra.mxu0 %v104
    %220 = vmatprep.subr.mxu0 0.0
    %221 = vmatpush1.msra.mxu0 %v105
    %222 = vmatprep.subr.mxu0 0.0
    %223 = vmatpush1.msra.mxu0 %v106
    %224 = vmatprep.subr.mxu0 0.0
    %225 = vmatpush1.msra.mxu0 %v107
    %226 = vmatprep.subr.mxu0 0.0
    %227 = vmatpush1.msra.mxu0 %v108
    %228 = vmatprep.subr.mxu0 0.0
    %229 = vmatpush1.msra.mxu0 %v109
    %230 = vmatprep.subr.mxu0 0.0
    %231 = vmatpush1.msra.mxu0 %v110
    %232 = vmatprep.subr.mxu0 0.0
    %233 = vmatpush1.msra.mxu0 %v111
    %234 = vmatprep.subr.mxu0 0.0
    %235 = vmatpush1.msra.mxu0 %v112
    %236 = vmatprep.subr.mxu0 0.0
    %237 = vmatpush1.msra.mxu0 %v113
    %238 = vmatprep.subr.mxu0 0.0
    %239 = vmatpush1.msra.mxu0 %v114
    %240 = vmatprep.subr.mxu0 0.0
    %241 = vmatpush1.msra.mxu0 %v115
    %242 = vmatprep.subr.mxu0 0.0
    %243 = vmatpush1.msra.mxu0 %v116
    %244 = vmatprep.subr.mxu0 0.0
    %245 = vmatpush1.msra.mxu0 0.0
    %246 = vmatprep.subr.mxu0 0.0
    %247 = vmatpush1.msra.mxu0 0.0
    %248 = vmatprep.subr.mxu0 0.0
    %249 = vmatpush1.msra.mxu0 0.0
    %250 = vmatprep.subr.mxu0 0.0
    %251 = vmatpush1.msra.mxu0 0.0
    %252 = vmatprep.mubr.f32.mxu0 %v147
    %253 = vmatmul.mubr.f32.gmra.mrb[0].mxu0 %v117
    %v254 = vpop.f32.mrb[0].mxu0
    %v255 = vadd.f32 0.0, %v254
    %v256 = vpop.f32.mrb[0].mxu0
    %257 = vmatprep.mubr.f32.mxu0 %v150
    %258 = vmatmul.mubr.f32.gmra.mrb[0].mxu0 %v119
    %v259 = vpop.f32.mrb[0].mxu0
    %v260 = vadd.f32 0.0, %v259
    %v261 = vpop.f32.mrb[0].mxu0
    %262 = vmatprep.mubr.f32.mxu0 %v153
    %263 = vmatmul.mubr.f32.gmra.mrb[0].mxu0 %v121
    %v264 = vpop.f32.mrb[0].mxu0
    %v265 = vadd.f32 0.0, %v264
    %v266 = vpop.f32.mrb[0].mxu0
    %267 = vmatprep.mubr.f32.mxu0 %v156
    %268 = vmatmul.mubr.f32.gmra.mrb[0].mxu0 %v123
    %v269 = vpop.f32.mrb[0].mxu0
    %v270 = vadd.f32 0.0, %v269
    %v271 = vpop.f32.mrb[0].mxu0
    %272 = vmatprep.mubr.f32.mxu0 %v159
    %273 = vmatmul.mubr.f32.gmra.mrb[0].mxu0 %v125
    %v274 = vpop.f32.mrb[0].mxu0
    %v275 = vadd.f32 0.0, %v274
    %v276 = vpop.f32.mrb[0].mxu0
    %277 = vmatprep.mubr.f32.mxu0 %v162
    %278 = vmatmul.mubr.f32.gmra.mrb[0].mxu0 %v127
    %v279 = vpop.f32.mrb[0].mxu0
    %v280 = vadd.f32 0.0, %v279
    %v281 = vpop.f32.mrb[0].mxu0
    %282 = vmatprep.mubr.f32.mxu0 %v165
    %283 = vmatmul.mubr.f32.gmra.mrb[0].mxu0 %v129
    %v284 = vpop.f32.mrb[0].mxu0
    %v285 = vadd.f32 0.0, %v284
    %v286 = vpop.f32.mrb[0].mxu0
    %287 = vmatprep.mubr.f32.mxu0 %v168
    %288 = vmatmul.mubr.f32.gmra.mrb[0].mxu0 %v131
    %v289 = vpop.f32.mrb[0].mxu0
    %v290 = vadd.f32 0.0, %v289
    %v291 = vpop.f32.mrb[0].mxu0
    %292 = vmatprep.mubr.f32.mxu0 %v171
    %293 = vmatmul.mubr.f32.gmra.mrb[0].mxu0 %v133
    %v294 = vpop.f32.mrb[0].mxu0
    %v295 = vadd.f32 0.0, %v294
    %v296 = vpop.f32.mrb[0].mxu0
    %297 = vmatprep.mubr.f32.mxu0 %v174
    %298 = vmatmul.mubr.f32.gmra.mrb[0].mxu0 %v135
    %v299 = vpop.f32.mrb[0].mxu0
    %v300 = vadd.f32 0.0, %v299
    %v301 = vpop.f32.mrb[0].mxu0
    %302 = vmatprep.mubr.f32.mxu0 %v177
    %303 = vmatmul.mubr.f32.gmra.mrb[0].mxu0 %v137
    %v304 = vpop.f32.mrb[0].mxu0
    %v305 = vadd.f32 0.0, %v304
    %v306 = vpop.f32.mrb[0].mxu0
    %307 = vmatprep.mubr.f32.mxu0 %v180
    %308 = vmatmul.mubr.f32.gmra.mrb[0].mxu0 %v139
    %v309 = vpop.f32.mrb[0].mxu0
    %v310 = vadd.f32 0.0, %v309
    %v311 = vpop.f32.mrb[0].mxu0
    %312 = vmatprep.mubr.f32.mxu0 %v183
    %313 = vmatmul.mubr.f32.gmra.mrb[0].mxu0 %v141
    %v314 = vpop.f32.mrb[0].mxu0
    %v315 = vadd.f32 0.0, %v314
    %v316 = vpop.f32.mrb[0].mxu0
    %317 = vmatprep.mubr.f32.mxu0 %v186
    %318 = vmatmul.mubr.f32.gmra.mrb[0].mxu0 %v143
    %v319 = vpop.f32.mrb[0].mxu0
    %v320 = vadd.f32 0.0, %v319
    %v321 = vpop.f32.mrb[0].mxu0
    %322 = vdwg.mxu0
    %v323 = vld [vmem:[%s2] sm:$0xff]
    %v324 = vld [vmem:[%s2 + $0x8] sm:$0xff]
    %v325 = vld [vmem:[%s2 + $0x10] sm:$0xff]
    %v326 = vld [vmem:[%s2 + $0x18] sm:$0xff]
    %v327 = vld [vmem:[%s2 + $0x20] sm:$0xff]
    %v328 = vld [vmem:[%s2 + $0x28] sm:$0xff]
    %v329 = vld [vmem:[%s2 + $0x30] sm:$0xf]
    %v330 = vld [vmem:[%s2 + $0x38] sm:$0xf]
    %s331 = scalar_lea.vmem %s1, 224
    %v332 = vld [vmem:[%s331] sm:$0xff]
    %v333 = vld [vmem:[%s331 + $0x8] sm:$0xff]
    %v334 = vld [vmem:[%s331 + $0x10] sm:$0xff]
    %v335 = vld [vmem:[%s331 + $0x18] sm:$0xff]
    %v336 = vld [vmem:[%s331 + $0x20] sm:$0xff]
    %v337 = vld [vmem:[%s331 + $0x28] sm:$0xff]
    %v338 = vld [vmem:[%s331 + $0x30] sm:$0xff]
    %v339 = vld [vmem:[%s331 + $0x38] sm:$0xff]
    %v340 = vld [vmem:[%s331 + $0x40] sm:$0xff]
    %v341 = vld [vmem:[%s331 + $0x48] sm:$0xff]
    %v342 = vld [vmem:[%s331 + $0x50] sm:$0xff]
    %v343 = vld [vmem:[%s331 + $0x58] sm:$0xff]
    %v344 = vld [vmem:[%s331 + $0x60] sm:$0xff]
    %v345 = vld [vmem:[%s331 + $0x68] sm:$0xff]
    %v346 = vld [vmem:[%s331 + $0x70] sm:$0xff]
    %v347 = vld [vmem:[%s331 + $0x78] sm:$0xff]
    %v348 = vld [vmem:[%s331 + $0x80] sm:$0xff]
    %v349 = vld [vmem:[%s331 + $0x88] sm:$0xff]
    %v350 = vld [vmem:[%s331 + $0x90] sm:$0xff]
    %v351 = vld [vmem:[%s331 + $0x98] sm:$0xff]
    %v352 = vld [vmem:[%s331 + $0xa0] sm:$0xff]
    %v353 = vld [vmem:[%s331 + $0xa8] sm:$0xff]
    %v354 = vld [vmem:[%s331 + $0xb0] sm:$0xff]
    %v355 = vld [vmem:[%s331 + $0xb8] sm:$0xff]
    %v356 = vld [vmem:[%s331 + $0xc0] sm:$0xff]
    %v357 = vld [vmem:[%s331 + $0xc8] sm:$0xff]
    %v358 = vld [vmem:[%s331 + $0xd0] sm:$0xff]
    %v359 = vld [vmem:[%s331 + $0xd8] sm:$0xff]
    %v361 = vsel %vm145, %v333, 0
    %v364 = vsel %vm145, %v335, 0
    %v367 = vsel %vm145, %v337, 0
    %v370 = vsel %vm145, %v339, 0
    %v373 = vsel %vm145, %v341, 0
    %v376 = vsel %vm145, %v343, 0
    %v379 = vsel %vm145, %v345, 0
    %v382 = vsel %vm145, %v347, 0
    %v385 = vsel %vm145, %v349, 0
    %v388 = vsel %vm145, %v351, 0
    %v391 = vsel %vm145, %v353, 0
    %v394 = vsel %vm145, %v355, 0
    %v397 = vsel %vm145, %v357, 0
    %v400 = vsel %vm145, %v359, 0
    %402 = vmatprep.subr.mxu0 0.0
    %403 = vmatpush1.msra.mxu0 %v89
    %404 = vmatprep.subr.mxu0 0.0
    %405 = vmatpush1.msra.mxu0 %v90
    %406 = vmatprep.subr.mxu0 0.0
    %407 = vmatpush1.msra.mxu0 %v91
    %408 = vmatprep.subr.mxu0 0.0
    %409 = vmatpush1.msra.mxu0 %v92
    %410 = vmatprep.subr.mxu0 0.0
    %411 = vmatpush1.msra.mxu0 %v93
    %412 = vmatprep.subr.mxu0 0.0
    %413 = vmatpush1.msra.mxu0 %v94
    %414 = vmatprep.subr.mxu0 0.0
    %415 = vmatpush1.msra.mxu0 %v95
    %416 = vmatprep.subr.mxu0 0.0
    %417 = vmatpush1.msra.mxu0 %v96
    %418 = vmatprep.subr.mxu0 0.0
    %419 = vmatpush1.msra.mxu0 %v97
    %420 = vmatprep.subr.mxu0 0.0
    %421 = vmatpush1.msra.mxu0 %v98
    %422 = vmatprep.subr.mxu0 0.0
    %423 = vmatpush1.msra.mxu0 %v99
    %424 = vmatprep.subr.mxu0 0.0
    %425 = vmatpush1.msra.mxu0 %v100
    %426 = vmatprep.subr.mxu0 0.0
    %427 = vmatpush1.msra.mxu0 %v101
    %428 = vmatprep.subr.mxu0 0.0
    %429 = vmatpush1.msra.mxu0 %v102
    %430 = vmatprep.subr.mxu0 0.0
    %431 = vmatpush1.msra.mxu0 %v103
    %432 = vmatprep.subr.mxu0 0.0
    %433 = vmatpush1.msra.mxu0 %v104
    %434 = vmatprep.subr.mxu0 0.0
    %435 = vmatpush1.msra.mxu0 %v105
    %436 = vmatprep.subr.mxu0 0.0
    %437 = vmatpush1.msra.mxu0 %v106
    %438 = vmatprep.subr.mxu0 0.0
    %439 = vmatpush1.msra.mxu0 %v107
    %440 = vmatprep.subr.mxu0 0.0
    %441 = vmatpush1.msra.mxu0 %v108
    %442 = vmatprep.subr.mxu0 0.0
    %443 = vmatpush1.msra.mxu0 %v109
    %444 = vmatprep.subr.mxu0 0.0
    %445 = vmatpush1.msra.mxu0 %v110
    %446 = vmatprep.subr.mxu0 0.0
    %447 = vmatpush1.msra.mxu0 %v111
    %448 = vmatprep.subr.mxu0 0.0
    %449 = vmatpush1.msra.mxu0 %v112
    %450 = vmatprep.subr.mxu0 0.0
    %451 = vmatpush1.msra.mxu0 %v113
    %452 = vmatprep.subr.mxu0 0.0
    %453 = vmatpush1.msra.mxu0 %v114
    %454 = vmatprep.subr.mxu0 0.0
    %455 = vmatpush1.msra.mxu0 %v115
    %456 = vmatprep.subr.mxu0 0.0
    %457 = vmatpush1.msra.mxu0 %v116
    %458 = vmatprep.subr.mxu0 0.0
    %459 = vmatpush1.msra.mxu0 0.0
    %460 = vmatprep.subr.mxu0 0.0
    %461 = vmatpush1.msra.mxu0 0.0
    %462 = vmatprep.subr.mxu0 0.0
    %463 = vmatpush1.msra.mxu0 0.0
    %464 = vmatprep.subr.mxu0 0.0
    %465 = vmatpush1.msra.mxu0 0.0
    %466 = vmatprep.mubr.f32.mxu0 %v361
    %467 = vmatmul.mubr.f32.gmra.mrb[0].mxu0 %v332
    %v468 = vpop.f32.mrb[0].mxu0
    %v469 = vadd.f32 0.0, %v468
    %v470 = vpop.f32.mrb[0].mxu0
    %471 = vmatprep.mubr.f32.mxu0 %v364
    %472 = vmatmul.mubr.f32.gmra.mrb[0].mxu0 %v334
    %v473 = vpop.f32.mrb[0].mxu0
    %v474 = vadd.f32 0.0, %v473
    %v475 = vpop.f32.mrb[0].mxu0
    %476 = vmatprep.mubr.f32.mxu0 %v367
    %477 = vmatmul.mubr.f32.gmra.mrb[0].mxu0 %v336
    %v478 = vpop.f32.mrb[0].mxu0
    %v479 = vadd.f32 0.0, %v478
    %v480 = vpop.f32.mrb[0].mxu0
    %481 = vmatprep.mubr.f32.mxu0 %v370
    %482 = vmatmul.mubr.f32.gmra.mrb[0].mxu0 %v338
    %v483 = vpop.f32.mrb[0].mxu0
    %v484 = vadd.f32 0.0, %v483
    %v485 = vpop.f32.mrb[0].mxu0
    %486 = vmatprep.mubr.f32.mxu0 %v373
    %487 = vmatmul.mubr.f32.gmra.mrb[0].mxu0 %v340
    %v488 = vpop.f32.mrb[0].mxu0
    %v489 = vadd.f32 0.0, %v488
    %v490 = vpop.f32.mrb[0].mxu0
    %491 = vmatprep.mubr.f32.mxu0 %v376
    %492 = vmatmul.mubr.f32.gmra.mrb[0].mxu0 %v342
    %v493 = vpop.f32.mrb[0].mxu0
    %v494 = vadd.f32 0.0, %v493
    %v495 = vpop.f32.mrb[0].mxu0
    %496 = vmatprep.mubr.f32.mxu0 %v379
    %497 = vmatmul.mubr.f32.gmra.mrb[0].mxu0 %v344
    %v498 = vpop.f32.mrb[0].mxu0
    %v499 = vadd.f32 0.0, %v498
    %v500 = vpop.f32.mrb[0].mxu0
    %501 = vmatprep.mubr.f32.mxu0 %v382
    %502 = vmatmul.mubr.f32.gmra.mrb[0].mxu0 %v346
    %v503 = vpop.f32.mrb[0].mxu0
    %v504 = vadd.f32 0.0, %v503
    %v505 = vpop.f32.mrb[0].mxu0
    %506 = vmatprep.mubr.f32.mxu0 %v385
    %507 = vmatmul.mubr.f32.gmra.mrb[0].mxu0 %v348
    %v508 = vpop.f32.mrb[0].mxu0
    %v509 = vadd.f32 0.0, %v508
    %v510 = vpop.f32.mrb[0].mxu0
    %511 = vmatprep.mubr.f32.mxu0 %v388
    %512 = vmatmul.mubr.f32.gmra.mrb[0].mxu0 %v350
    %v513 = vpop.f32.mrb[0].mxu0
    %v514 = vadd.f32 0.0, %v513
    %v515 = vpop.f32.mrb[0].mxu0
    %516 = vmatprep.mubr.f32.mxu0 %v391
    %517 = vmatmul.mubr.f32.gmra.mrb[0].mxu0 %v352
    %v518 = vpop.f32.mrb[0].mxu0
    %v519 = vadd.f32 0.0, %v518
    %v520 = vpop.f32.mrb[0].mxu0
    %521 = vmatprep.mubr.f32.mxu0 %v394
    %522 = vmatmul.mubr.f32.gmra.mrb[0].mxu0 %v354
    %v523 = vpop.f32.mrb[0].mxu0
    %v524 = vadd.f32 0.0, %v523
    %v525 = vpop.f32.mrb[0].mxu0
    %526 = vmatprep.mubr.f32.mxu0 %v397
    %527 = vmatmul.mubr.f32.gmra.mrb[0].mxu0 %v356
    %v528 = vpop.f32.mrb[0].mxu0
    %v529 = vadd.f32 0.0, %v528
    %v530 = vpop.f32.mrb[0].mxu0
    %531 = vmatprep.mubr.f32.mxu0 %v400
    %532 = vmatmul.mubr.f32.gmra.mrb[0].mxu0 %v358
    %v533 = vpop.f32.mrb[0].mxu0
    %v534 = vadd.f32 0.0, %v533
    %v535 = vpop.f32.mrb[0].mxu0
    %536 = vdwg.mxu0
    %s537 = scalar_lea.vmem %s2, 64
    %v538 = vld [vmem:[%s537] sm:$0xff]
    %v539 = vld [vmem:[%s537 + $0x8] sm:$0xff]
    %v540 = vld [vmem:[%s537 + $0x10] sm:$0xff]
    %v541 = vld [vmem:[%s537 + $0x18] sm:$0xff]
    %v542 = vld [vmem:[%s537 + $0x20] sm:$0xff]
    %v543 = vld [vmem:[%s537 + $0x28] sm:$0xff]
    %v544 = vld [vmem:[%s537 + $0x30] sm:$0xf]
    %v545 = vld [vmem:[%s537 + $0x38] sm:$0xf]
    %vm546 = vcmask 228352
    %v548 = vsel %vm546, %v469, 0
    %v551 = vsel %vm546, %v474, 0
    %v554 = vsel %vm546, %v479, 0
    %v557 = vsel %vm546, %v484, 0
    %v560 = vsel %vm546, %v489, 0
    %v563 = vsel %vm546, %v494, 0
    %v566 = vsel %vm546, %v499, 0
    %v569 = vsel %vm546, %v504, 0
    %v572 = vsel %vm546, %v509, 0
    %v575 = vsel %vm546, %v514, 0
    %v578 = vsel %vm546, %v519, 0
    %v581 = vsel %vm546, %v524, 0
    %v584 = vsel %vm546, %v529, 0
    %v587 = vsel %vm546, %v534, 0
    %vm589 = vcmask 1043456
    %v591 = vsel %vm589, %v544, 0
    %v594 = vsel %vm589, %v545, 0
    %596 = vmatprep.subr.mxu0 %v539
    %597 = vmatpush1.msra.mxu0 %v538
    %598 = vmatprep.subr.mxu0 %v541
    %599 = vmatpush1.msra.mxu0 %v540
    %600 = vmatprep.subr.mxu0 %v543
    %601 = vmatpush1.msra.mxu0 %v542
    %602 = vmatprep.subr.mxu0 %v594
    %603 = vmatpush1.msra.mxu0 %v591
    %604 = vmatprep.subr.mxu0 0.0
    %605 = vmatpush1.msra.mxu0 0.0
    %606 = vmatprep.subr.mxu0 0.0
    %607 = vmatpush1.msra.mxu0 0.0
    %608 = vmatprep.subr.mxu0 0.0
    %609 = vmatpush1.msra.mxu0 0.0
    %610 = vmatprep.subr.mxu0 0.0
    %611 = vmatpush1.msra.mxu0 0.0
    %612 = vmatprep.subr.mxu0 0.0
    %613 = vmatpush1.msra.mxu0 0.0
    %614 = vmatprep.subr.mxu0 0.0
    %615 = vmatpush1.msra.mxu0 0.0
    %616 = vmatprep.subr.mxu0 0.0
    %617 = vmatpush1.msra.mxu0 0.0
    %618 = vmatprep.subr.mxu0 0.0
    %619 = vmatpush1.msra.mxu0 0.0
    %620 = vmatprep.subr.mxu0 0.0
    %621 = vmatpush1.msra.mxu0 0.0
    %622 = vmatprep.subr.mxu0 0.0
    %623 = vmatpush1.msra.mxu0 0.0
    %624 = vmatprep.subr.mxu0 0.0
    %625 = vmatpush1.msra.mxu0 0.0
    %626 = vmatprep.subr.mxu0 0.0
    %627 = vmatpush1.msra.mxu0 0.0
    %628 = vmatprep.subr.mxu0 0.0
    %629 = vmatpush1.msra.mxu0 0.0
    %630 = vmatprep.subr.mxu0 0.0
    %631 = vmatpush1.msra.mxu0 0.0
    %632 = vmatprep.subr.mxu0 0.0
    %633 = vmatpush1.msra.mxu0 0.0
    %634 = vmatprep.subr.mxu0 0.0
    %635 = vmatpush1.msra.mxu0 0.0
    %636 = vmatprep.subr.mxu0 0.0
    %637 = vmatpush1.msra.mxu0 0.0
    %638 = vmatprep.subr.mxu0 0.0
    %639 = vmatpush1.msra.mxu0 0.0
    %640 = vmatprep.subr.mxu0 0.0
    %641 = vmatpush1.msra.mxu0 0.0
    %642 = vmatprep.subr.mxu0 0.0
    %643 = vmatpush1.msra.mxu0 0.0
    %644 = vmatprep.subr.mxu0 0.0
    %645 = vmatpush1.msra.mxu0 0.0
    %646 = vmatprep.subr.mxu0 0.0
    %647 = vmatpush1.msra.mxu0 0.0
    %648 = vmatprep.subr.mxu0 0.0
    %649 = vmatpush1.msra.mxu0 0.0
    %650 = vmatprep.subr.mxu0 0.0
    %651 = vmatpush1.msra.mxu0 0.0
    %652 = vmatprep.subr.mxu0 0.0
    %653 = vmatpush1.msra.mxu0 0.0
    %654 = vmatprep.subr.mxu0 0.0
    %655 = vmatpush1.msra.mxu0 0.0
    %656 = vmatprep.subr.mxu0 0.0
    %657 = vmatpush1.msra.mxu0 0.0
    %658 = vmatprep.subr.mxu0 0.0
    %659 = vmatpush1.msra.mxu0 0.0
    %660 = vmatprep.mubr.f32.mxu0 0.0
    %661 = vmatmul.mubr.f32.gmra.mrb[0].mxu0 %v548
    %v662 = vpop.f32.mrb[0].mxu0
    %v663 = vadd.f32 0.0, %v662
    %v664 = vpop.f32.mrb[0].mxu0
    %v665 = vadd.f32 0.0, %v664
    %666 = vmatprep.mubr.f32.mxu0 0.0
    %667 = vmatmul.mubr.f32.gmra.mrb[0].mxu0 %v551
    %v668 = vpop.f32.mrb[0].mxu0
    %v669 = vadd.f32 0.0, %v668
    %v670 = vpop.f32.mrb[0].mxu0
    %v671 = vadd.f32 0.0, %v670
    %672 = vmatprep.mubr.f32.mxu0 0.0
    %673 = vmatmul.mubr.f32.gmra.mrb[0].mxu0 %v554
    %v674 = vpop.f32.mrb[0].mxu0
    %v675 = vadd.f32 0.0, %v674
    %v676 = vpop.f32.mrb[0].mxu0
    %v677 = vadd.f32 0.0, %v676
    %678 = vmatprep.mubr.f32.mxu0 0.0
    %679 = vmatmul.mubr.f32.gmra.mrb[0].mxu0 %v557
    %v680 = vpop.f32.mrb[0].mxu0
    %v681 = vadd.f32 0.0, %v680
    %v682 = vpop.f32.mrb[0].mxu0
    %v683 = vadd.f32 0.0, %v682
    %684 = vmatprep.mubr.f32.mxu0 0.0
    %685 = vmatmul.mubr.f32.gmra.mrb[0].mxu0 %v560
    %v686 = vpop.f32.mrb[0].mxu0
    %v687 = vadd.f32 0.0, %v686
    %v688 = vpop.f32.mrb[0].mxu0
    %v689 = vadd.f32 0.0, %v688
    %690 = vmatprep.mubr.f32.mxu0 0.0
    %691 = vmatmul.mubr.f32.gmra.mrb[0].mxu0 %v563
    %v692 = vpop.f32.mrb[0].mxu0
    %v693 = vadd.f32 0.0, %v692
    %v694 = vpop.f32.mrb[0].mxu0
    %v695 = vadd.f32 0.0, %v694
    %696 = vmatprep.mubr.f32.mxu0 0.0
    %697 = vmatmul.mubr.f32.gmra.mrb[0].mxu0 %v566
    %v698 = vpop.f32.mrb[0].mxu0
    %v699 = vadd.f32 0.0, %v698
    %v700 = vpop.f32.mrb[0].mxu0
    %v701 = vadd.f32 0.0, %v700
    %702 = vmatprep.mubr.f32.mxu0 0.0
    %703 = vmatmul.mubr.f32.gmra.mrb[0].mxu0 %v569
    %v704 = vpop.f32.mrb[0].mxu0
    %v705 = vadd.f32 0.0, %v704
    %v706 = vpop.f32.mrb[0].mxu0
    %v707 = vadd.f32 0.0, %v706
    %708 = vmatprep.mubr.f32.mxu0 0.0
    %709 = vmatmul.mubr.f32.gmra.mrb[0].mxu0 %v572
    %v710 = vpop.f32.mrb[0].mxu0
    %v711 = vadd.f32 0.0, %v710
    %v712 = vpop.f32.mrb[0].mxu0
    %v713 = vadd.f32 0.0, %v712
    %714 = vmatprep.mubr.f32.mxu0 0.0
    %715 = vmatmul.mubr.f32.gmra.mrb[0].mxu0 %v575
    %v716 = vpop.f32.mrb[0].mxu0
    %v717 = vadd.f32 0.0, %v716
    %v718 = vpop.f32.mrb[0].mxu0
    %v719 = vadd.f32 0.0, %v718
    %720 = vmatprep.mubr.f32.mxu0 0.0
    %721 = vmatmul.mubr.f32.gmra.mrb[0].mxu0 %v578
    %v722 = vpop.f32.mrb[0].mxu0
    %v723 = vadd.f32 0.0, %v722
    %v724 = vpop.f32.mrb[0].mxu0
    %v725 = vadd.f32 0.0, %v724
    %726 = vmatprep.mubr.f32.mxu0 0.0
    %727 = vmatmul.mubr.f32.gmra.mrb[0].mxu0 %v581
    %v728 = vpop.f32.mrb[0].mxu0
    %v729 = vadd.f32 0.0, %v728
    %v730 = vpop.f32.mrb[0].mxu0
    %v731 = vadd.f32 0.0, %v730
    %732 = vmatprep.mubr.f32.mxu0 0.0
    %733 = vmatmul.mubr.f32.gmra.mrb[0].mxu0 %v584
    %v734 = vpop.f32.mrb[0].mxu0
    %v735 = vadd.f32 0.0, %v734
    %v736 = vpop.f32.mrb[0].mxu0
    %v737 = vadd.f32 0.0, %v736
    %738 = vmatprep.mubr.f32.mxu0 0.0
    %739 = vmatmul.mubr.f32.gmra.mrb[0].mxu0 %v587
    %v740 = vpop.f32.mrb[0].mxu0
    %v741 = vadd.f32 0.0, %v740
    %v742 = vpop.f32.mrb[0].mxu0
    %v743 = vadd.f32 0.0, %v742
    %744 = vdwg.mxu0
    %v746 = vsel %vm546, %v255, 0
    %v749 = vsel %vm546, %v260, 0
    %v752 = vsel %vm546, %v265, 0
    %v755 = vsel %vm546, %v270, 0
    %v758 = vsel %vm546, %v275, 0
    %v761 = vsel %vm546, %v280, 0
    %v764 = vsel %vm546, %v285, 0
    %v767 = vsel %vm546, %v290, 0
    %v770 = vsel %vm546, %v295, 0
    %v773 = vsel %vm546, %v300, 0
    %v776 = vsel %vm546, %v305, 0
    %v779 = vsel %vm546, %v310, 0
    %v782 = vsel %vm546, %v315, 0
    %v785 = vsel %vm546, %v320, 0
    %v788 = vsel %vm589, %v329, 0
    %v791 = vsel %vm589, %v330, 0
    %793 = vmatprep.subr.mxu0 %v324
    %794 = vmatpush1.msra.mxu0 %v323
    %795 = vmatprep.subr.mxu0 %v326
    %796 = vmatpush1.msra.mxu0 %v325
    %797 = vmatprep.subr.mxu0 %v328
    %798 = vmatpush1.msra.mxu0 %v327
    %799 = vmatprep.subr.mxu0 %v791
    %800 = vmatpush1.msra.mxu0 %v788
    %801 = vmatprep.subr.mxu0 0.0
    %802 = vmatpush1.msra.mxu0 0.0
    %803 = vmatprep.subr.mxu0 0.0
    %804 = vmatpush1.msra.mxu0 0.0
    %805 = vmatprep.subr.mxu0 0.0
    %806 = vmatpush1.msra.mxu0 0.0
    %807 = vmatprep.subr.mxu0 0.0
    %808 = vmatpush1.msra.mxu0 0.0
    %809 = vmatprep.subr.mxu0 0.0
    %810 = vmatpush1.msra.mxu0 0.0
    %811 = vmatprep.subr.mxu0 0.0
    %812 = vmatpush1.msra.mxu0 0.0
    %813 = vmatprep.subr.mxu0 0.0
    %814 = vmatpush1.msra.mxu0 0.0
    %815 = vmatprep.subr.mxu0 0.0
    %816 = vmatpush1.msra.mxu0 0.0
    %817 = vmatprep.subr.mxu0 0.0
    %818 = vmatpush1.msra.mxu0 0.0
    %819 = vmatprep.subr.mxu0 0.0
    %820 = vmatpush1.msra.mxu0 0.0
    %821 = vmatprep.subr.mxu0 0.0
    %822 = vmatpush1.msra.mxu0 0.0
    %823 = vmatprep.subr.mxu0 0.0
    %824 = vmatpush1.msra.mxu0 0.0
    %825 = vmatprep.subr.mxu0 0.0
    %826 = vmatpush1.msra.mxu0 0.0
    %827 = vmatprep.subr.mxu0 0.0
    %828 = vmatpush1.msra.mxu0 0.0
    %829 = vmatprep.subr.mxu0 0.0
    %830 = vmatpush1.msra.mxu0 0.0
    %831 = vmatprep.subr.mxu0 0.0
    %832 = vmatpush1.msra.mxu0 0.0
    %833 = vmatprep.subr.mxu0 0.0
    %834 = vmatpush1.msra.mxu0 0.0
    %835 = vmatprep.subr.mxu0 0.0
    %836 = vmatpush1.msra.mxu0 0.0
    %837 = vmatprep.subr.mxu0 0.0
    %838 = vmatpush1.msra.mxu0 0.0
    %839 = vmatprep.subr.mxu0 0.0
    %840 = vmatpush1.msra.mxu0 0.0
    %841 = vmatprep.subr.mxu0 0.0
    %842 = vmatpush1.msra.mxu0 0.0
    %843 = vmatprep.subr.mxu0 0.0
    %844 = vmatpush1.msra.mxu0 0.0
    %845 = vmatprep.subr.mxu0 0.0
    %846 = vmatpush1.msra.mxu0 0.0
    %847 = vmatprep.subr.mxu0 0.0
    %848 = vmatpush1.msra.mxu0 0.0
    %849 = vmatprep.subr.mxu0 0.0
    %850 = vmatpush1.msra.mxu0 0.0
    %851 = vmatprep.subr.mxu0 0.0
    %852 = vmatpush1.msra.mxu0 0.0
    %853 = vmatprep.subr.mxu0 0.0
    %854 = vmatpush1.msra.mxu0 0.0
    %855 = vmatprep.subr.mxu0 0.0
    %856 = vmatpush1.msra.mxu0 0.0
    %857 = vmatprep.mubr.f32.mxu0 0.0
    %858 = vmatmul.mubr.f32.gmra.mrb[0].mxu0 %v746
    %v859 = vpop.f32.mrb[0].mxu0
    %v860 = vadd.f32 %v663, %v859
    %v861 = vpop.f32.mrb[0].mxu0
    %v862 = vadd.f32 %v665, %v861
    %863 = vmatprep.mubr.f32.mxu0 0.0
    %864 = vmatmul.mubr.f32.gmra.mrb[0].mxu0 %v749
    %v865 = vpop.f32.mrb[0].mxu0
    %v866 = vadd.f32 %v669, %v865
    %v867 = vpop.f32.mrb[0].mxu0
    %v868 = vadd.f32 %v671, %v867
    %869 = vmatprep.mubr.f32.mxu0 0.0
    %870 = vmatmul.mubr.f32.gmra.mrb[0].mxu0 %v752
    %v871 = vpop.f32.mrb[0].mxu0
    %v872 = vadd.f32 %v675, %v871
    %v873 = vpop.f32.mrb[0].mxu0
    %v874 = vadd.f32 %v677, %v873
    %875 = vmatprep.mubr.f32.mxu0 0.0
    %876 = vmatmul.mubr.f32.gmra.mrb[0].mxu0 %v755
    %v877 = vpop.f32.mrb[0].mxu0
    %v878 = vadd.f32 %v681, %v877
    %v879 = vpop.f32.mrb[0].mxu0
    %v880 = vadd.f32 %v683, %v879
    %881 = vmatprep.mubr.f32.mxu0 0.0
    %882 = vmatmul.mubr.f32.gmra.mrb[0].mxu0 %v758
    %v883 = vpop.f32.mrb[0].mxu0
    %v884 = vadd.f32 %v687, %v883
    %v885 = vpop.f32.mrb[0].mxu0
    %v886 = vadd.f32 %v689, %v885
    %887 = vmatprep.mubr.f32.mxu0 0.0
    %888 = vmatmul.mubr.f32.gmra.mrb[0].mxu0 %v761
    %v889 = vpop.f32.mrb[0].mxu0
    %v890 = vadd.f32 %v693, %v889
    %v891 = vpop.f32.mrb[0].mxu0
    %v892 = vadd.f32 %v695, %v891
    %893 = vmatprep.mubr.f32.mxu0 0.0
    %894 = vmatmul.mubr.f32.gmra.mrb[0].mxu0 %v764
    %v895 = vpop.f32.mrb[0].mxu0
    %v896 = vadd.f32 %v699, %v895
    %v897 = vpop.f32.mrb[0].mxu0
    %v898 = vadd.f32 %v701, %v897
    %899 = vmatprep.mubr.f32.mxu0 0.0
    %900 = vmatmul.mubr.f32.gmra.mrb[0].mxu0 %v767
    %v901 = vpop.f32.mrb[0].mxu0
    %v902 = vadd.f32 %v705, %v901
    %v903 = vpop.f32.mrb[0].mxu0
    %v904 = vadd.f32 %v707, %v903
    %905 = vmatprep.mubr.f32.mxu0 0.0
    %906 = vmatmul.mubr.f32.gmra.mrb[0].mxu0 %v770
    %v907 = vpop.f32.mrb[0].mxu0
    %v908 = vadd.f32 %v711, %v907
    %v909 = vpop.f32.mrb[0].mxu0
    %v910 = vadd.f32 %v713, %v909
    %911 = vmatprep.mubr.f32.mxu0 0.0
    %912 = vmatmul.mubr.f32.gmra.mrb[0].mxu0 %v773
    %v913 = vpop.f32.mrb[0].mxu0
    %v914 = vadd.f32 %v717, %v913
    %v915 = vpop.f32.mrb[0].mxu0
    %v916 = vadd.f32 %v719, %v915
    %917 = vmatprep.mubr.f32.mxu0 0.0
    %918 = vmatmul.mubr.f32.gmra.mrb[0].mxu0 %v776
    %v919 = vpop.f32.mrb[0].mxu0
    %v920 = vadd.f32 %v723, %v919
    %v921 = vpop.f32.mrb[0].mxu0
    %v922 = vadd.f32 %v725, %v921
    %923 = vmatprep.mubr.f32.mxu0 0.0
    %924 = vmatmul.mubr.f32.gmra.mrb[0].mxu0 %v779
    %v925 = vpop.f32.mrb[0].mxu0
    %v926 = vadd.f32 %v729, %v925
    %v927 = vpop.f32.mrb[0].mxu0
    %v928 = vadd.f32 %v731, %v927
    %929 = vmatprep.mubr.f32.mxu0 0.0
    %930 = vmatmul.mubr.f32.gmra.mrb[0].mxu0 %v782
    %v931 = vpop.f32.mrb[0].mxu0
    %v932 = vadd.f32 %v735, %v931
    %v933 = vpop.f32.mrb[0].mxu0
    %v934 = vadd.f32 %v737, %v933
    %935 = vmatprep.mubr.f32.mxu0 0.0
    %936 = vmatmul.mubr.f32.gmra.mrb[0].mxu0 %v785
    %v937 = vpop.f32.mrb[0].mxu0
    %v938 = vadd.f32 %v741, %v937
    %v939 = vpop.f32.mrb[0].mxu0
    %v940 = vadd.f32 %v743, %v939
    %941 = vdwg.mxu0
    %s942 = scalar_lea.vmem %s1, 448
    %v943 = vld [vmem:[%s942] sm:$0xff]
    %v944 = vld [vmem:[%s942 + $0x8] sm:$0xff]
    %v945 = vld [vmem:[%s942 + $0x10] sm:$0xff]
    %v946 = vld [vmem:[%s942 + $0x18] sm:$0xff]
    %v947 = vld [vmem:[%s942 + $0x20] sm:$0xff]
    %v948 = vld [vmem:[%s942 + $0x28] sm:$0xff]
    %v949 = vld [vmem:[%s942 + $0x30] sm:$0xff]
    %v950 = vld [vmem:[%s942 + $0x38] sm:$0xff]
    %v951 = vld [vmem:[%s942 + $0x40] sm:$0xff]
    %v952 = vld [vmem:[%s942 + $0x48] sm:$0xff]
    %v953 = vld [vmem:[%s942 + $0x50] sm:$0xff]
    %v954 = vld [vmem:[%s942 + $0x58] sm:$0xff]
    %v955 = vld [vmem:[%s942 + $0x60] sm:$0xff]
    %v956 = vld [vmem:[%s942 + $0x68] sm:$0xff]
    %v957 = vld [vmem:[%s942 + $0x70] sm:$0xff]
    %v958 = vld [vmem:[%s942 + $0x78] sm:$0xff]
    %v959 = vld [vmem:[%s942 + $0x80] sm:$0xff]
    %v960 = vld [vmem:[%s942 + $0x88] sm:$0xff]
    %v961 = vld [vmem:[%s942 + $0x90] sm:$0xff]
    %v962 = vld [vmem:[%s942 + $0x98] sm:$0xff]
    %v963 = vld [vmem:[%s942 + $0xa0] sm:$0xff]
    %v964 = vld [vmem:[%s942 + $0xa8] sm:$0xff]
    %v965 = vld [vmem:[%s942 + $0xb0] sm:$0xff]
    %v966 = vld [vmem:[%s942 + $0xb8] sm:$0xff]
    %v967 = vld [vmem:[%s942 + $0xc0] sm:$0xff]
    %v968 = vld [vmem:[%s942 + $0xc8] sm:$0xff]
    %v969 = vld [vmem:[%s942 + $0xd0] sm:$0xff]
    %v970 = vld [vmem:[%s942 + $0xd8] sm:$0xff]
    %v972 = vsel %vm145, %v944, 0
    %v975 = vsel %vm145, %v946, 0
    %v978 = vsel %vm145, %v948, 0
    %v981 = vsel %vm145, %v950, 0
    %v984 = vsel %vm145, %v952, 0
    %v987 = vsel %vm145, %v954, 0
    %v990 = vsel %vm145, %v956, 0
    %v993 = vsel %vm145, %v958, 0
    %v996 = vsel %vm145, %v960, 0
    %v999 = vsel %vm145, %v962, 0
    %v1002 = vsel %vm145, %v964, 0
    %v1005 = vsel %vm145, %v966, 0
    %v1008 = vsel %vm145, %v968, 0
    %v1011 = vsel %vm145, %v970, 0
    %1013 = vmatprep.subr.mxu0 0.0
    %1014 = vmatpush1.msra.mxu0 %v89
    %1015 = vmatprep.subr.mxu0 0.0
    %1016 = vmatpush1.msra.mxu0 %v90
    %1017 = vmatprep.subr.mxu0 0.0
    %1018 = vmatpush1.msra.mxu0 %v91
    %1019 = vmatprep.subr.mxu0 0.0
    %1020 = vmatpush1.msra.mxu0 %v92
    %1021 = vmatprep.subr.mxu0 0.0
    %1022 = vmatpush1.msra.mxu0 %v93
    %1023 = vmatprep.subr.mxu0 0.0
    %1024 = vmatpush1.msra.mxu0 %v94
    %1025 = vmatprep.subr.mxu0 0.0
    %1026 = vmatpush1.msra.mxu0 %v95
    %1027 = vmatprep.subr.mxu0 0.0
    %1028 = vmatpush1.msra.mxu0 %v96
    %1029 = vmatprep.subr.mxu0 0.0
    %1030 = vmatpush1.msra.mxu0 %v97
    %1031 = vmatprep.subr.mxu0 0.0
    %1032 = vmatpush1.msra.mxu0 %v98
    %1033 = vmatprep.subr.mxu0 0.0
    %1034 = vmatpush1.msra.mxu0 %v99
    %1035 = vmatprep.subr.mxu0 0.0
    %1036 = vmatpush1.msra.mxu0 %v100
    %1037 = vmatprep.subr.mxu0 0.0
    %1038 = vmatpush1.msra.mxu0 %v101
    %1039 = vmatprep.subr.mxu0 0.0
    %1040 = vmatpush1.msra.mxu0 %v102
    %1041 = vmatprep.subr.mxu0 0.0
    %1042 = vmatpush1.msra.mxu0 %v103
    %1043 = vmatprep.subr.mxu0 0.0
    %1044 = vmatpush1.msra.mxu0 %v104
    %1045 = vmatprep.subr.mxu0 0.0
    %1046 = vmatpush1.msra.mxu0 %v105
    %1047 = vmatprep.subr.mxu0 0.0
    %1048 = vmatpush1.msra.mxu0 %v106
    %1049 = vmatprep.subr.mxu0 0.0
    %1050 = vmatpush1.msra.mxu0 %v107
    %1051 = vmatprep.subr.mxu0 0.0
    %1052 = vmatpush1.msra.mxu0 %v108
    %1053 = vmatprep.subr.mxu0 0.0
    %1054 = vmatpush1.msra.mxu0 %v109
    %1055 = vmatprep.subr.mxu0 0.0
    %1056 = vmatpush1.msra.mxu0 %v110
    %1057 = vmatprep.subr.mxu0 0.0
    %1058 = vmatpush1.msra.mxu0 %v111
    %1059 = vmatprep.subr.mxu0 0.0
    %1060 = vmatpush1.msra.mxu0 %v112
    %1061 = vmatprep.subr.mxu0 0.0
    %1062 = vmatpush1.msra.mxu0 %v113
    %1063 = vmatprep.subr.mxu0 0.0
    %1064 = vmatpush1.msra.mxu0 %v114
    %1065 = vmatprep.subr.mxu0 0.0
    %1066 = vmatpush1.msra.mxu0 %v115
    %1067 = vmatprep.subr.mxu0 0.0
    %1068 = vmatpush1.msra.mxu0 %v116
    %1069 = vmatprep.subr.mxu0 0.0
    %1070 = vmatpush1.msra.mxu0 0.0
    %1071 = vmatprep.subr.mxu0 0.0
    %1072 = vmatpush1.msra.mxu0 0.0
    %1073 = vmatprep.subr.mxu0 0.0
    %1074 = vmatpush1.msra.mxu0 0.0
    %1075 = vmatprep.subr.mxu0 0.0
    %1076 = vmatpush1.msra.mxu0 0.0
    %1077 = vmatprep.mubr.f32.mxu0 %v972
    %1078 = vmatmul.mubr.f32.gmra.mrb[0].mxu0 %v943
    %v1079 = vpop.f32.mrb[0].mxu0
    %v1080 = vadd.f32 0.0, %v1079
    %v1081 = vpop.f32.mrb[0].mxu0
    %1082 = vmatprep.mubr.f32.mxu0 %v975
    %1083 = vmatmul.mubr.f32.gmra.mrb[0].mxu0 %v945
    %v1084 = vpop.f32.mrb[0].mxu0
    %v1085 = vadd.f32 0.0, %v1084
    %v1086 = vpop.f32.mrb[0].mxu0
    %1087 = vmatprep.mubr.f32.mxu0 %v978
    %1088 = vmatmul.mubr.f32.gmra.mrb[0].mxu0 %v947
    %v1089 = vpop.f32.mrb[0].mxu0
    %v1090 = vadd.f32 0.0, %v1089
    %v1091 = vpop.f32.mrb[0].mxu0
    %1092 = vmatprep.mubr.f32.mxu0 %v981
    %1093 = vmatmul.mubr.f32.gmra.mrb[0].mxu0 %v949
    %v1094 = vpop.f32.mrb[0].mxu0
    %v1095 = vadd.f32 0.0, %v1094
    %v1096 = vpop.f32.mrb[0].mxu0
    %1097 = vmatprep.mubr.f32.mxu0 %v984
    %1098 = vmatmul.mubr.f32.gmra.mrb[0].mxu0 %v951
    %v1099 = vpop.f32.mrb[0].mxu0
    %v1100 = vadd.f32 0.0, %v1099
    %v1101 = vpop.f32.mrb[0].mxu0
    %1102 = vmatprep.mubr.f32.mxu0 %v987
    %1103 = vmatmul.mubr.f32.gmra.mrb[0].mxu0 %v953
    %v1104 = vpop.f32.mrb[0].mxu0
    %v1105 = vadd.f32 0.0, %v1104
    %v1106 = vpop.f32.mrb[0].mxu0
    %1107 = vmatprep.mubr.f32.mxu0 %v990
    %1108 = vmatmul.mubr.f32.gmra.mrb[0].mxu0 %v955
    %v1109 = vpop.f32.mrb[0].mxu0
    %v1110 = vadd.f32 0.0, %v1109
    %v1111 = vpop.f32.mrb[0].mxu0
    %1112 = vmatprep.mubr.f32.mxu0 %v993
    %1113 = vmatmul.mubr.f32.gmra.mrb[0].mxu0 %v957
    %v1114 = vpop.f32.mrb[0].mxu0
    %v1115 = vadd.f32 0.0, %v1114
    %v1116 = vpop.f32.mrb[0].mxu0
    %1117 = vmatprep.mubr.f32.mxu0 %v996
    %1118 = vmatmul.mubr.f32.gmra.mrb[0].mxu0 %v959
    %v1119 = vpop.f32.mrb[0].mxu0
    %v1120 = vadd.f32 0.0, %v1119
    %v1121 = vpop.f32.mrb[0].mxu0
    %1122 = vmatprep.mubr.f32.mxu0 %v999
    %1123 = vmatmul.mubr.f32.gmra.mrb[0].mxu0 %v961
    %v1124 = vpop.f32.mrb[0].mxu0
    %v1125 = vadd.f32 0.0, %v1124
    %v1126 = vpop.f32.mrb[0].mxu0
    %1127 = vmatprep.mubr.f32.mxu0 %v1002
    %1128 = vmatmul.mubr.f32.gmra.mrb[0].mxu0 %v963
    %v1129 = vpop.f32.mrb[0].mxu0
    %v1130 = vadd.f32 0.0, %v1129
    %v1131 = vpop.f32.mrb[0].mxu0
    %1132 = vmatprep.mubr.f32.mxu0 %v1005
    %1133 = vmatmul.mubr.f32.gmra.mrb[0].mxu0 %v965
    %v1134 = vpop.f32.mrb[0].mxu0
    %v1135 = vadd.f32 0.0, %v1134
    %v1136 = vpop.f32.mrb[0].mxu0
    %1137 = vmatprep.mubr.f32.mxu0 %v1008
    %1138 = vmatmul.mubr.f32.gmra.mrb[0].mxu0 %v967
    %v1139 = vpop.f32.mrb[0].mxu0
    %v1140 = vadd.f32 0.0, %v1139
    %v1141 = vpop.f32.mrb[0].mxu0
    %1142 = vmatprep.mubr.f32.mxu0 %v1011
    %1143 = vmatmul.mubr.f32.gmra.mrb[0].mxu0 %v969
    %v1144 = vpop.f32.mrb[0].mxu0
    %v1145 = vadd.f32 0.0, %v1144
    %v1146 = vpop.f32.mrb[0].mxu0
    %1147 = vdwg.mxu0
    %s1148 = scalar_lea.vmem %s2, 128
    %v1149 = vld [vmem:[%s1148] sm:$0xff]
    %v1150 = vld [vmem:[%s1148 + $0x8] sm:$0xff]
    %v1151 = vld [vmem:[%s1148 + $0x10] sm:$0xff]
    %v1152 = vld [vmem:[%s1148 + $0x18] sm:$0xff]
    %v1153 = vld [vmem:[%s1148 + $0x20] sm:$0xff]
    %v1154 = vld [vmem:[%s1148 + $0x28] sm:$0xff]
    %v1155 = vld [vmem:[%s1148 + $0x30] sm:$0xf]
    %v1156 = vld [vmem:[%s1148 + $0x38] sm:$0xf]
    %v1158 = vsel %vm546, %v1080, 0
    %v1161 = vsel %vm546, %v1085, 0
    %v1164 = vsel %vm546, %v1090, 0
    %v1167 = vsel %vm546, %v1095, 0
    %v1170 = vsel %vm546, %v1100, 0
    %v1173 = vsel %vm546, %v1105, 0
    %v1176 = vsel %vm546, %v1110, 0
    %v1179 = vsel %vm546, %v1115, 0
    %v1182 = vsel %vm546, %v1120, 0
    %v1185 = vsel %vm546, %v1125, 0
    %v1188 = vsel %vm546, %v1130, 0
    %v1191 = vsel %vm546, %v1135, 0
    %v1194 = vsel %vm546, %v1140, 0
    %v1197 = vsel %vm546, %v1145, 0
    %v1200 = vsel %vm589, %v1155, 0
    %v1203 = vsel %vm589, %v1156, 0
    %1205 = vmatprep.subr.mxu0 %v1150
    %1206 = vmatpush1.msra.mxu0 %v1149
    %1207 = vmatprep.subr.mxu0 %v1152
    %1208 = vmatpush1.msra.mxu0 %v1151
    %1209 = vmatprep.subr.mxu0 %v1154
    %1210 = vmatpush1.msra.mxu0 %v1153
    %1211 = vmatprep.subr.mxu0 %v1203
    %1212 = vmatpush1.msra.mxu0 %v1200
    %1213 = vmatprep.subr.mxu0 0.0
    %1214 = vmatpush1.msra.mxu0 0.0
    %1215 = vmatprep.subr.mxu0 0.0
    %1216 = vmatpush1.msra.mxu0 0.0
    %1217 = vmatprep.subr.mxu0 0.0
    %1218 = vmatpush1.msra.mxu0 0.0
    %1219 = vmatprep.subr.mxu0 0.0
    %1220 = vmatpush1.msra.mxu0 0.0
    %1221 = vmatprep.subr.mxu0 0.0
    %1222 = vmatpush1.msra.mxu0 0.0
    %1223 = vmatprep.subr.mxu0 0.0
    %1224 = vmatpush1.msra.mxu0 0.0
    %1225 = vmatprep.subr.mxu0 0.0
    %1226 = vmatpush1.msra.mxu0 0.0
    %1227 = vmatprep.subr.mxu0 0.0
    %1228 = vmatpush1.msra.mxu0 0.0
    %1229 = vmatprep.subr.mxu0 0.0
    %1230 = vmatpush1.msra.mxu0 0.0
    %1231 = vmatprep.subr.mxu0 0.0
    %1232 = vmatpush1.msra.mxu0 0.0
    %1233 = vmatprep.subr.mxu0 0.0
    %1234 = vmatpush1.msra.mxu0 0.0
    %1235 = vmatprep.subr.mxu0 0.0
    %1236 = vmatpush1.msra.mxu0 0.0
    %1237 = vmatprep.subr.mxu0 0.0
    %1238 = vmatpush1.msra.mxu0 0.0
    %1239 = vmatprep.subr.mxu0 0.0
    %1240 = vmatpush1.msra.mxu0 0.0
    %1241 = vmatprep.subr.mxu0 0.0
    %1242 = vmatpush1.msra.mxu0 0.0
    %1243 = vmatprep.subr.mxu0 0.0
    %1244 = vmatpush1.msra.mxu0 0.0
    %1245 = vmatprep.subr.mxu0 0.0
    %1246 = vmatpush1.msra.mxu0 0.0
    %1247 = vmatprep.subr.mxu0 0.0
    %1248 = vmatpush1.msra.mxu0 0.0
    %1249 = vmatprep.subr.mxu0 0.0
    %1250 = vmatpush1.msra.mxu0 0.0
    %1251 = vmatprep.subr.mxu0 0.0
    %1252 = vmatpush1.msra.mxu0 0.0
    %1253 = vmatprep.subr.mxu0 0.0
    %1254 = vmatpush1.msra.mxu0 0.0
    %1255 = vmatprep.subr.mxu0 0.0
    %1256 = vmatpush1.msra.mxu0 0.0
    %1257 = vmatprep.subr.mxu0 0.0
    %1258 = vmatpush1.msra.mxu0 0.0
    %1259 = vmatprep.subr.mxu0 0.0
    %1260 = vmatpush1.msra.mxu0 0.0
    %1261 = vmatprep.subr.mxu0 0.0
    %1262 = vmatpush1.msra.mxu0 0.0
    %1263 = vmatprep.subr.mxu0 0.0
    %1264 = vmatpush1.msra.mxu0 0.0
    %1265 = vmatprep.subr.mxu0 0.0
    %1266 = vmatpush1.msra.mxu0 0.0
    %1267 = vmatprep.subr.mxu0 0.0
    %1268 = vmatpush1.msra.mxu0 0.0
    %1269 = vmatprep.mubr.f32.mxu0 0.0
    %1270 = vmatmul.mubr.f32.gmra.mrb[0].mxu0 %v1158
    %v1271 = vpop.f32.mrb[0].mxu0
    %v1272 = vadd.f32 0.0, %v1271
    %v1273 = vpop.f32.mrb[0].mxu0
    %v1274 = vadd.f32 0.0, %v1273
    %1275 = vmatprep.mubr.f32.mxu0 0.0
    %1276 = vmatmul.mubr.f32.gmra.mrb[0].mxu0 %v1161
    %v1277 = vpop.f32.mrb[0].mxu0
    %v1278 = vadd.f32 0.0, %v1277
    %v1279 = vpop.f32.mrb[0].mxu0
    %v1280 = vadd.f32 0.0, %v1279
    %1281 = vmatprep.mubr.f32.mxu0 0.0
    %1282 = vmatmul.mubr.f32.gmra.mrb[0].mxu0 %v1164
    %v1283 = vpop.f32.mrb[0].mxu0
    %v1284 = vadd.f32 0.0, %v1283
    %v1285 = vpop.f32.mrb[0].mxu0
    %v1286 = vadd.f32 0.0, %v1285
    %1287 = vmatprep.mubr.f32.mxu0 0.0
    %1288 = vmatmul.mubr.f32.gmra.mrb[0].mxu0 %v1167
    %v1289 = vpop.f32.mrb[0].mxu0
    %v1290 = vadd.f32 0.0, %v1289
    %v1291 = vpop.f32.mrb[0].mxu0
    %v1292 = vadd.f32 0.0, %v1291
    %1293 = vmatprep.mubr.f32.mxu0 0.0
    %1294 = vmatmul.mubr.f32.gmra.mrb[0].mxu0 %v1170
    %v1295 = vpop.f32.mrb[0].mxu0
    %v1296 = vadd.f32 0.0, %v1295
    %v1297 = vpop.f32.mrb[0].mxu0
    %v1298 = vadd.f32 0.0, %v1297
    %1299 = vmatprep.mubr.f32.mxu0 0.0
    %1300 = vmatmul.mubr.f32.gmra.mrb[0].mxu0 %v1173
    %v1301 = vpop.f32.mrb[0].mxu0
    %v1302 = vadd.f32 0.0, %v1301
    %v1303 = vpop.f32.mrb[0].mxu0
    %v1304 = vadd.f32 0.0, %v1303
    %1305 = vmatprep.mubr.f32.mxu0 0.0
    %1306 = vmatmul.mubr.f32.gmra.mrb[0].mxu0 %v1176
    %v1307 = vpop.f32.mrb[0].mxu0
    %v1308 = vadd.f32 0.0, %v1307
    %v1309 = vpop.f32.mrb[0].mxu0
    %v1310 = vadd.f32 0.0, %v1309
    %1311 = vmatprep.mubr.f32.mxu0 0.0
    %1312 = vmatmul.mubr.f32.gmra.mrb[0].mxu0 %v1179
    %v1313 = vpop.f32.mrb[0].mxu0
    %v1314 = vadd.f32 0.0, %v1313
    %v1315 = vpop.f32.mrb[0].mxu0
    %v1316 = vadd.f32 0.0, %v1315
    %1317 = vmatprep.mubr.f32.mxu0 0.0
    %1318 = vmatmul.mubr.f32.gmra.mrb[0].mxu0 %v1182
    %v1319 = vpop.f32.mrb[0].mxu0
    %v1320 = vadd.f32 0.0, %v1319
    %v1321 = vpop.f32.mrb[0].mxu0
    %v1322 = vadd.f32 0.0, %v1321
    %1323 = vmatprep.mubr.f32.mxu0 0.0
    %1324 = vmatmul.mubr.f32.gmra.mrb[0].mxu0 %v1185
    %v1325 = vpop.f32.mrb[0].mxu0
    %v1326 = vadd.f32 0.0, %v1325
    %v1327 = vpop.f32.mrb[0].mxu0
    %v1328 = vadd.f32 0.0, %v1327
    %1329 = vmatprep.mubr.f32.mxu0 0.0
    %1330 = vmatmul.mubr.f32.gmra.mrb[0].mxu0 %v1188
    %v1331 = vpop.f32.mrb[0].mxu0
    %v1332 = vadd.f32 0.0, %v1331
    %v1333 = vpop.f32.mrb[0].mxu0
    %v1334 = vadd.f32 0.0, %v1333
    %1335 = vmatprep.mubr.f32.mxu0 0.0
    %1336 = vmatmul.mubr.f32.gmra.mrb[0].mxu0 %v1191
    %v1337 = vpop.f32.mrb[0].mxu0
    %v1338 = vadd.f32 0.0, %v1337
    %v1339 = vpop.f32.mrb[0].mxu0
    %v1340 = vadd.f32 0.0, %v1339
    %1341 = vmatprep.mubr.f32.mxu0 0.0
    %1342 = vmatmul.mubr.f32.gmra.mrb[0].mxu0 %v1194
    %v1343 = vpop.f32.mrb[0].mxu0
    %v1344 = vadd.f32 0.0, %v1343
    %v1345 = vpop.f32.mrb[0].mxu0
    %v1346 = vadd.f32 0.0, %v1345
    %1347 = vmatprep.mubr.f32.mxu0 0.0
    %1348 = vmatmul.mubr.f32.gmra.mrb[0].mxu0 %v1197
    %v1349 = vpop.f32.mrb[0].mxu0
    %v1350 = vadd.f32 0.0, %v1349
    %v1351 = vpop.f32.mrb[0].mxu0
    %v1352 = vadd.f32 0.0, %v1351
    %1353 = vdwg.mxu0
    %v1354 = vadd.f32 %v860, %v1272
    %v1355 = vadd.f32 %v862, %v1274
    %v1356 = vadd.f32 %v866, %v1278
    %v1357 = vadd.f32 %v868, %v1280
    %v1358 = vadd.f32 %v872, %v1284
    %v1359 = vadd.f32 %v874, %v1286
    %v1360 = vadd.f32 %v878, %v1290
    %v1361 = vadd.f32 %v880, %v1292
    %v1362 = vadd.f32 %v884, %v1296
    %v1363 = vadd.f32 %v886, %v1298
    %v1364 = vadd.f32 %v890, %v1302
    %v1365 = vadd.f32 %v892, %v1304
    %v1366 = vadd.f32 %v896, %v1308
    %v1367 = vadd.f32 %v898, %v1310
    %v1368 = vadd.f32 %v902, %v1314
    %v1369 = vadd.f32 %v904, %v1316
    %v1370 = vadd.f32 %v908, %v1320
    %v1371 = vadd.f32 %v910, %v1322
    %v1372 = vadd.f32 %v914, %v1326
    %v1373 = vadd.f32 %v916, %v1328
    %v1374 = vadd.f32 %v920, %v1332
    %v1375 = vadd.f32 %v922, %v1334
    %v1376 = vadd.f32 %v926, %v1338
    %v1377 = vadd.f32 %v928, %v1340
    %v1378 = vadd.f32 %v932, %v1344
    %v1379 = vadd.f32 %v934, %v1346
    %v1380 = vadd.f32 %v938, %v1350
    %v1381 = vadd.f32 %v940, %v1352
    %v1382 = vld [vmem:[#allocation2] sm:$0x3]
    %v1384 = vlaneseq
    %v1385 = vshrl.u32 %v1384, 7
    %v1386 = vsub.s32 0, %v1385
    %v1387 = vrot.slane %v1382, %v1386
    %v1388 = vlaneseq
    %v1389 = vshrl.u32 %v1388, 7
    %v1390 = vsub.s32 1, %v1389
    %v1391 = vrot.slane %v1382, %v1390
    %v1394 = vadd.f32 %v1354, %v1387
    %v1395 = vadd.f32 %v1355, %v1391
    %v1396 = vadd.f32 %v1356, %v1387
    %v1397 = vadd.f32 %v1357, %v1391
    %v1398 = vadd.f32 %v1358, %v1387
    %v1399 = vadd.f32 %v1359, %v1391
    %v1400 = vadd.f32 %v1360, %v1387
    %v1401 = vadd.f32 %v1361, %v1391
    %v1402 = vadd.f32 %v1362, %v1387
    %v1403 = vadd.f32 %v1363, %v1391
    %v1404 = vadd.f32 %v1364, %v1387
    %v1405 = vadd.f32 %v1365, %v1391
    %v1406 = vadd.f32 %v1366, %v1387
    %v1407 = vadd.f32 %v1367, %v1391
    %v1408 = vadd.f32 %v1368, %v1387
    %v1409 = vadd.f32 %v1369, %v1391
    %v1410 = vadd.f32 %v1370, %v1387
    %v1411 = vadd.f32 %v1371, %v1391
    %v1412 = vadd.f32 %v1372, %v1387
    %v1413 = vadd.f32 %v1373, %v1391
    %v1414 = vadd.f32 %v1374, %v1387
    %v1415 = vadd.f32 %v1375, %v1391
    %v1416 = vadd.f32 %v1376, %v1387
    %v1417 = vadd.f32 %v1377, %v1391
    %v1418 = vadd.f32 %v1378, %v1387
    %v1419 = vadd.f32 %v1379, %v1391
    %v1420 = vadd.f32 %v1380, %v1387
    %v1421 = vadd.f32 %v1381, %v1391
    %v1422 = vxor.u32 %v1394, 2147483648
    %v1423 = vxor.u32 %v1395, 2147483648
    %v1424 = vxor.u32 %v1396, 2147483648
    %v1425 = vxor.u32 %v1397, 2147483648
    %v1426 = vxor.u32 %v1398, 2147483648
    %v1427 = vxor.u32 %v1399, 2147483648
    %v1428 = vxor.u32 %v1400, 2147483648
    %v1429 = vxor.u32 %v1401, 2147483648
    %v1430 = vxor.u32 %v1402, 2147483648
    %v1431 = vxor.u32 %v1403, 2147483648
    %v1432 = vxor.u32 %v1404, 2147483648
    %v1433 = vxor.u32 %v1405, 2147483648
    %v1434 = vxor.u32 %v1406, 2147483648
    %v1435 = vxor.u32 %v1407, 2147483648
    %v1436 = vxor.u32 %v1408, 2147483648
    %v1437 = vxor.u32 %v1409, 2147483648
    %v1438 = vxor.u32 %v1410, 2147483648
    %v1439 = vxor.u32 %v1411, 2147483648
    %v1440 = vxor.u32 %v1412, 2147483648
    %v1441 = vxor.u32 %v1413, 2147483648
    %v1442 = vxor.u32 %v1414, 2147483648
    %v1443 = vxor.u32 %v1415, 2147483648
    %v1444 = vxor.u32 %v1416, 2147483648
    %v1445 = vxor.u32 %v1417, 2147483648
    %v1446 = vxor.u32 %v1418, 2147483648
    %v1447 = vxor.u32 %v1419, 2147483648
    %v1448 = vxor.u32 %v1420, 2147483648
    %v1449 = vxor.u32 %v1421, 2147483648
    %v1450 = vmul.f32 %v1422, 1.442695
    %v1451 = vpow.pop %v1450
    %v1452 = vmul.f32 %v1423, 1.442695
    %v1453 = vpow.pop %v1452
    %v1454 = vmul.f32 %v1424, 1.442695
    %v1455 = vpow.pop %v1454
    %v1456 = vmul.f32 %v1425, 1.442695
    %v1457 = vpow.pop %v1456
    %v1458 = vmul.f32 %v1426, 1.442695
    %v1459 = vpow.pop %v1458
    %v1460 = vmul.f32 %v1427, 1.442695
    %v1461 = vpow.pop %v1460
    %v1462 = vmul.f32 %v1428, 1.442695
    %v1463 = vpow.pop %v1462
    %v1464 = vmul.f32 %v1429, 1.442695
    %v1465 = vpow.pop %v1464
    %v1466 = vmul.f32 %v1430, 1.442695
    %v1467 = vpow.pop %v1466
    %v1468 = vmul.f32 %v1431, 1.442695
    %v1469 = vpow.pop %v1468
    %v1470 = vmul.f32 %v1432, 1.442695
    %v1471 = vpow.pop %v1470
    %v1472 = vmul.f32 %v1433, 1.442695
    %v1473 = vpow.pop %v1472
    %v1474 = vmul.f32 %v1434, 1.442695
    %v1475 = vpow.pop %v1474
    %v1476 = vmul.f32 %v1435, 1.442695
    %v1477 = vpow.pop %v1476
    %v1478 = vmul.f32 %v1436, 1.442695
    %v1479 = vpow.pop %v1478
    %v1480 = vmul.f32 %v1437, 1.442695
    %v1481 = vpow.pop %v1480
    %v1482 = vmul.f32 %v1438, 1.442695
    %v1483 = vpow.pop %v1482
    %v1484 = vmul.f32 %v1439, 1.442695
    %v1485 = vpow.pop %v1484
    %v1486 = vmul.f32 %v1440, 1.442695
    %v1487 = vpow.pop %v1486
    %v1488 = vmul.f32 %v1441, 1.442695
    %v1489 = vpow.pop %v1488
    %v1490 = vmul.f32 %v1442, 1.442695
    %v1491 = vpow.pop %v1490
    %v1492 = vmul.f32 %v1443, 1.442695
    %v1493 = vpow.pop %v1492
    %v1494 = vmul.f32 %v1444, 1.442695
    %v1495 = vpow.pop %v1494
    %v1496 = vmul.f32 %v1445, 1.442695
    %v1497 = vpow.pop %v1496
    %v1498 = vmul.f32 %v1446, 1.442695
    %v1499 = vpow.pop %v1498
    %v1500 = vmul.f32 %v1447, 1.442695
    %v1501 = vpow.pop %v1500
    %v1502 = vmul.f32 %v1448, 1.442695
    %v1503 = vpow.pop %v1502
    %v1504 = vmul.f32 %v1449, 1.442695
    %v1505 = vpow.pop %v1504
    %v1506 = vadd.f32 %v1451, 1.0
    %v1507 = vadd.f32 %v1453, 1.0
    %v1508 = vadd.f32 %v1455, 1.0
    %v1509 = vadd.f32 %v1457, 1.0
    %v1510 = vadd.f32 %v1459, 1.0
    %v1511 = vadd.f32 %v1461, 1.0
    %v1512 = vadd.f32 %v1463, 1.0
    %v1513 = vadd.f32 %v1465, 1.0
    %v1514 = vadd.f32 %v1467, 1.0
    %v1515 = vadd.f32 %v1469, 1.0
    %v1516 = vadd.f32 %v1471, 1.0
    %v1517 = vadd.f32 %v1473, 1.0
    %v1518 = vadd.f32 %v1475, 1.0
    %v1519 = vadd.f32 %v1477, 1.0
    %v1520 = vadd.f32 %v1479, 1.0
    %v1521 = vadd.f32 %v1481, 1.0
    %v1522 = vadd.f32 %v1483, 1.0
    %v1523 = vadd.f32 %v1485, 1.0
    %v1524 = vadd.f32 %v1487, 1.0
    %v1525 = vadd.f32 %v1489, 1.0
    %v1526 = vadd.f32 %v1491, 1.0
    %v1527 = vadd.f32 %v1493, 1.0
    %v1528 = vadd.f32 %v1495, 1.0
    %v1529 = vadd.f32 %v1497, 1.0
    %v1530 = vadd.f32 %v1499, 1.0
    %v1531 = vadd.f32 %v1501, 1.0
    %v1532 = vadd.f32 %v1503, 1.0
    %v1533 = vadd.f32 %v1505, 1.0
    %v1534 = vrcp.pop %v1506
    %v1535 = vmul.f32 1.0, %v1534
    %v1536 = vrcp.pop %v1507
    %v1537 = vmul.f32 1.0, %v1536
    %v1538 = vrcp.pop %v1508
    %v1539 = vmul.f32 1.0, %v1538
    %v1540 = vrcp.pop %v1509
    %v1541 = vmul.f32 1.0, %v1540
    %v1542 = vrcp.pop %v1510
    %v1543 = vmul.f32 1.0, %v1542
    %v1544 = vrcp.pop %v1511
    %v1545 = vmul.f32 1.0, %v1544
    %v1546 = vrcp.pop %v1512
    %v1547 = vmul.f32 1.0, %v1546
    %v1548 = vrcp.pop %v1513
    %v1549 = vmul.f32 1.0, %v1548
    %v1550 = vrcp.pop %v1514
    %v1551 = vmul.f32 1.0, %v1550
    %v1552 = vrcp.pop %v1515
    %v1553 = vmul.f32 1.0, %v1552
    %v1554 = vrcp.pop %v1516
    %v1555 = vmul.f32 1.0, %v1554
    %v1556 = vrcp.pop %v1517
    %v1557 = vmul.f32 1.0, %v1556
    %v1558 = vrcp.pop %v1518
    %v1559 = vmul.f32 1.0, %v1558
    %v1560 = vrcp.pop %v1519
    %v1561 = vmul.f32 1.0, %v1560
    %v1562 = vrcp.pop %v1520
    %v1563 = vmul.f32 1.0, %v1562
    %v1564 = vrcp.pop %v1521
    %v1565 = vmul.f32 1.0, %v1564
    %v1566 = vrcp.pop %v1522
    %v1567 = vmul.f32 1.0, %v1566
    %v1568 = vrcp.pop %v1523
    %v1569 = vmul.f32 1.0, %v1568
    %v1570 = vrcp.pop %v1524
    %v1571 = vmul.f32 1.0, %v1570
    %v1572 = vrcp.pop %v1525
    %v1573 = vmul.f32 1.0, %v1572
    %v1574 = vrcp.pop %v1526
    %v1575 = vmul.f32 1.0, %v1574
    %v1576 = vrcp.pop %v1527
    %v1577 = vmul.f32 1.0, %v1576
    %v1578 = vrcp.pop %v1528
    %v1579 = vmul.f32 1.0, %v1578
    %v1580 = vrcp.pop %v1529
    %v1581 = vmul.f32 1.0, %v1580
    %v1582 = vrcp.pop %v1530
    %v1583 = vmul.f32 1.0, %v1582
    %v1584 = vrcp.pop %v1531
    %v1585 = vmul.f32 1.0, %v1584
    %v1586 = vrcp.pop %v1532
    %v1587 = vmul.f32 1.0, %v1586
    %v1588 = vrcp.pop %v1533
    %v1589 = vmul.f32 1.0, %v1588
    %v1590 = vld [vmem:[%s4] sm:$0xff]
    %v1591 = vld [vmem:[%s4 + $0x8] sm:$0xff]
    %v1592 = vld [vmem:[%s4 + $0x10] sm:$0xff]
    %v1593 = vld [vmem:[%s4 + $0x18] sm:$0xff]
    %v1594 = vld [vmem:[%s4 + $0x20] sm:$0xff]
    %v1595 = vld [vmem:[%s4 + $0x28] sm:$0xff]
    %v1596 = vld [vmem:[%s4 + $0x30] sm:$0xff]
    %vm1597 = vcmask 916480
    %v1599 = vsel %vm1597, %v1590, 0
    %v1602 = vsel %vm1597, %v1591, 0
    %v1605 = vsel %vm1597, %v1592, 0
    %v1608 = vsel %vm1597, %v1593, 0
    %v1611 = vsel %vm1597, %v1594, 0
    %v1614 = vsel %vm1597, %v1595, 0
    %v1617 = vsel %vm1597, %v1596, 0
    %1619 = vmatprep.subr.mxu0 %v1537
    %1620 = vmatpush1.msra.mxu0 %v1535
    %1621 = vmatprep.subr.mxu0 %v1541
    %1622 = vmatpush1.msra.mxu0 %v1539
    %1623 = vmatprep.subr.mxu0 %v1545
    %1624 = vmatpush1.msra.mxu0 %v1543
    %1625 = vmatprep.subr.mxu0 %v1549
    %1626 = vmatpush1.msra.mxu0 %v1547
    %1627 = vmatprep.subr.mxu0 %v1553
    %1628 = vmatpush1.msra.mxu0 %v1551
    %1629 = vmatprep.subr.mxu0 %v1557
    %1630 = vmatpush1.msra.mxu0 %v1555
    %1631 = vmatprep.subr.mxu0 %v1561
    %1632 = vmatpush1.msra.mxu0 %v1559
    %1633 = vmatprep.subr.mxu0 %v1565
    %1634 = vmatpush1.msra.mxu0 %v1563
    %1635 = vmatprep.subr.mxu0 %v1569
    %1636 = vmatpush1.msra.mxu0 %v1567
    %1637 = vmatprep.subr.mxu0 %v1573
    %1638 = vmatpush1.msra.mxu0 %v1571
    %1639 = vmatprep.subr.mxu0 %v1577
    %1640 = vmatpush1.msra.mxu0 %v1575
    %1641 = vmatprep.subr.mxu0 %v1581
    %1642 = vmatpush1.msra.mxu0 %v1579
    %1643 = vmatprep.subr.mxu0 %v1585
    %1644 = vmatpush1.msra.mxu0 %v1583
    %1645 = vmatprep.subr.mxu0 %v1589
    %1646 = vmatpush1.msra.mxu0 %v1587
    %1647 = vmatprep.subr.mxu0 0.0
    %1648 = vmatpush1.msra.mxu0 0.0
    %1649 = vmatprep.subr.mxu0 0.0
    %1650 = vmatpush1.msra.mxu0 0.0
    %1651 = vmatprep.subr.mxu0 0.0
    %1652 = vmatpush1.msra.mxu0 0.0
    %1653 = vmatprep.subr.mxu0 0.0
    %1654 = vmatpush1.msra.mxu0 0.0
    %1655 = vmatprep.subr.mxu0 0.0
    %1656 = vmatpush1.msra.mxu0 0.0
    %1657 = vmatprep.subr.mxu0 0.0
    %1658 = vmatpush1.msra.mxu0 0.0
    %1659 = vmatprep.subr.mxu0 0.0
    %1660 = vmatpush1.msra.mxu0 0.0
    %1661 = vmatprep.subr.mxu0 0.0
    %1662 = vmatpush1.msra.mxu0 0.0
    %1663 = vmatprep.subr.mxu0 0.0
    %1664 = vmatpush1.msra.mxu0 0.0
    %1665 = vmatprep.subr.mxu0 0.0
    %1666 = vmatpush1.msra.mxu0 0.0
    %1667 = vmatprep.subr.mxu0 0.0
    %1668 = vmatpush1.msra.mxu0 0.0
    %1669 = vmatprep.subr.mxu0 0.0
    %1670 = vmatpush1.msra.mxu0 0.0
    %1671 = vmatprep.subr.mxu0 0.0
    %1672 = vmatpush1.msra.mxu0 0.0
    %1673 = vmatprep.subr.mxu0 0.0
    %1674 = vmatpush1.msra.mxu0 0.0
    %1675 = vmatprep.subr.mxu0 0.0
    %1676 = vmatpush1.msra.mxu0 0.0
    %1677 = vmatprep.subr.mxu0 0.0
    %1678 = vmatpush1.msra.mxu0 0.0
    %1679 = vmatprep.subr.mxu0 0.0
    %1680 = vmatpush1.msra.mxu0 0.0
    %1681 = vmatprep.subr.mxu0 0.0
    %1682 = vmatpush1.msra.mxu0 0.0
    %1683 = vmatprep.mubr.f32.mxu0 0.0
    %1684 = vmatmul.mubr.f32.gmra.mrb[0].mxu0 %v1599
    %v1685 = vpop.f32.mrb[0].mxu0
    %v1686 = vadd.f32 0.0, %v1685
    %v1687 = vpop.f32.mrb[0].mxu0
    %v1688 = vadd.f32 0.0, %v1687
    %1689 = vmatprep.mubr.f32.mxu0 0.0
    %1690 = vmatmul.mubr.f32.gmra.mrb[0].mxu0 %v1602
    %v1691 = vpop.f32.mrb[0].mxu0
    %v1692 = vadd.f32 0.0, %v1691
    %v1693 = vpop.f32.mrb[0].mxu0
    %v1694 = vadd.f32 0.0, %v1693
    %1695 = vmatprep.mubr.f32.mxu0 0.0
    %1696 = vmatmul.mubr.f32.gmra.mrb[0].mxu0 %v1605
    %v1697 = vpop.f32.mrb[0].mxu0
    %v1698 = vadd.f32 0.0, %v1697
    %v1699 = vpop.f32.mrb[0].mxu0
    %v1700 = vadd.f32 0.0, %v1699
    %1701 = vmatprep.mubr.f32.mxu0 0.0
    %1702 = vmatmul.mubr.f32.gmra.mrb[0].mxu0 %v1608
    %v1703 = vpop.f32.mrb[0].mxu0
    %v1704 = vadd.f32 0.0, %v1703
    %v1705 = vpop.f32.mrb[0].mxu0
    %v1706 = vadd.f32 0.0, %v1705
    %1707 = vmatprep.mubr.f32.mxu0 0.0
    %1708 = vmatmul.mubr.f32.gmra.mrb[0].mxu0 %v1611
    %v1709 = vpop.f32.mrb[0].mxu0
    %v1710 = vadd.f32 0.0, %v1709
    %v1711 = vpop.f32.mrb[0].mxu0
    %v1712 = vadd.f32 0.0, %v1711
    %1713 = vmatprep.mubr.f32.mxu0 0.0
    %1714 = vmatmul.mubr.f32.gmra.mrb[0].mxu0 %v1614
    %v1715 = vpop.f32.mrb[0].mxu0
    %v1716 = vadd.f32 0.0, %v1715
    %v1717 = vpop.f32.mrb[0].mxu0
    %v1718 = vadd.f32 0.0, %v1717
    %1719 = vmatprep.mubr.f32.mxu0 0.0
    %1720 = vmatmul.mubr.f32.gmra.mrb[0].mxu0 %v1617
    %v1721 = vpop.f32.mrb[0].mxu0
    %v1722 = vadd.f32 0.0, %v1721
    %v1723 = vpop.f32.mrb[0].mxu0
    %v1724 = vadd.f32 0.0, %v1723
    %1725 = vdwg.mxu0
    %v1726 = vld [vmem:[%s5] sm:$0xff]
    %v1727 = vld [vmem:[%s5 + $0x8] sm:$0xff]
    %v1728 = vld [vmem:[%s5 + $0x10] sm:$0xff]
    %v1729 = vld [vmem:[%s5 + $0x18] sm:$0xff]
    %v1730 = vld [vmem:[%s5 + $0x20] sm:$0xff]
    %v1731 = vld [vmem:[%s5 + $0x28] sm:$0xff]
    %v1732 = vld [vmem:[%s5 + $0x30] sm:$0xff]
    %v1733 = vld [vmem:[%s5 + $0x38] sm:$0xff]
    %v1734 = vld [vmem:[%s5 + $0x40] sm:$0xff]
    %v1735 = vld [vmem:[%s5 + $0x48] sm:$0xff]
    %v1736 = vld [vmem:[%s5 + $0x50] sm:$0xff]
    %v1737 = vld [vmem:[%s5 + $0x58] sm:$0xff]
    %v1738 = vld [vmem:[%s5 + $0x60] sm:$0xff]
    %v1739 = vld [vmem:[%s5 + $0x68] sm:$0xff]
    %v1740 = vld [vmem:[%s5 + $0x70] sm:$0xff]
    %v1741 = vld [vmem:[%s5 + $0x78] sm:$0xff]
    %v1742 = vld [vmem:[%s5 + $0x80] sm:$0xff]
    %v1743 = vld [vmem:[%s5 + $0x88] sm:$0xff]
    %v1744 = vld [vmem:[%s5 + $0x90] sm:$0xff]
    %v1745 = vld [vmem:[%s5 + $0x98] sm:$0xff]
    %v1746 = vld [vmem:[%s5 + $0xa0] sm:$0xff]
    %v1747 = vld [vmem:[%s5 + $0xa8] sm:$0xff]
    %v1748 = vld [vmem:[%s5 + $0xb0] sm:$0xff]
    %v1749 = vld [vmem:[%s5 + $0xb8] sm:$0xff]
    %v1750 = vld [vmem:[%s5 + $0xc0] sm:$0xff]
    %v1751 = vld [vmem:[%s5 + $0xc8] sm:$0xff]
    %v1752 = vld [vmem:[%s5 + $0xd0] sm:$0xff]
    %v1753 = vld [vmem:[%s5 + $0xd8] sm:$0xff]
    %s1754 = scalar_lea.vmem %s4, 56
    %v1755 = vld [vmem:[%s1754] sm:$0xff]
    %v1756 = vld [vmem:[%s1754 + $0x8] sm:$0xff]
    %v1757 = vld [vmem:[%s1754 + $0x10] sm:$0xff]
    %v1758 = vld [vmem:[%s1754 + $0x18] sm:$0xff]
    %v1759 = vld [vmem:[%s1754 + $0x20] sm:$0xff]
    %v1760 = vld [vmem:[%s1754 + $0x28] sm:$0xff]
    %v1761 = vld [vmem:[%s1754 + $0x30] sm:$0xff]
    %v1763 = vsel %vm1597, %v1755, 0
    %v1766 = vsel %vm1597, %v1756, 0
    %v1769 = vsel %vm1597, %v1757, 0
    %v1772 = vsel %vm1597, %v1758, 0
    %v1775 = vsel %vm1597, %v1759, 0
    %v1778 = vsel %vm1597, %v1760, 0
    %v1781 = vsel %vm1597, %v1761, 0
    %1783 = vmatprep.subr.mxu0 %v1537
    %1784 = vmatpush1.msra.mxu0 %v1535
    %1785 = vmatprep.subr.mxu0 %v1541
    %1786 = vmatpush1.msra.mxu0 %v1539
    %1787 = vmatprep.subr.mxu0 %v1545
    %1788 = vmatpush1.msra.mxu0 %v1543
    %1789 = vmatprep.subr.mxu0 %v1549
    %1790 = vmatpush1.msra.mxu0 %v1547
    %1791 = vmatprep.subr.mxu0 %v1553
    %1792 = vmatpush1.msra.mxu0 %v1551
    %1793 = vmatprep.subr.mxu0 %v1557
    %1794 = vmatpush1.msra.mxu0 %v1555
    %1795 = vmatprep.subr.mxu0 %v1561
    %1796 = vmatpush1.msra.mxu0 %v1559
    %1797 = vmatprep.subr.mxu0 %v1565
    %1798 = vmatpush1.msra.mxu0 %v1563
    %1799 = vmatprep.subr.mxu0 %v1569
    %1800 = vmatpush1.msra.mxu0 %v1567
    %1801 = vmatprep.subr.mxu0 %v1573
    %1802 = vmatpush1.msra.mxu0 %v1571
    %1803 = vmatprep.subr.mxu0 %v1577
    %1804 = vmatpush1.msra.mxu0 %v1575
    %1805 = vmatprep.subr.mxu0 %v1581
    %1806 = vmatpush1.msra.mxu0 %v1579
    %1807 = vmatprep.subr.mxu0 %v1585
    %1808 = vmatpush1.msra.mxu0 %v1583
    %1809 = vmatprep.subr.mxu0 %v1589
    %1810 = vmatpush1.msra.mxu0 %v1587
    %1811 = vmatprep.subr.mxu0 0.0
    %1812 = vmatpush1.msra.mxu0 0.0
    %1813 = vmatprep.subr.mxu0 0.0
    %1814 = vmatpush1.msra.mxu0 0.0
    %1815 = vmatprep.subr.mxu0 0.0
    %1816 = vmatpush1.msra.mxu0 0.0
    %1817 = vmatprep.subr.mxu0 0.0
    %1818 = vmatpush1.msra.mxu0 0.0
    %1819 = vmatprep.subr.mxu0 0.0
    %1820 = vmatpush1.msra.mxu0 0.0
    %1821 = vmatprep.subr.mxu0 0.0
    %1822 = vmatpush1.msra.mxu0 0.0
    %1823 = vmatprep.subr.mxu0 0.0
    %1824 = vmatpush1.msra.mxu0 0.0
    %1825 = vmatprep.subr.mxu0 0.0
    %1826 = vmatpush1.msra.mxu0 0.0
    %1827 = vmatprep.subr.mxu0 0.0
    %1828 = vmatpush1.msra.mxu0 0.0
    %1829 = vmatprep.subr.mxu0 0.0
    %1830 = vmatpush1.msra.mxu0 0.0
    %1831 = vmatprep.subr.mxu0 0.0
    %1832 = vmatpush1.msra.mxu0 0.0
    %1833 = vmatprep.subr.mxu0 0.0
    %1834 = vmatpush1.msra.mxu0 0.0
    %1835 = vmatprep.subr.mxu0 0.0
    %1836 = vmatpush1.msra.mxu0 0.0
    %1837 = vmatprep.subr.mxu0 0.0
    %1838 = vmatpush1.msra.mxu0 0.0
    %1839 = vmatprep.subr.mxu0 0.0
    %1840 = vmatpush1.msra.mxu0 0.0
    %1841 = vmatprep.subr.mxu0 0.0
    %1842 = vmatpush1.msra.mxu0 0.0
    %1843 = vmatprep.subr.mxu0 0.0
    %1844 = vmatpush1.msra.mxu0 0.0
    %1845 = vmatprep.subr.mxu0 0.0
    %1846 = vmatpush1.msra.mxu0 0.0
    %1847 = vmatprep.mubr.f32.mxu0 0.0
    %1848 = vmatmul.mubr.f32.gmra.mrb[0].mxu0 %v1763
    %v1849 = vpop.f32.mrb[0].mxu0
    %v1850 = vadd.f32 0.0, %v1849
    %v1851 = vpop.f32.mrb[0].mxu0
    %v1852 = vadd.f32 0.0, %v1851
    %1853 = vmatprep.mubr.f32.mxu0 0.0
    %1854 = vmatmul.mubr.f32.gmra.mrb[0].mxu0 %v1766
    %v1855 = vpop.f32.mrb[0].mxu0
    %v1856 = vadd.f32 0.0, %v1855
    %v1857 = vpop.f32.mrb[0].mxu0
    %v1858 = vadd.f32 0.0, %v1857
    %1859 = vmatprep.mubr.f32.mxu0 0.0
    %1860 = vmatmul.mubr.f32.gmra.mrb[0].mxu0 %v1769
    %v1861 = vpop.f32.mrb[0].mxu0
    %v1862 = vadd.f32 0.0, %v1861
    %v1863 = vpop.f32.mrb[0].mxu0
    %v1864 = vadd.f32 0.0, %v1863
    %1865 = vmatprep.mubr.f32.mxu0 0.0
    %1866 = vmatmul.mubr.f32.gmra.mrb[0].mxu0 %v1772
    %v1867 = vpop.f32.mrb[0].mxu0
    %v1868 = vadd.f32 0.0, %v1867
    %v1869 = vpop.f32.mrb[0].mxu0
    %v1870 = vadd.f32 0.0, %v1869
    %1871 = vmatprep.mubr.f32.mxu0 0.0
    %1872 = vmatmul.mubr.f32.gmra.mrb[0].mxu0 %v1775
    %v1873 = vpop.f32.mrb[0].mxu0
    %v1874 = vadd.f32 0.0, %v1873
    %v1875 = vpop.f32.mrb[0].mxu0
    %v1876 = vadd.f32 0.0, %v1875
    %1877 = vmatprep.mubr.f32.mxu0 0.0
    %1878 = vmatmul.mubr.f32.gmra.mrb[0].mxu0 %v1778
    %v1879 = vpop.f32.mrb[0].mxu0
    %v1880 = vadd.f32 0.0, %v1879
    %v1881 = vpop.f32.mrb[0].mxu0
    %v1882 = vadd.f32 0.0, %v1881
    %1883 = vmatprep.mubr.f32.mxu0 0.0
    %1884 = vmatmul.mubr.f32.gmra.mrb[0].mxu0 %v1781
    %v1885 = vpop.f32.mrb[0].mxu0
    %v1886 = vadd.f32 0.0, %v1885
    %v1887 = vpop.f32.mrb[0].mxu0
    %v1888 = vadd.f32 0.0, %v1887
    %1889 = vdwg.mxu0
    %s1890 = scalar_lea.vmem %s5, 224
    %v1891 = vld [vmem:[%s1890] sm:$0xff]
    %v1892 = vld [vmem:[%s1890 + $0x8] sm:$0xff]
    %v1893 = vld [vmem:[%s1890 + $0x10] sm:$0xff]
    %v1894 = vld [vmem:[%s1890 + $0x18] sm:$0xff]
    %v1895 = vld [vmem:[%s1890 + $0x20] sm:$0xff]
    %v1896 = vld [vmem:[%s1890 + $0x28] sm:$0xff]
    %v1897 = vld [vmem:[%s1890 + $0x30] sm:$0xff]
    %v1898 = vld [vmem:[%s1890 + $0x38] sm:$0xff]
    %v1899 = vld [vmem:[%s1890 + $0x40] sm:$0xff]
    %v1900 = vld [vmem:[%s1890 + $0x48] sm:$0xff]
    %v1901 = vld [vmem:[%s1890 + $0x50] sm:$0xff]
    %v1902 = vld [vmem:[%s1890 + $0x58] sm:$0xff]
    %v1903 = vld [vmem:[%s1890 + $0x60] sm:$0xff]
    %v1904 = vld [vmem:[%s1890 + $0x68] sm:$0xff]
    %v1905 = vld [vmem:[%s1890 + $0x70] sm:$0xff]
    %v1906 = vld [vmem:[%s1890 + $0x78] sm:$0xff]
    %v1907 = vld [vmem:[%s1890 + $0x80] sm:$0xff]
    %v1908 = vld [vmem:[%s1890 + $0x88] sm:$0xff]
    %v1909 = vld [vmem:[%s1890 + $0x90] sm:$0xff]
    %v1910 = vld [vmem:[%s1890 + $0x98] sm:$0xff]
    %v1911 = vld [vmem:[%s1890 + $0xa0] sm:$0xff]
    %v1912 = vld [vmem:[%s1890 + $0xa8] sm:$0xff]
    %v1913 = vld [vmem:[%s1890 + $0xb0] sm:$0xff]
    %v1914 = vld [vmem:[%s1890 + $0xb8] sm:$0xff]
    %v1915 = vld [vmem:[%s1890 + $0xc0] sm:$0xff]
    %v1916 = vld [vmem:[%s1890 + $0xc8] sm:$0xff]
    %v1917 = vld [vmem:[%s1890 + $0xd0] sm:$0xff]
    %v1918 = vld [vmem:[%s1890 + $0xd8] sm:$0xff]
    %v1920 = vsel %vm145, %v1852, 0
    %v1923 = vsel %vm145, %v1858, 0
    %v1926 = vsel %vm145, %v1864, 0
    %v1929 = vsel %vm145, %v1870, 0
    %v1932 = vsel %vm145, %v1876, 0
    %v1935 = vsel %vm145, %v1882, 0
    %v1938 = vsel %vm145, %v1888, 0
    %1940 = vmatprep.subr.mxu0 0.0
    %1941 = vmatpush1.msra.mxu0 %v1891
    %1942 = vmatprep.subr.mxu0 0.0
    %1943 = vmatpush1.msra.mxu0 %v1892
    %1944 = vmatprep.subr.mxu0 0.0
    %1945 = vmatpush1.msra.mxu0 %v1893
    %1946 = vmatprep.subr.mxu0 0.0
    %1947 = vmatpush1.msra.mxu0 %v1894
    %1948 = vmatprep.subr.mxu0 0.0
    %1949 = vmatpush1.msra.mxu0 %v1895
    %1950 = vmatprep.subr.mxu0 0.0
    %1951 = vmatpush1.msra.mxu0 %v1896
    %1952 = vmatprep.subr.mxu0 0.0
    %1953 = vmatpush1.msra.mxu0 %v1897
    %1954 = vmatprep.subr.mxu0 0.0
    %1955 = vmatpush1.msra.mxu0 %v1898
    %1956 = vmatprep.subr.mxu0 0.0
    %1957 = vmatpush1.msra.mxu0 %v1899
    %1958 = vmatprep.subr.mxu0 0.0
    %1959 = vmatpush1.msra.mxu0 %v1900
    %1960 = vmatprep.subr.mxu0 0.0
    %1961 = vmatpush1.msra.mxu0 %v1901
    %1962 = vmatprep.subr.mxu0 0.0
    %1963 = vmatpush1.msra.mxu0 %v1902
    %1964 = vmatprep.subr.mxu0 0.0
    %1965 = vmatpush1.msra.mxu0 %v1903
    %1966 = vmatprep.subr.mxu0 0.0
    %1967 = vmatpush1.msra.mxu0 %v1904
    %1968 = vmatprep.subr.mxu0 0.0
    %1969 = vmatpush1.msra.mxu0 %v1905
    %1970 = vmatprep.subr.mxu0 0.0
    %1971 = vmatpush1.msra.mxu0 %v1906
    %1972 = vmatprep.subr.mxu0 0.0
    %1973 = vmatpush1.msra.mxu0 %v1907
    %1974 = vmatprep.subr.mxu0 0.0
    %1975 = vmatpush1.msra.mxu0 %v1908
    %1976 = vmatprep.subr.mxu0 0.0
    %1977 = vmatpush1.msra.mxu0 %v1909
    %1978 = vmatprep.subr.mxu0 0.0
    %1979 = vmatpush1.msra.mxu0 %v1910
    %1980 = vmatprep.subr.mxu0 0.0
    %1981 = vmatpush1.msra.mxu0 %v1911
    %1982 = vmatprep.subr.mxu0 0.0
    %1983 = vmatpush1.msra.mxu0 %v1912
    %1984 = vmatprep.subr.mxu0 0.0
    %1985 = vmatpush1.msra.mxu0 %v1913
    %1986 = vmatprep.subr.mxu0 0.0
    %1987 = vmatpush1.msra.mxu0 %v1914
    %1988 = vmatprep.subr.mxu0 0.0
    %1989 = vmatpush1.msra.mxu0 %v1915
    %1990 = vmatprep.subr.mxu0 0.0
    %1991 = vmatpush1.msra.mxu0 %v1916
    %1992 = vmatprep.subr.mxu0 0.0
    %1993 = vmatpush1.msra.mxu0 %v1917
    %1994 = vmatprep.subr.mxu0 0.0
    %1995 = vmatpush1.msra.mxu0 %v1918
    %1996 = vmatprep.subr.mxu0 0.0
    %1997 = vmatpush1.msra.mxu0 0.0
    %1998 = vmatprep.subr.mxu0 0.0
    %1999 = vmatpush1.msra.mxu0 0.0
    %2000 = vmatprep.subr.mxu0 0.0
    %2001 = vmatpush1.msra.mxu0 0.0
    %2002 = vmatprep.subr.mxu0 0.0
    %2003 = vmatpush1.msra.mxu0 0.0
    %2004 = vmatprep.mubr.f32.mxu0 %v1920
    %2005 = vmatmul.mubr.f32.gmra.mrb[0].mxu0 %v1850
    %v2006 = vpop.f32.mrb[0].mxu0
    %v2007 = vadd.f32 0.0, %v2006
    %v2008 = vpop.f32.mrb[0].mxu0
    %2009 = vmatprep.mubr.f32.mxu0 %v1923
    %2010 = vmatmul.mubr.f32.gmra.mrb[0].mxu0 %v1856
    %v2011 = vpop.f32.mrb[0].mxu0
    %v2012 = vadd.f32 0.0, %v2011
    %v2013 = vpop.f32.mrb[0].mxu0
    %2014 = vmatprep.mubr.f32.mxu0 %v1926
    %2015 = vmatmul.mubr.f32.gmra.mrb[0].mxu0 %v1862
    %v2016 = vpop.f32.mrb[0].mxu0
    %v2017 = vadd.f32 0.0, %v2016
    %v2018 = vpop.f32.mrb[0].mxu0
    %2019 = vmatprep.mubr.f32.mxu0 %v1929
    %2020 = vmatmul.mubr.f32.gmra.mrb[0].mxu0 %v1868
    %v2021 = vpop.f32.mrb[0].mxu0
    %v2022 = vadd.f32 0.0, %v2021
    %v2023 = vpop.f32.mrb[0].mxu0
    %2024 = vmatprep.mubr.f32.mxu0 %v1932
    %2025 = vmatmul.mubr.f32.gmra.mrb[0].mxu0 %v1874
    %v2026 = vpop.f32.mrb[0].mxu0
    %v2027 = vadd.f32 0.0, %v2026
    %v2028 = vpop.f32.mrb[0].mxu0
    %2029 = vmatprep.mubr.f32.mxu0 %v1935
    %2030 = vmatmul.mubr.f32.gmra.mrb[0].mxu0 %v1880
    %v2031 = vpop.f32.mrb[0].mxu0
    %v2032 = vadd.f32 0.0, %v2031
    %v2033 = vpop.f32.mrb[0].mxu0
    %2034 = vmatprep.mubr.f32.mxu0 %v1938
    %2035 = vmatmul.mubr.f32.gmra.mrb[0].mxu0 %v1886
    %v2036 = vpop.f32.mrb[0].mxu0
    %v2037 = vadd.f32 0.0, %v2036
    %v2038 = vpop.f32.mrb[0].mxu0
    %2039 = vdwg.mxu0
    %v2041 = vsel %vm145, %v1688, 0
    %v2044 = vsel %vm145, %v1694, 0
    %v2047 = vsel %vm145, %v1700, 0
    %v2050 = vsel %vm145, %v1706, 0
    %v2053 = vsel %vm145, %v1712, 0
    %v2056 = vsel %vm145, %v1718, 0
    %v2059 = vsel %vm145, %v1724, 0
    %2061 = vmatprep.subr.mxu0 0.0
    %2062 = vmatpush1.msra.mxu0 %v1726
    %2063 = vmatprep.subr.mxu0 0.0
    %2064 = vmatpush1.msra.mxu0 %v1727
    %2065 = vmatprep.subr.mxu0 0.0
    %2066 = vmatpush1.msra.mxu0 %v1728
    %2067 = vmatprep.subr.mxu0 0.0
    %2068 = vmatpush1.msra.mxu0 %v1729
    %2069 = vmatprep.subr.mxu0 0.0
    %2070 = vmatpush1.msra.mxu0 %v1730
    %2071 = vmatprep.subr.mxu0 0.0
    %2072 = vmatpush1.msra.mxu0 %v1731
    %2073 = vmatprep.subr.mxu0 0.0
    %2074 = vmatpush1.msra.mxu0 %v1732
    %2075 = vmatprep.subr.mxu0 0.0
    %2076 = vmatpush1.msra.mxu0 %v1733
    %2077 = vmatprep.subr.mxu0 0.0
    %2078 = vmatpush1.msra.mxu0 %v1734
    %2079 = vmatprep.subr.mxu0 0.0
    %2080 = vmatpush1.msra.mxu0 %v1735
    %2081 = vmatprep.subr.mxu0 0.0
    %2082 = vmatpush1.msra.mxu0 %v1736
    %2083 = vmatprep.subr.mxu0 0.0
    %2084 = vmatpush1.msra.mxu0 %v1737
    %2085 = vmatprep.subr.mxu0 0.0
    %2086 = vmatpush1.msra.mxu0 %v1738
    %2087 = vmatprep.subr.mxu0 0.0
    %2088 = vmatpush1.msra.mxu0 %v1739
    %2089 = vmatprep.subr.mxu0 0.0
    %2090 = vmatpush1.msra.mxu0 %v1740
    %2091 = vmatprep.subr.mxu0 0.0
    %2092 = vmatpush1.msra.mxu0 %v1741
    %2093 = vmatprep.subr.mxu0 0.0
    %2094 = vmatpush1.msra.mxu0 %v1742
    %2095 = vmatprep.subr.mxu0 0.0
    %2096 = vmatpush1.msra.mxu0 %v1743
    %2097 = vmatprep.subr.mxu0 0.0
    %2098 = vmatpush1.msra.mxu0 %v1744
    %2099 = vmatprep.subr.mxu0 0.0
    %2100 = vmatpush1.msra.mxu0 %v1745
    %2101 = vmatprep.subr.mxu0 0.0
    %2102 = vmatpush1.msra.mxu0 %v1746
    %2103 = vmatprep.subr.mxu0 0.0
    %2104 = vmatpush1.msra.mxu0 %v1747
    %2105 = vmatprep.subr.mxu0 0.0
    %2106 = vmatpush1.msra.mxu0 %v1748
    %2107 = vmatprep.subr.mxu0 0.0
    %2108 = vmatpush1.msra.mxu0 %v1749
    %2109 = vmatprep.subr.mxu0 0.0
    %2110 = vmatpush1.msra.mxu0 %v1750
    %2111 = vmatprep.subr.mxu0 0.0
    %2112 = vmatpush1.msra.mxu0 %v1751
    %2113 = vmatprep.subr.mxu0 0.0
    %2114 = vmatpush1.msra.mxu0 %v1752
    %2115 = vmatprep.subr.mxu0 0.0
    %2116 = vmatpush1.msra.mxu0 %v1753
    %2117 = vmatprep.subr.mxu0 0.0
    %2118 = vmatpush1.msra.mxu0 0.0
    %2119 = vmatprep.subr.mxu0 0.0
    %2120 = vmatpush1.msra.mxu0 0.0
    %2121 = vmatprep.subr.mxu0 0.0
    %2122 = vmatpush1.msra.mxu0 0.0
    %2123 = vmatprep.subr.mxu0 0.0
    %2124 = vmatpush1.msra.mxu0 0.0
    %2125 = vmatprep.mubr.f32.mxu0 %v2041
    %2126 = vmatmul.mubr.f32.gmra.mrb[0].mxu0 %v1686
    %v2127 = vpop.f32.mrb[0].mxu0
    %v2128 = vadd.f32 %v2007, %v2127
    %v2129 = vpop.f32.mrb[0].mxu0
    %2130 = vmatprep.mubr.f32.mxu0 %v2044
    %2131 = vmatmul.mubr.f32.gmra.mrb[0].mxu0 %v1692
    %v2132 = vpop.f32.mrb[0].mxu0
    %v2133 = vadd.f32 %v2012, %v2132
    %v2134 = vpop.f32.mrb[0].mxu0
    %2135 = vmatprep.mubr.f32.mxu0 %v2047
    %2136 = vmatmul.mubr.f32.gmra.mrb[0].mxu0 %v1698
    %v2137 = vpop.f32.mrb[0].mxu0
    %v2138 = vadd.f32 %v2017, %v2137
    %v2139 = vpop.f32.mrb[0].mxu0
    %2140 = vmatprep.mubr.f32.mxu0 %v2050
    %2141 = vmatmul.mubr.f32.gmra.mrb[0].mxu0 %v1704
    %v2142 = vpop.f32.mrb[0].mxu0
    %v2143 = vadd.f32 %v2022, %v2142
    %v2144 = vpop.f32.mrb[0].mxu0
    %2145 = vmatprep.mubr.f32.mxu0 %v2053
    %2146 = vmatmul.mubr.f32.gmra.mrb[0].mxu0 %v1710
    %v2147 = vpop.f32.mrb[0].mxu0
    %v2148 = vadd.f32 %v2027, %v2147
    %v2149 = vpop.f32.mrb[0].mxu0
    %2150 = vmatprep.mubr.f32.mxu0 %v2056
    %2151 = vmatmul.mubr.f32.gmra.mrb[0].mxu0 %v1716
    %v2152 = vpop.f32.mrb[0].mxu0
    %v2153 = vadd.f32 %v2032, %v2152
    %v2154 = vpop.f32.mrb[0].mxu0
    %2155 = vmatprep.mubr.f32.mxu0 %v2059
    %2156 = vmatmul.mubr.f32.gmra.mrb[0].mxu0 %v1722
    %v2157 = vpop.f32.mrb[0].mxu0
    %v2158 = vadd.f32 %v2037, %v2157
    %v2159 = vpop.f32.mrb[0].mxu0
    %2160 = vdwg.mxu0
    %s2161 = scalar_lea.vmem %s4, 112
    %v2162 = vld [vmem:[%s2161] sm:$0xff]
    %v2163 = vld [vmem:[%s2161 + $0x8] sm:$0xff]
    %v2164 = vld [vmem:[%s2161 + $0x10] sm:$0xff]
    %v2165 = vld [vmem:[%s2161 + $0x18] sm:$0xff]
    %v2166 = vld [vmem:[%s2161 + $0x20] sm:$0xff]
    %v2167 = vld [vmem:[%s2161 + $0x28] sm:$0xff]
    %v2168 = vld [vmem:[%s2161 + $0x30] sm:$0xff]
    %v2170 = vsel %vm1597, %v2162, 0
    %v2173 = vsel %vm1597, %v2163, 0
    %v2176 = vsel %vm1597, %v2164, 0
    %v2179 = vsel %vm1597, %v2165, 0
    %v2182 = vsel %vm1597, %v2166, 0
    %v2185 = vsel %vm1597, %v2167, 0
    %v2188 = vsel %vm1597, %v2168, 0
    %2190 = vmatprep.subr.mxu0 %v1537
    %2191 = vmatpush1.msra.mxu0 %v1535
    %2192 = vmatprep.subr.mxu0 %v1541
    %2193 = vmatpush1.msra.mxu0 %v1539
    %2194 = vmatprep.subr.mxu0 %v1545
    %2195 = vmatpush1.msra.mxu0 %v1543
    %2196 = vmatprep.subr.mxu0 %v1549
    %2197 = vmatpush1.msra.mxu0 %v1547
    %2198 = vmatprep.subr.mxu0 %v1553
    %2199 = vmatpush1.msra.mxu0 %v1551
    %2200 = vmatprep.subr.mxu0 %v1557
    %2201 = vmatpush1.msra.mxu0 %v1555
    %2202 = vmatprep.subr.mxu0 %v1561
    %2203 = vmatpush1.msra.mxu0 %v1559
    %2204 = vmatprep.subr.mxu0 %v1565
    %2205 = vmatpush1.msra.mxu0 %v1563
    %2206 = vmatprep.subr.mxu0 %v1569
    %2207 = vmatpush1.msra.mxu0 %v1567
    %2208 = vmatprep.subr.mxu0 %v1573
    %2209 = vmatpush1.msra.mxu0 %v1571
    %2210 = vmatprep.subr.mxu0 %v1577
    %2211 = vmatpush1.msra.mxu0 %v1575
    %2212 = vmatprep.subr.mxu0 %v1581
    %2213 = vmatpush1.msra.mxu0 %v1579
    %2214 = vmatprep.subr.mxu0 %v1585
    %2215 = vmatpush1.msra.mxu0 %v1583
    %2216 = vmatprep.subr.mxu0 %v1589
    %2217 = vmatpush1.msra.mxu0 %v1587
    %2218 = vmatprep.subr.mxu0 0.0
    %2219 = vmatpush1.msra.mxu0 0.0
    %2220 = vmatprep.subr.mxu0 0.0
    %2221 = vmatpush1.msra.mxu0 0.0
    %2222 = vmatprep.subr.mxu0 0.0
    %2223 = vmatpush1.msra.mxu0 0.0
    %2224 = vmatprep.subr.mxu0 0.0
    %2225 = vmatpush1.msra.mxu0 0.0
    %2226 = vmatprep.subr.mxu0 0.0
    %2227 = vmatpush1.msra.mxu0 0.0
    %2228 = vmatprep.subr.mxu0 0.0
    %2229 = vmatpush1.msra.mxu0 0.0
    %2230 = vmatprep.subr.mxu0 0.0
    %2231 = vmatpush1.msra.mxu0 0.0
    %2232 = vmatprep.subr.mxu0 0.0
    %2233 = vmatpush1.msra.mxu0 0.0
    %2234 = vmatprep.subr.mxu0 0.0
    %2235 = vmatpush1.msra.mxu0 0.0
    %2236 = vmatprep.subr.mxu0 0.0
    %2237 = vmatpush1.msra.mxu0 0.0
    %2238 = vmatprep.subr.mxu0 0.0
    %2239 = vmatpush1.msra.mxu0 0.0
    %2240 = vmatprep.subr.mxu0 0.0
    %2241 = vmatpush1.msra.mxu0 0.0
    %2242 = vmatprep.subr.mxu0 0.0
    %2243 = vmatpush1.msra.mxu0 0.0
    %2244 = vmatprep.subr.mxu0 0.0
    %2245 = vmatpush1.msra.mxu0 0.0
    %2246 = vmatprep.subr.mxu0 0.0
    %2247 = vmatpush1.msra.mxu0 0.0
    %2248 = vmatprep.subr.mxu0 0.0
    %2249 = vmatpush1.msra.mxu0 0.0
    %2250 = vmatprep.subr.mxu0 0.0
    %2251 = vmatpush1.msra.mxu0 0.0
    %2252 = vmatprep.subr.mxu0 0.0
    %2253 = vmatpush1.msra.mxu0 0.0
    %2254 = vmatprep.mubr.f32.mxu0 0.0
    %2255 = vmatmul.mubr.f32.gmra.mrb[0].mxu0 %v2170
    %v2256 = vpop.f32.mrb[0].mxu0
    %v2257 = vadd.f32 0.0, %v2256
    %v2258 = vpop.f32.mrb[0].mxu0
    %v2259 = vadd.f32 0.0, %v2258
    %2260 = vmatprep.mubr.f32.mxu0 0.0
    %2261 = vmatmul.mubr.f32.gmra.mrb[0].mxu0 %v2173
    %v2262 = vpop.f32.mrb[0].mxu0
    %v2263 = vadd.f32 0.0, %v2262
    %v2264 = vpop.f32.mrb[0].mxu0
    %v2265 = vadd.f32 0.0, %v2264
    %2266 = vmatprep.mubr.f32.mxu0 0.0
    %2267 = vmatmul.mubr.f32.gmra.mrb[0].mxu0 %v2176
    %v2268 = vpop.f32.mrb[0].mxu0
    %v2269 = vadd.f32 0.0, %v2268
    %v2270 = vpop.f32.mrb[0].mxu0
    %v2271 = vadd.f32 0.0, %v2270
    %2272 = vmatprep.mubr.f32.mxu0 0.0
    %2273 = vmatmul.mubr.f32.gmra.mrb[0].mxu0 %v2179
    %v2274 = vpop.f32.mrb[0].mxu0
    %v2275 = vadd.f32 0.0, %v2274
    %v2276 = vpop.f32.mrb[0].mxu0
    %v2277 = vadd.f32 0.0, %v2276
    %2278 = vmatprep.mubr.f32.mxu0 0.0
    %2279 = vmatmul.mubr.f32.gmra.mrb[0].mxu0 %v2182
    %v2280 = vpop.f32.mrb[0].mxu0
    %v2281 = vadd.f32 0.0, %v2280
    %v2282 = vpop.f32.mrb[0].mxu0
    %v2283 = vadd.f32 0.0, %v2282
    %2284 = vmatprep.mubr.f32.mxu0 0.0
    %2285 = vmatmul.mubr.f32.gmra.mrb[0].mxu0 %v2185
    %v2286 = vpop.f32.mrb[0].mxu0
    %v2287 = vadd.f32 0.0, %v2286
    %v2288 = vpop.f32.mrb[0].mxu0
    %v2289 = vadd.f32 0.0, %v2288
    %2290 = vmatprep.mubr.f32.mxu0 0.0
    %2291 = vmatmul.mubr.f32.gmra.mrb[0].mxu0 %v2188
    %v2292 = vpop.f32.mrb[0].mxu0
    %v2293 = vadd.f32 0.0, %v2292
    %v2294 = vpop.f32.mrb[0].mxu0
    %v2295 = vadd.f32 0.0, %v2294
    %2296 = vdwg.mxu0
    %s2297 = scalar_lea.vmem %s5, 448
    %v2298 = vld [vmem:[%s2297] sm:$0xff]
    %v2299 = vld [vmem:[%s2297 + $0x8] sm:$0xff]
    %v2300 = vld [vmem:[%s2297 + $0x10] sm:$0xff]
    %v2301 = vld [vmem:[%s2297 + $0x18] sm:$0xff]
    %v2302 = vld [vmem:[%s2297 + $0x20] sm:$0xff]
    %v2303 = vld [vmem:[%s2297 + $0x28] sm:$0xff]
    %v2304 = vld [vmem:[%s2297 + $0x30] sm:$0xff]
    %v2305 = vld [vmem:[%s2297 + $0x38] sm:$0xff]
    %v2306 = vld [vmem:[%s2297 + $0x40] sm:$0xff]
    %v2307 = vld [vmem:[%s2297 + $0x48] sm:$0xff]
    %v2308 = vld [vmem:[%s2297 + $0x50] sm:$0xff]
    %v2309 = vld [vmem:[%s2297 + $0x58] sm:$0xff]
    %v2310 = vld [vmem:[%s2297 + $0x60] sm:$0xff]
    %v2311 = vld [vmem:[%s2297 + $0x68] sm:$0xff]
    %v2312 = vld [vmem:[%s2297 + $0x70] sm:$0xff]
    %v2313 = vld [vmem:[%s2297 + $0x78] sm:$0xff]
    %v2314 = vld [vmem:[%s2297 + $0x80] sm:$0xff]
    %v2315 = vld [vmem:[%s2297 + $0x88] sm:$0xff]
    %v2316 = vld [vmem:[%s2297 + $0x90] sm:$0xff]
    %v2317 = vld [vmem:[%s2297 + $0x98] sm:$0xff]
    %v2318 = vld [vmem:[%s2297 + $0xa0] sm:$0xff]
    %v2319 = vld [vmem:[%s2297 + $0xa8] sm:$0xff]
    %v2320 = vld [vmem:[%s2297 + $0xb0] sm:$0xff]
    %v2321 = vld [vmem:[%s2297 + $0xb8] sm:$0xff]
    %v2322 = vld [vmem:[%s2297 + $0xc0] sm:$0xff]
    %v2323 = vld [vmem:[%s2297 + $0xc8] sm:$0xff]
    %v2324 = vld [vmem:[%s2297 + $0xd0] sm:$0xff]
    %v2325 = vld [vmem:[%s2297 + $0xd8] sm:$0xff]
    %v2327 = vsel %vm145, %v2259, 0
    %v2330 = vsel %vm145, %v2265, 0
    %v2333 = vsel %vm145, %v2271, 0
    %v2336 = vsel %vm145, %v2277, 0
    %v2339 = vsel %vm145, %v2283, 0
    %v2342 = vsel %vm145, %v2289, 0
    %v2345 = vsel %vm145, %v2295, 0
    %2347 = vmatprep.subr.mxu0 0.0
    %2348 = vmatpush1.msra.mxu0 %v2298
    %2349 = vmatprep.subr.mxu0 0.0
    %2350 = vmatpush1.msra.mxu0 %v2299
    %2351 = vmatprep.subr.mxu0 0.0
    %2352 = vmatpush1.msra.mxu0 %v2300
    %2353 = vmatprep.subr.mxu0 0.0
    %2354 = vmatpush1.msra.mxu0 %v2301
    %2355 = vmatprep.subr.mxu0 0.0
    %2356 = vmatpush1.msra.mxu0 %v2302
    %2357 = vmatprep.subr.mxu0 0.0
    %2358 = vmatpush1.msra.mxu0 %v2303
    %2359 = vmatprep.subr.mxu0 0.0
    %2360 = vmatpush1.msra.mxu0 %v2304
    %2361 = vmatprep.subr.mxu0 0.0
    %2362 = vmatpush1.msra.mxu0 %v2305
    %2363 = vmatprep.subr.mxu0 0.0
    %2364 = vmatpush1.msra.mxu0 %v2306
    %2365 = vmatprep.subr.mxu0 0.0
    %2366 = vmatpush1.msra.mxu0 %v2307
    %2367 = vmatprep.subr.mxu0 0.0
    %2368 = vmatpush1.msra.mxu0 %v2308
    %2369 = vmatprep.subr.mxu0 0.0
    %2370 = vmatpush1.msra.mxu0 %v2309
    %2371 = vmatprep.subr.mxu0 0.0
    %2372 = vmatpush1.msra.mxu0 %v2310
    %2373 = vmatprep.subr.mxu0 0.0
    %2374 = vmatpush1.msra.mxu0 %v2311
    %2375 = vmatprep.subr.mxu0 0.0
    %2376 = vmatpush1.msra.mxu0 %v2312
    %2377 = vmatprep.subr.mxu0 0.0
    %2378 = vmatpush1.msra.mxu0 %v2313
    %2379 = vmatprep.subr.mxu0 0.0
    %2380 = vmatpush1.msra.mxu0 %v2314
    %2381 = vmatprep.subr.mxu0 0.0
    %2382 = vmatpush1.msra.mxu0 %v2315
    %2383 = vmatprep.subr.mxu0 0.0
    %2384 = vmatpush1.msra.mxu0 %v2316
    %2385 = vmatprep.subr.mxu0 0.0
    %2386 = vmatpush1.msra.mxu0 %v2317
    %2387 = vmatprep.subr.mxu0 0.0
    %2388 = vmatpush1.msra.mxu0 %v2318
    %2389 = vmatprep.subr.mxu0 0.0
    %2390 = vmatpush1.msra.mxu0 %v2319
    %2391 = vmatprep.subr.mxu0 0.0
    %2392 = vmatpush1.msra.mxu0 %v2320
    %2393 = vmatprep.subr.mxu0 0.0
    %2394 = vmatpush1.msra.mxu0 %v2321
    %2395 = vmatprep.subr.mxu0 0.0
    %2396 = vmatpush1.msra.mxu0 %v2322
    %2397 = vmatprep.subr.mxu0 0.0
    %2398 = vmatpush1.msra.mxu0 %v2323
    %2399 = vmatprep.subr.mxu0 0.0
    %2400 = vmatpush1.msra.mxu0 %v2324
    %2401 = vmatprep.subr.mxu0 0.0
    %2402 = vmatpush1.msra.mxu0 %v2325
    %2403 = vmatprep.subr.mxu0 0.0
    %2404 = vmatpush1.msra.mxu0 0.0
    %2405 = vmatprep.subr.mxu0 0.0
    %2406 = vmatpush1.msra.mxu0 0.0
    %2407 = vmatprep.subr.mxu0 0.0
    %2408 = vmatpush1.msra.mxu0 0.0
    %2409 = vmatprep.subr.mxu0 0.0
    %2410 = vmatpush1.msra.mxu0 0.0
    %2411 = vmatprep.mubr.f32.mxu0 %v2327
    %2412 = vmatmul.mubr.f32.gmra.mrb[0].mxu0 %v2257
    %v2413 = vpop.f32.mrb[0].mxu0
    %v2414 = vadd.f32 0.0, %v2413
    %v2415 = vpop.f32.mrb[0].mxu0
    %2416 = vmatprep.mubr.f32.mxu0 %v2330
    %2417 = vmatmul.mubr.f32.gmra.mrb[0].mxu0 %v2263
    %v2418 = vpop.f32.mrb[0].mxu0
    %v2419 = vadd.f32 0.0, %v2418
    %v2420 = vpop.f32.mrb[0].mxu0
    %2421 = vmatprep.mubr.f32.mxu0 %v2333
    %2422 = vmatmul.mubr.f32.gmra.mrb[0].mxu0 %v2269
    %v2423 = vpop.f32.mrb[0].mxu0
    %v2424 = vadd.f32 0.0, %v2423
    %v2425 = vpop.f32.mrb[0].mxu0
    %2426 = vmatprep.mubr.f32.mxu0 %v2336
    %2427 = vmatmul.mubr.f32.gmra.mrb[0].mxu0 %v2275
    %v2428 = vpop.f32.mrb[0].mxu0
    %v2429 = vadd.f32 0.0, %v2428
    %v2430 = vpop.f32.mrb[0].mxu0
    %2431 = vmatprep.mubr.f32.mxu0 %v2339
    %2432 = vmatmul.mubr.f32.gmra.mrb[0].mxu0 %v2281
    %v2433 = vpop.f32.mrb[0].mxu0
    %v2434 = vadd.f32 0.0, %v2433
    %v2435 = vpop.f32.mrb[0].mxu0
    %2436 = vmatprep.mubr.f32.mxu0 %v2342
    %2437 = vmatmul.mubr.f32.gmra.mrb[0].mxu0 %v2287
    %v2438 = vpop.f32.mrb[0].mxu0
    %v2439 = vadd.f32 0.0, %v2438
    %v2440 = vpop.f32.mrb[0].mxu0
    %2441 = vmatprep.mubr.f32.mxu0 %v2345
    %2442 = vmatmul.mubr.f32.gmra.mrb[0].mxu0 %v2293
    %v2443 = vpop.f32.mrb[0].mxu0
    %v2444 = vadd.f32 0.0, %v2443
    %v2445 = vpop.f32.mrb[0].mxu0
    %2446 = vdwg.mxu0
    %v2447 = vadd.f32 %v2128, %v2414
    %v2448 = vadd.f32 %v2133, %v2419
    %v2449 = vadd.f32 %v2138, %v2424
    %v2450 = vadd.f32 %v2143, %v2429
    %v2451 = vadd.f32 %v2148, %v2434
    %v2452 = vadd.f32 %v2153, %v2439
    %v2453 = vadd.f32 %v2158, %v2444
    %v2454 = vld [vmem:[%s6] sm:$0x1]
    %v2456 = vlaneseq
    %v2457 = vshrl.u32 %v2456, 7
    %v2458 = vsub.s32 0, %v2457
    %v2459 = vrot.slane %v2454, %v2458
    %v2461 = vadd.f32 %v2447, %v2459
    %v2462 = vadd.f32 %v2448, %v2459
    %v2463 = vadd.f32 %v2449, %v2459
    %v2464 = vadd.f32 %v2450, %v2459
    %v2465 = vadd.f32 %v2451, %v2459
    %v2466 = vadd.f32 %v2452, %v2459
    %v2467 = vadd.f32 %v2453, %v2459
    %v2468 = vxor.u32 %v2461, 2147483648
    %v2469 = vxor.u32 %v2462, 2147483648
    %v2470 = vxor.u32 %v2463, 2147483648
    %v2471 = vxor.u32 %v2464, 2147483648
    %v2472 = vxor.u32 %v2465, 2147483648
    %v2473 = vxor.u32 %v2466, 2147483648
    %v2474 = vxor.u32 %v2467, 2147483648
    %v2475 = vmul.f32 %v2468, 1.442695
    %v2476 = vpow.pop %v2475
    %v2477 = vmul.f32 %v2469, 1.442695
    %v2478 = vpow.pop %v2477
    %v2479 = vmul.f32 %v2470, 1.442695
    %v2480 = vpow.pop %v2479
    %v2481 = vmul.f32 %v2471, 1.442695
    %v2482 = vpow.pop %v2481
    %v2483 = vmul.f32 %v2472, 1.442695
    %v2484 = vpow.pop %v2483
    %v2485 = vmul.f32 %v2473, 1.442695
    %v2486 = vpow.pop %v2485
    %v2487 = vmul.f32 %v2474, 1.442695
    %v2488 = vpow.pop %v2487
    %v2489 = vadd.f32 %v2476, 1.0
    %v2490 = vadd.f32 %v2478, 1.0
    %v2491 = vadd.f32 %v2480, 1.0
    %v2492 = vadd.f32 %v2482, 1.0
    %v2493 = vadd.f32 %v2484, 1.0
    %v2494 = vadd.f32 %v2486, 1.0
    %v2495 = vadd.f32 %v2488, 1.0
    %v2496 = vrcp.pop %v2489
    %v2497 = vmul.f32 1.0, %v2496
    %v2498 = vrcp.pop %v2490
    %v2499 = vmul.f32 1.0, %v2498
    %v2500 = vrcp.pop %v2491
    %v2501 = vmul.f32 1.0, %v2500
    %v2502 = vrcp.pop %v2492
    %v2503 = vmul.f32 1.0, %v2502
    %v2504 = vrcp.pop %v2493
    %v2505 = vmul.f32 1.0, %v2504
    %v2506 = vrcp.pop %v2494
    %v2507 = vmul.f32 1.0, %v2506
    %v2508 = vrcp.pop %v2495
    %v2509 = vmul.f32 1.0, %v2508
    %v2510 = vld [vmem:[#allocation4] sm:$0xff]
    %v2511 = vld [vmem:[#allocation4 + $0x8] sm:$0xff]
    %v2512 = vld [vmem:[#allocation4 + $0x10] sm:$0xff]
    %vm2513 = vcmask 457728
    %v2515 = vsel %vm2513, %v2510, 0
    %v2518 = vsel %vm2513, %v2511, 0
    %v2521 = vsel %vm2513, %v2512, 0
    %2523 = vmatprep.subr.mxu0 0.0
    %2524 = vmatpush1.msra.mxu0 %v2497
    %2525 = vmatprep.subr.mxu0 0.0
    %2526 = vmatpush1.msra.mxu0 %v2499
    %2527 = vmatprep.subr.mxu0 0.0
    %2528 = vmatpush1.msra.mxu0 %v2501
    %2529 = vmatprep.subr.mxu0 0.0
    %2530 = vmatpush1.msra.mxu0 %v2503
    %2531 = vmatprep.subr.mxu0 0.0
    %2532 = vmatpush1.msra.mxu0 %v2505
    %2533 = vmatprep.subr.mxu0 0.0
    %2534 = vmatpush1.msra.mxu0 %v2507
    %2535 = vmatprep.subr.mxu0 0.0
    %2536 = vmatpush1.msra.mxu0 %v2509
    %2537 = vmatprep.subr.mxu0 0.0
    %2538 = vmatpush1.msra.mxu0 0.0
    %2539 = vmatprep.subr.mxu0 0.0
    %2540 = vmatpush1.msra.mxu0 0.0
    %2541 = vmatprep.subr.mxu0 0.0
    %2542 = vmatpush1.msra.mxu0 0.0
    %2543 = vmatprep.subr.mxu0 0.0
    %2544 = vmatpush1.msra.mxu0 0.0
    %2545 = vmatprep.subr.mxu0 0.0
    %2546 = vmatpush1.msra.mxu0 0.0
    %2547 = vmatprep.subr.mxu0 0.0
    %2548 = vmatpush1.msra.mxu0 0.0
    %2549 = vmatprep.subr.mxu0 0.0
    %2550 = vmatpush1.msra.mxu0 0.0
    %2551 = vmatprep.subr.mxu0 0.0
    %2552 = vmatpush1.msra.mxu0 0.0
    %2553 = vmatprep.subr.mxu0 0.0
    %2554 = vmatpush1.msra.mxu0 0.0
    %2555 = vmatprep.subr.mxu0 0.0
    %2556 = vmatpush1.msra.mxu0 0.0
    %2557 = vmatprep.subr.mxu0 0.0
    %2558 = vmatpush1.msra.mxu0 0.0
    %2559 = vmatprep.subr.mxu0 0.0
    %2560 = vmatpush1.msra.mxu0 0.0
    %2561 = vmatprep.subr.mxu0 0.0
    %2562 = vmatpush1.msra.mxu0 0.0
    %2563 = vmatprep.subr.mxu0 0.0
    %2564 = vmatpush1.msra.mxu0 0.0
    %2565 = vmatprep.subr.mxu0 0.0
    %2566 = vmatpush1.msra.mxu0 0.0
    %2567 = vmatprep.subr.mxu0 0.0
    %2568 = vmatpush1.msra.mxu0 0.0
    %2569 = vmatprep.subr.mxu0 0.0
    %2570 = vmatpush1.msra.mxu0 0.0
    %2571 = vmatprep.subr.mxu0 0.0
    %2572 = vmatpush1.msra.mxu0 0.0
    %2573 = vmatprep.subr.mxu0 0.0
    %2574 = vmatpush1.msra.mxu0 0.0
    %2575 = vmatprep.subr.mxu0 0.0
    %2576 = vmatpush1.msra.mxu0 0.0
    %2577 = vmatprep.subr.mxu0 0.0
    %2578 = vmatpush1.msra.mxu0 0.0
    %2579 = vmatprep.subr.mxu0 0.0
    %2580 = vmatpush1.msra.mxu0 0.0
    %2581 = vmatprep.subr.mxu0 0.0
    %2582 = vmatpush1.msra.mxu0 0.0
    %2583 = vmatprep.subr.mxu0 0.0
    %2584 = vmatpush1.msra.mxu0 0.0
    %2585 = vmatprep.subr.mxu0 0.0
    %2586 = vmatpush1.msra.mxu0 0.0
    %2587 = vmatprep.mubr.f32.mxu0 0.0
    %2588 = vmatmul.mubr.f32.gmra.mrb[0].mxu0 %v2515
    %v2589 = vpop.f32.mrb[0].mxu0
    %v2590 = vadd.f32 0.0, %v2589
    %v2591 = vpop.f32.mrb[0].mxu0
    %2592 = vmatprep.mubr.f32.mxu0 0.0
    %2593 = vmatmul.mubr.f32.gmra.mrb[0].mxu0 %v2518
    %v2594 = vpop.f32.mrb[0].mxu0
    %v2595 = vadd.f32 0.0, %v2594
    %v2596 = vpop.f32.mrb[0].mxu0
    %2597 = vmatprep.mubr.f32.mxu0 0.0
    %2598 = vmatmul.mubr.f32.gmra.mrb[0].mxu0 %v2521
    %v2599 = vpop.f32.mrb[0].mxu0
    %v2600 = vadd.f32 0.0, %v2599
    %v2601 = vpop.f32.mrb[0].mxu0
    %2602 = vdwg.mxu0
    %v2603 = vld [vmem:[%s8] sm:$0xff]
    %v2604 = vld [vmem:[%s8 + $0x8] sm:$0xff]
    %v2605 = vld [vmem:[%s8 + $0x10] sm:$0xff]
    %v2606 = vld [vmem:[%s8 + $0x18] sm:$0xff]
    %v2607 = vld [vmem:[%s8 + $0x20] sm:$0xff]
    %v2608 = vld [vmem:[%s8 + $0x28] sm:$0xff]
    %v2609 = vld [vmem:[%s8 + $0x30] sm:$0xff]
    %v2610 = vld [vmem:[%s8 + $0x38] sm:$0xff]
    %v2611 = vld [vmem:[%s8 + $0x40] sm:$0xff]
    %v2612 = vld [vmem:[%s8 + $0x48] sm:$0xff]
    %v2613 = vld [vmem:[%s8 + $0x50] sm:$0xff]
    %v2614 = vld [vmem:[%s8 + $0x58] sm:$0xff]
    %v2615 = vld [vmem:[%s8 + $0x60] sm:$0xff]
    %v2616 = vld [vmem:[%s8 + $0x68] sm:$0xff]
    %s2617 = scalar_lea.vmem [#allocation4], 24
    %v2618 = vld [vmem:[%s2617] sm:$0xff]
    %v2619 = vld [vmem:[%s2617 + $0x8] sm:$0xff]
    %v2620 = vld [vmem:[%s2617 + $0x10] sm:$0xff]
    %v2622 = vsel %vm2513, %v2618, 0
    %v2625 = vsel %vm2513, %v2619, 0
    %v2628 = vsel %vm2513, %v2620, 0
    %2630 = vmatprep.subr.mxu0 0.0
    %2631 = vmatpush1.msra.mxu0 %v2497
    %2632 = vmatprep.subr.mxu0 0.0
    %2633 = vmatpush1.msra.mxu0 %v2499
    %2634 = vmatprep.subr.mxu0 0.0
    %2635 = vmatpush1.msra.mxu0 %v2501
    %2636 = vmatprep.subr.mxu0 0.0
    %2637 = vmatpush1.msra.mxu0 %v2503
    %2638 = vmatprep.subr.mxu0 0.0
    %2639 = vmatpush1.msra.mxu0 %v2505
    %2640 = vmatprep.subr.mxu0 0.0
    %2641 = vmatpush1.msra.mxu0 %v2507
    %2642 = vmatprep.subr.mxu0 0.0
    %2643 = vmatpush1.msra.mxu0 %v2509
    %2644 = vmatprep.subr.mxu0 0.0
    %2645 = vmatpush1.msra.mxu0 0.0
    %2646 = vmatprep.subr.mxu0 0.0
    %2647 = vmatpush1.msra.mxu0 0.0
    %2648 = vmatprep.subr.mxu0 0.0
    %2649 = vmatpush1.msra.mxu0 0.0
    %2650 = vmatprep.subr.mxu0 0.0
    %2651 = vmatpush1.msra.mxu0 0.0
    %2652 = vmatprep.subr.mxu0 0.0
    %2653 = vmatpush1.msra.mxu0 0.0
    %2654 = vmatprep.subr.mxu0 0.0
    %2655 = vmatpush1.msra.mxu0 0.0
    %2656 = vmatprep.subr.mxu0 0.0
    %2657 = vmatpush1.msra.mxu0 0.0
    %2658 = vmatprep.subr.mxu0 0.0
    %2659 = vmatpush1.msra.mxu0 0.0
    %2660 = vmatprep.subr.mxu0 0.0
    %2661 = vmatpush1.msra.mxu0 0.0
    %2662 = vmatprep.subr.mxu0 0.0
    %2663 = vmatpush1.msra.mxu0 0.0
    %2664 = vmatprep.subr.mxu0 0.0
    %2665 = vmatpush1.msra.mxu0 0.0
    %2666 = vmatprep.subr.mxu0 0.0
    %2667 = vmatpush1.msra.mxu0 0.0
    %2668 = vmatprep.subr.mxu0 0.0
    %2669 = vmatpush1.msra.mxu0 0.0
    %2670 = vmatprep.subr.mxu0 0.0
    %2671 = vmatpush1.msra.mxu0 0.0
    %2672 = vmatprep.subr.mxu0 0.0
    %2673 = vmatpush1.msra.mxu0 0.0
    %2674 = vmatprep.subr.mxu0 0.0
    %2675 = vmatpush1.msra.mxu0 0.0
    %2676 = vmatprep.subr.mxu0 0.0
    %2677 = vmatpush1.msra.mxu0 0.0
    %2678 = vmatprep.subr.mxu0 0.0
    %2679 = vmatpush1.msra.mxu0 0.0
    %2680 = vmatprep.subr.mxu0 0.0
    %2681 = vmatpush1.msra.mxu0 0.0
    %2682 = vmatprep.subr.mxu0 0.0
    %2683 = vmatpush1.msra.mxu0 0.0
    %2684 = vmatprep.subr.mxu0 0.0
    %2685 = vmatpush1.msra.mxu0 0.0
    %2686 = vmatprep.subr.mxu0 0.0
    %2687 = vmatpush1.msra.mxu0 0.0
    %2688 = vmatprep.subr.mxu0 0.0
    %2689 = vmatpush1.msra.mxu0 0.0
    %2690 = vmatprep.subr.mxu0 0.0
    %2691 = vmatpush1.msra.mxu0 0.0
    %2692 = vmatprep.subr.mxu0 0.0
    %2693 = vmatpush1.msra.mxu0 0.0
    %2694 = vmatprep.mubr.f32.mxu0 0.0
    %2695 = vmatmul.mubr.f32.gmra.mrb[0].mxu0 %v2622
    %v2696 = vpop.f32.mrb[0].mxu0
    %v2697 = vadd.f32 0.0, %v2696
    %v2698 = vpop.f32.mrb[0].mxu0
    %2699 = vmatprep.mubr.f32.mxu0 0.0
    %2700 = vmatmul.mubr.f32.gmra.mrb[0].mxu0 %v2625
    %v2701 = vpop.f32.mrb[0].mxu0
    %v2702 = vadd.f32 0.0, %v2701
    %v2703 = vpop.f32.mrb[0].mxu0
    %2704 = vmatprep.mubr.f32.mxu0 0.0
    %2705 = vmatmul.mubr.f32.gmra.mrb[0].mxu0 %v2628
    %v2706 = vpop.f32.mrb[0].mxu0
    %v2707 = vadd.f32 0.0, %v2706
    %v2708 = vpop.f32.mrb[0].mxu0
    %2709 = vdwg.mxu0
    %s2710 = scalar_lea.vmem %s8, 112
    %v2711 = vld [vmem:[%s2710] sm:$0xff]
    %v2712 = vld [vmem:[%s2710 + $0x8] sm:$0xff]
    %v2713 = vld [vmem:[%s2710 + $0x10] sm:$0xff]
    %v2714 = vld [vmem:[%s2710 + $0x18] sm:$0xff]
    %v2715 = vld [vmem:[%s2710 + $0x20] sm:$0xff]
    %v2716 = vld [vmem:[%s2710 + $0x28] sm:$0xff]
    %v2717 = vld [vmem:[%s2710 + $0x30] sm:$0xff]
    %v2718 = vld [vmem:[%s2710 + $0x38] sm:$0xff]
    %v2719 = vld [vmem:[%s2710 + $0x40] sm:$0xff]
    %v2720 = vld [vmem:[%s2710 + $0x48] sm:$0xff]
    %v2721 = vld [vmem:[%s2710 + $0x50] sm:$0xff]
    %v2722 = vld [vmem:[%s2710 + $0x58] sm:$0xff]
    %v2723 = vld [vmem:[%s2710 + $0x60] sm:$0xff]
    %v2724 = vld [vmem:[%s2710 + $0x68] sm:$0xff]
    %v2726 = vsel %vm1597, %v2697, 0
    %v2729 = vsel %vm1597, %v2702, 0
    %v2732 = vsel %vm1597, %v2707, 0
    %2734 = vmatprep.subr.mxu0 0.0
    %2735 = vmatpush1.msra.mxu0 %v2711
    %2736 = vmatprep.subr.mxu0 0.0
    %2737 = vmatpush1.msra.mxu0 %v2712
    %2738 = vmatprep.subr.mxu0 0.0
    %2739 = vmatpush1.msra.mxu0 %v2713
    %2740 = vmatprep.subr.mxu0 0.0
    %2741 = vmatpush1.msra.mxu0 %v2714
    %2742 = vmatprep.subr.mxu0 0.0
    %2743 = vmatpush1.msra.mxu0 %v2715
    %2744 = vmatprep.subr.mxu0 0.0
    %2745 = vmatpush1.msra.mxu0 %v2716
    %2746 = vmatprep.subr.mxu0 0.0
    %2747 = vmatpush1.msra.mxu0 %v2717
    %2748 = vmatprep.subr.mxu0 0.0
    %2749 = vmatpush1.msra.mxu0 %v2718
    %2750 = vmatprep.subr.mxu0 0.0
    %2751 = vmatpush1.msra.mxu0 %v2719
    %2752 = vmatprep.subr.mxu0 0.0
    %2753 = vmatpush1.msra.mxu0 %v2720
    %2754 = vmatprep.subr.mxu0 0.0
    %2755 = vmatpush1.msra.mxu0 %v2721
    %2756 = vmatprep.subr.mxu0 0.0
    %2757 = vmatpush1.msra.mxu0 %v2722
    %2758 = vmatprep.subr.mxu0 0.0
    %2759 = vmatpush1.msra.mxu0 %v2723
    %2760 = vmatprep.subr.mxu0 0.0
    %2761 = vmatpush1.msra.mxu0 %v2724
    %2762 = vmatprep.subr.mxu0 0.0
    %2763 = vmatpush1.msra.mxu0 0.0
    %2764 = vmatprep.subr.mxu0 0.0
    %2765 = vmatpush1.msra.mxu0 0.0
    %2766 = vmatprep.subr.mxu0 0.0
    %2767 = vmatpush1.msra.mxu0 0.0
    %2768 = vmatprep.subr.mxu0 0.0
    %2769 = vmatpush1.msra.mxu0 0.0
    %2770 = vmatprep.subr.mxu0 0.0
    %2771 = vmatpush1.msra.mxu0 0.0
    %2772 = vmatprep.subr.mxu0 0.0
    %2773 = vmatpush1.msra.mxu0 0.0
    %2774 = vmatprep.subr.mxu0 0.0
    %2775 = vmatpush1.msra.mxu0 0.0
    %2776 = vmatprep.subr.mxu0 0.0
    %2777 = vmatpush1.msra.mxu0 0.0
    %2778 = vmatprep.subr.mxu0 0.0
    %2779 = vmatpush1.msra.mxu0 0.0
    %2780 = vmatprep.subr.mxu0 0.0
    %2781 = vmatpush1.msra.mxu0 0.0
    %2782 = vmatprep.subr.mxu0 0.0
    %2783 = vmatpush1.msra.mxu0 0.0
    %2784 = vmatprep.subr.mxu0 0.0
    %2785 = vmatpush1.msra.mxu0 0.0
    %2786 = vmatprep.subr.mxu0 0.0
    %2787 = vmatpush1.msra.mxu0 0.0
    %2788 = vmatprep.subr.mxu0 0.0
    %2789 = vmatpush1.msra.mxu0 0.0
    %2790 = vmatprep.subr.mxu0 0.0
    %2791 = vmatpush1.msra.mxu0 0.0
    %2792 = vmatprep.subr.mxu0 0.0
    %2793 = vmatpush1.msra.mxu0 0.0
    %2794 = vmatprep.subr.mxu0 0.0
    %2795 = vmatpush1.msra.mxu0 0.0
    %2796 = vmatprep.subr.mxu0 0.0
    %2797 = vmatpush1.msra.mxu0 0.0
    %2798 = vmatprep.mubr.f32.mxu0 0.0
    %2799 = vmatmul.mubr.f32.gmra.mrb[0].mxu0 %v2726
    %v2800 = vpop.f32.mrb[0].mxu0
    %v2801 = vadd.f32 0.0, %v2800
    %v2802 = vpop.f32.mrb[0].mxu0
    %2803 = vmatprep.mubr.f32.mxu0 0.0
    %2804 = vmatmul.mubr.f32.gmra.mrb[0].mxu0 %v2729
    %v2805 = vpop.f32.mrb[0].mxu0
    %v2806 = vadd.f32 0.0, %v2805
    %v2807 = vpop.f32.mrb[0].mxu0
    %2808 = vmatprep.mubr.f32.mxu0 0.0
    %2809 = vmatmul.mubr.f32.gmra.mrb[0].mxu0 %v2732
    %v2810 = vpop.f32.mrb[0].mxu0
    %v2811 = vadd.f32 0.0, %v2810
    %v2812 = vpop.f32.mrb[0].mxu0
    %2813 = vdwg.mxu0
    %v2815 = vsel %vm1597, %v2590, 0
    %v2818 = vsel %vm1597, %v2595, 0
    %v2821 = vsel %vm1597, %v2600, 0
    %2823 = vmatprep.subr.mxu0 0.0
    %2824 = vmatpush1.msra.mxu0 %v2603
    %2825 = vmatprep.subr.mxu0 0.0
    %2826 = vmatpush1.msra.mxu0 %v2604
    %2827 = vmatprep.subr.mxu0 0.0
    %2828 = vmatpush1.msra.mxu0 %v2605
    %2829 = vmatprep.subr.mxu0 0.0
    %2830 = vmatpush1.msra.mxu0 %v2606
    %2831 = vmatprep.subr.mxu0 0.0
    %2832 = vmatpush1.msra.mxu0 %v2607
    %2833 = vmatprep.subr.mxu0 0.0
    %2834 = vmatpush1.msra.mxu0 %v2608
    %2835 = vmatprep.subr.mxu0 0.0
    %2836 = vmatpush1.msra.mxu0 %v2609
    %2837 = vmatprep.subr.mxu0 0.0
    %2838 = vmatpush1.msra.mxu0 %v2610
    %2839 = vmatprep.subr.mxu0 0.0
    %2840 = vmatpush1.msra.mxu0 %v2611
    %2841 = vmatprep.subr.mxu0 0.0
    %2842 = vmatpush1.msra.mxu0 %v2612
    %2843 = vmatprep.subr.mxu0 0.0
    %2844 = vmatpush1.msra.mxu0 %v2613
    %2845 = vmatprep.subr.mxu0 0.0
    %2846 = vmatpush1.msra.mxu0 %v2614
    %2847 = vmatprep.subr.mxu0 0.0
    %2848 = vmatpush1.msra.mxu0 %v2615
    %2849 = vmatprep.subr.mxu0 0.0
    %2850 = vmatpush1.msra.mxu0 %v2616
    %2851 = vmatprep.subr.mxu0 0.0
    %2852 = vmatpush1.msra.mxu0 0.0
    %2853 = vmatprep.subr.mxu0 0.0
    %2854 = vmatpush1.msra.mxu0 0.0
    %2855 = vmatprep.subr.mxu0 0.0
    %2856 = vmatpush1.msra.mxu0 0.0
    %2857 = vmatprep.subr.mxu0 0.0
    %2858 = vmatpush1.msra.mxu0 0.0
    %2859 = vmatprep.subr.mxu0 0.0
    %2860 = vmatpush1.msra.mxu0 0.0
    %2861 = vmatprep.subr.mxu0 0.0
    %2862 = vmatpush1.msra.mxu0 0.0
    %2863 = vmatprep.subr.mxu0 0.0
    %2864 = vmatpush1.msra.mxu0 0.0
    %2865 = vmatprep.subr.mxu0 0.0
    %2866 = vmatpush1.msra.mxu0 0.0
    %2867 = vmatprep.subr.mxu0 0.0
    %2868 = vmatpush1.msra.mxu0 0.0
    %2869 = vmatprep.subr.mxu0 0.0
    %2870 = vmatpush1.msra.mxu0 0.0
    %2871 = vmatprep.subr.mxu0 0.0
    %2872 = vmatpush1.msra.mxu0 0.0
    %2873 = vmatprep.subr.mxu0 0.0
    %2874 = vmatpush1.msra.mxu0 0.0
    %2875 = vmatprep.subr.mxu0 0.0
    %2876 = vmatpush1.msra.mxu0 0.0
    %2877 = vmatprep.subr.mxu0 0.0
    %2878 = vmatpush1.msra.mxu0 0.0
    %2879 = vmatprep.subr.mxu0 0.0
    %2880 = vmatpush1.msra.mxu0 0.0
    %2881 = vmatprep.subr.mxu0 0.0
    %2882 = vmatpush1.msra.mxu0 0.0
    %2883 = vmatprep.subr.mxu0 0.0
    %2884 = vmatpush1.msra.mxu0 0.0
    %2885 = vmatprep.subr.mxu0 0.0
    %2886 = vmatpush1.msra.mxu0 0.0
    %2887 = vmatprep.mubr.f32.mxu0 0.0
    %2888 = vmatmul.mubr.f32.gmra.mrb[0].mxu0 %v2815
    %v2889 = vpop.f32.mrb[0].mxu0
    %v2890 = vadd.f32 %v2801, %v2889
    %v2891 = vpop.f32.mrb[0].mxu0
    %2892 = vmatprep.mubr.f32.mxu0 0.0
    %2893 = vmatmul.mubr.f32.gmra.mrb[0].mxu0 %v2818
    %v2894 = vpop.f32.mrb[0].mxu0
    %v2895 = vadd.f32 %v2806, %v2894
    %v2896 = vpop.f32.mrb[0].mxu0
    %2897 = vmatprep.mubr.f32.mxu0 0.0
    %2898 = vmatmul.mubr.f32.gmra.mrb[0].mxu0 %v2821
    %v2899 = vpop.f32.mrb[0].mxu0
    %v2900 = vadd.f32 %v2811, %v2899
    %v2901 = vpop.f32.mrb[0].mxu0
    %2902 = vdwg.mxu0
    %s2903 = scalar_lea.vmem [#allocation4], 48
    %v2904 = vld [vmem:[%s2903] sm:$0xff]
    %v2905 = vld [vmem:[%s2903 + $0x8] sm:$0xff]
    %v2906 = vld [vmem:[%s2903 + $0x10] sm:$0xff]
    %v2908 = vsel %vm2513, %v2904, 0
    %v2911 = vsel %vm2513, %v2905, 0
    %v2914 = vsel %vm2513, %v2906, 0
    %2916 = vmatprep.subr.mxu0 0.0
    %2917 = vmatpush1.msra.mxu0 %v2497
    %2918 = vmatprep.subr.mxu0 0.0
    %2919 = vmatpush1.msra.mxu0 %v2499
    %2920 = vmatprep.subr.mxu0 0.0
    %2921 = vmatpush1.msra.mxu0 %v2501
    %2922 = vmatprep.subr.mxu0 0.0
    %2923 = vmatpush1.msra.mxu0 %v2503
    %2924 = vmatprep.subr.mxu0 0.0
    %2925 = vmatpush1.msra.mxu0 %v2505
    %2926 = vmatprep.subr.mxu0 0.0
    %2927 = vmatpush1.msra.mxu0 %v2507
    %2928 = vmatprep.subr.mxu0 0.0
    %2929 = vmatpush1.msra.mxu0 %v2509
    %2930 = vmatprep.subr.mxu0 0.0
    %2931 = vmatpush1.msra.mxu0 0.0
    %2932 = vmatprep.subr.mxu0 0.0
    %2933 = vmatpush1.msra.mxu0 0.0
    %2934 = vmatprep.subr.mxu0 0.0
    %2935 = vmatpush1.msra.mxu0 0.0
    %2936 = vmatprep.subr.mxu0 0.0
    %2937 = vmatpush1.msra.mxu0 0.0
    %2938 = vmatprep.subr.mxu0 0.0
    %2939 = vmatpush1.msra.mxu0 0.0
    %2940 = vmatprep.subr.mxu0 0.0
    %2941 = vmatpush1.msra.mxu0 0.0
    %2942 = vmatprep.subr.mxu0 0.0
    %2943 = vmatpush1.msra.mxu0 0.0
    %2944 = vmatprep.subr.mxu0 0.0
    %2945 = vmatpush1.msra.mxu0 0.0
    %2946 = vmatprep.subr.mxu0 0.0
    %2947 = vmatpush1.msra.mxu0 0.0
    %2948 = vmatprep.subr.mxu0 0.0
    %2949 = vmatpush1.msra.mxu0 0.0
    %2950 = vmatprep.subr.mxu0 0.0
    %2951 = vmatpush1.msra.mxu0 0.0
    %2952 = vmatprep.subr.mxu0 0.0
    %2953 = vmatpush1.msra.mxu0 0.0
    %2954 = vmatprep.subr.mxu0 0.0
    %2955 = vmatpush1.msra.mxu0 0.0
    %2956 = vmatprep.subr.mxu0 0.0
    %2957 = vmatpush1.msra.mxu0 0.0
    %2958 = vmatprep.subr.mxu0 0.0
    %2959 = vmatpush1.msra.mxu0 0.0
    %2960 = vmatprep.subr.mxu0 0.0
    %2961 = vmatpush1.msra.mxu0 0.0
    %2962 = vmatprep.subr.mxu0 0.0
    %2963 = vmatpush1.msra.mxu0 0.0
    %2964 = vmatprep.subr.mxu0 0.0
    %2965 = vmatpush1.msra.mxu0 0.0
    %2966 = vmatprep.subr.mxu0 0.0
    %2967 = vmatpush1.msra.mxu0 0.0
    %2968 = vmatprep.subr.mxu0 0.0
    %2969 = vmatpush1.msra.mxu0 0.0
    %2970 = vmatprep.subr.mxu0 0.0
    %2971 = vmatpush1.msra.mxu0 0.0
    %2972 = vmatprep.subr.mxu0 0.0
    %2973 = vmatpush1.msra.mxu0 0.0
    %2974 = vmatprep.subr.mxu0 0.0
    %2975 = vmatpush1.msra.mxu0 0.0
    %2976 = vmatprep.subr.mxu0 0.0
    %2977 = vmatpush1.msra.mxu0 0.0
    %2978 = vmatprep.subr.mxu0 0.0
    %2979 = vmatpush1.msra.mxu0 0.0
    %2980 = vmatprep.mubr.f32.mxu0 0.0
    %2981 = vmatmul.mubr.f32.gmra.mrb[0].mxu0 %v2908
    %v2982 = vpop.f32.mrb[0].mxu0
    %v2983 = vadd.f32 0.0, %v2982
    %v2984 = vpop.f32.mrb[0].mxu0
    %2985 = vmatprep.mubr.f32.mxu0 0.0
    %2986 = vmatmul.mubr.f32.gmra.mrb[0].mxu0 %v2911
    %v2987 = vpop.f32.mrb[0].mxu0
    %v2988 = vadd.f32 0.0, %v2987
    %v2989 = vpop.f32.mrb[0].mxu0
    %2990 = vmatprep.mubr.f32.mxu0 0.0
    %2991 = vmatmul.mubr.f32.gmra.mrb[0].mxu0 %v2914
    %v2992 = vpop.f32.mrb[0].mxu0
    %v2993 = vadd.f32 0.0, %v2992
    %v2994 = vpop.f32.mrb[0].mxu0
    %2995 = vdwg.mxu0
    %s2996 = scalar_lea.vmem %s8, 224
    %v2997 = vld [vmem:[%s2996] sm:$0xff]
    %v2998 = vld [vmem:[%s2996 + $0x8] sm:$0xff]
    %v2999 = vld [vmem:[%s2996 + $0x10] sm:$0xff]
    %v3000 = vld [vmem:[%s2996 + $0x18] sm:$0xff]
    %v3001 = vld [vmem:[%s2996 + $0x20] sm:$0xff]
    %v3002 = vld [vmem:[%s2996 + $0x28] sm:$0xff]
    %v3003 = vld [vmem:[%s2996 + $0x30] sm:$0xff]
    %v3004 = vld [vmem:[%s2996 + $0x38] sm:$0xff]
    %v3005 = vld [vmem:[%s2996 + $0x40] sm:$0xff]
    %v3006 = vld [vmem:[%s2996 + $0x48] sm:$0xff]
    %v3007 = vld [vmem:[%s2996 + $0x50] sm:$0xff]
    %v3008 = vld [vmem:[%s2996 + $0x58] sm:$0xff]
    %v3009 = vld [vmem:[%s2996 + $0x60] sm:$0xff]
    %v3010 = vld [vmem:[%s2996 + $0x68] sm:$0xff]
    %v3012 = vsel %vm1597, %v2983, 0
    %v3015 = vsel %vm1597, %v2988, 0
    %v3018 = vsel %vm1597, %v2993, 0
    %3020 = vmatprep.subr.mxu0 0.0
    %3021 = vmatpush1.msra.mxu0 %v2997
    %3022 = vmatprep.subr.mxu0 0.0
    %3023 = vmatpush1.msra.mxu0 %v2998
    %3024 = vmatprep.subr.mxu0 0.0
    %3025 = vmatpush1.msra.mxu0 %v2999
    %3026 = vmatprep.subr.mxu0 0.0
    %3027 = vmatpush1.msra.mxu0 %v3000
    %3028 = vmatprep.subr.mxu0 0.0
    %3029 = vmatpush1.msra.mxu0 %v3001
    %3030 = vmatprep.subr.mxu0 0.0
    %3031 = vmatpush1.msra.mxu0 %v3002
    %3032 = vmatprep.subr.mxu0 0.0
    %3033 = vmatpush1.msra.mxu0 %v3003
    %3034 = vmatprep.subr.mxu0 0.0
    %3035 = vmatpush1.msra.mxu0 %v3004
    %3036 = vmatprep.subr.mxu0 0.0
    %3037 = vmatpush1.msra.mxu0 %v3005
    %3038 = vmatprep.subr.mxu0 0.0
    %3039 = vmatpush1.msra.mxu0 %v3006
    %3040 = vmatprep.subr.mxu0 0.0
    %3041 = vmatpush1.msra.mxu0 %v3007
    %3042 = vmatprep.subr.mxu0 0.0
    %3043 = vmatpush1.msra.mxu0 %v3008
    %3044 = vmatprep.subr.mxu0 0.0
    %3045 = vmatpush1.msra.mxu0 %v3009
    %3046 = vmatprep.subr.mxu0 0.0
    %3047 = vmatpush1.msra.mxu0 %v3010
    %3048 = vmatprep.subr.mxu0 0.0
    %3049 = vmatpush1.msra.mxu0 0.0
    %3050 = vmatprep.subr.mxu0 0.0
    %3051 = vmatpush1.msra.mxu0 0.0
    %3052 = vmatprep.subr.mxu0 0.0
    %3053 = vmatpush1.msra.mxu0 0.0
    %3054 = vmatprep.subr.mxu0 0.0
    %3055 = vmatpush1.msra.mxu0 0.0
    %3056 = vmatprep.subr.mxu0 0.0
    %3057 = vmatpush1.msra.mxu0 0.0
    %3058 = vmatprep.subr.mxu0 0.0
    %3059 = vmatpush1.msra.mxu0 0.0
    %3060 = vmatprep.subr.mxu0 0.0
    %3061 = vmatpush1.msra.mxu0 0.0
    %3062 = vmatprep.subr.mxu0 0.0
    %3063 = vmatpush1.msra.mxu0 0.0
    %3064 = vmatprep.subr.mxu0 0.0
    %3065 = vmatpush1.msra.mxu0 0.0
    %3066 = vmatprep.subr.mxu0 0.0
    %3067 = vmatpush1.msra.mxu0 0.0
    %3068 = vmatprep.subr.mxu0 0.0
    %3069 = vmatpush1.msra.mxu0 0.0
    %3070 = vmatprep.subr.mxu0 0.0
    %3071 = vmatpush1.msra.mxu0 0.0
    %3072 = vmatprep.subr.mxu0 0.0
    %3073 = vmatpush1.msra.mxu0 0.0
    %3074 = vmatprep.subr.mxu0 0.0
    %3075 = vmatpush1.msra.mxu0 0.0
    %3076 = vmatprep.subr.mxu0 0.0
    %3077 = vmatpush1.msra.mxu0 0.0
    %3078 = vmatprep.subr.mxu0 0.0
    %3079 = vmatpush1.msra.mxu0 0.0
    %3080 = vmatprep.subr.mxu0 0.0
    %3081 = vmatpush1.msra.mxu0 0.0
    %3082 = vmatprep.subr.mxu0 0.0
    %3083 = vmatpush1.msra.mxu0 0.0
    %3084 = vmatprep.mubr.f32.mxu0 0.0
    %3085 = vmatmul.mubr.f32.gmra.mrb[0].mxu0 %v3012
    %v3086 = vpop.f32.mrb[0].mxu0
    %v3087 = vadd.f32 0.0, %v3086
    %v3088 = vpop.f32.mrb[0].mxu0
    %3089 = vmatprep.mubr.f32.mxu0 0.0
    %3090 = vmatmul.mubr.f32.gmra.mrb[0].mxu0 %v3015
    %v3091 = vpop.f32.mrb[0].mxu0
    %v3092 = vadd.f32 0.0, %v3091
    %v3093 = vpop.f32.mrb[0].mxu0
    %3094 = vmatprep.mubr.f32.mxu0 0.0
    %3095 = vmatmul.mubr.f32.gmra.mrb[0].mxu0 %v3018
    %v3096 = vpop.f32.mrb[0].mxu0
    %v3097 = vadd.f32 0.0, %v3096
    %v3098 = vpop.f32.mrb[0].mxu0
    %3099 = vdwg.mxu0
    %v3100 = vadd.f32 %v2890, %v3087
    %v3101 = vadd.f32 %v2895, %v3092
    %v3102 = vadd.f32 %v2900, %v3097
    %v3103 = vld [vmem:[%s9] sm:$0x1]
    %v3105 = vlaneseq
    %v3106 = vshrl.u32 %v3105, 7
    %v3107 = vsub.s32 0, %v3106
    %v3108 = vrot.slane %v3103, %v3107
    %v3110 = vadd.f32 %v3100, %v3108
    %v3111 = vadd.f32 %v3101, %v3108
    %v3112 = vadd.f32 %v3102, %v3108
    %v3113 = vxor.u32 %v3110, 2147483648
    %v3114 = vxor.u32 %v3111, 2147483648
    %v3115 = vxor.u32 %v3112, 2147483648
    %v3116 = vmul.f32 %v3113, 1.442695
    %v3117 = vpow.pop %v3116
    %v3118 = vmul.f32 %v3114, 1.442695
    %v3119 = vpow.pop %v3118
    %v3120 = vmul.f32 %v3115, 1.442695
    %v3121 = vpow.pop %v3120
    %v3122 = vadd.f32 %v3117, 1.0
    %v3123 = vadd.f32 %v3119, 1.0
    %v3124 = vadd.f32 %v3121, 1.0
    %v3125 = vrcp.pop %v3122
    %v3126 = vmul.f32 1.0, %v3125
    %v3127 = vrcp.pop %v3123
    %v3128 = vmul.f32 1.0, %v3127
    %v3129 = vrcp.pop %v3124
    %v3130 = vmul.f32 1.0, %v3129
    %v3131 = vld [vmem:[%s10] sm:$0xff]
    %vm3132 = vcmask 195584
    %v3134 = vsel %vm3132, %v3131, 0
    %3136 = vmatprep.subr.mxu0 0.0
    %3137 = vmatpush1.msra.mxu0 %v3126
    %3138 = vmatprep.subr.mxu0 0.0
    %3139 = vmatpush1.msra.mxu0 %v3128
    %3140 = vmatprep.subr.mxu0 0.0
    %3141 = vmatpush1.msra.mxu0 %v3130
    %3142 = vmatprep.subr.mxu0 0.0
    %3143 = vmatpush1.msra.mxu0 0.0
    %3144 = vmatprep.subr.mxu0 0.0
    %3145 = vmatpush1.msra.mxu0 0.0
    %3146 = vmatprep.subr.mxu0 0.0
    %3147 = vmatpush1.msra.mxu0 0.0
    %3148 = vmatprep.subr.mxu0 0.0
    %3149 = vmatpush1.msra.mxu0 0.0
    %3150 = vmatprep.subr.mxu0 0.0
    %3151 = vmatpush1.msra.mxu0 0.0
    %3152 = vmatprep.subr.mxu0 0.0
    %3153 = vmatpush1.msra.mxu0 0.0
    %3154 = vmatprep.subr.mxu0 0.0
    %3155 = vmatpush1.msra.mxu0 0.0
    %3156 = vmatprep.subr.mxu0 0.0
    %3157 = vmatpush1.msra.mxu0 0.0
    %3158 = vmatprep.subr.mxu0 0.0
    %3159 = vmatpush1.msra.mxu0 0.0
    %3160 = vmatprep.subr.mxu0 0.0
    %3161 = vmatpush1.msra.mxu0 0.0
    %3162 = vmatprep.subr.mxu0 0.0
    %3163 = vmatpush1.msra.mxu0 0.0
    %3164 = vmatprep.subr.mxu0 0.0
    %3165 = vmatpush1.msra.mxu0 0.0
    %3166 = vmatprep.subr.mxu0 0.0
    %3167 = vmatpush1.msra.mxu0 0.0
    %3168 = vmatprep.subr.mxu0 0.0
    %3169 = vmatpush1.msra.mxu0 0.0
    %3170 = vmatprep.subr.mxu0 0.0
    %3171 = vmatpush1.msra.mxu0 0.0
    %3172 = vmatprep.subr.mxu0 0.0
    %3173 = vmatpush1.msra.mxu0 0.0
    %3174 = vmatprep.subr.mxu0 0.0
    %3175 = vmatpush1.msra.mxu0 0.0
    %3176 = vmatprep.subr.mxu0 0.0
    %3177 = vmatpush1.msra.mxu0 0.0
    %3178 = vmatprep.subr.mxu0 0.0
    %3179 = vmatpush1.msra.mxu0 0.0
    %3180 = vmatprep.subr.mxu0 0.0
    %3181 = vmatpush1.msra.mxu0 0.0
    %3182 = vmatprep.subr.mxu0 0.0
    %3183 = vmatpush1.msra.mxu0 0.0
    %3184 = vmatprep.subr.mxu0 0.0
    %3185 = vmatpush1.msra.mxu0 0.0
    %3186 = vmatprep.subr.mxu0 0.0
    %3187 = vmatpush1.msra.mxu0 0.0
    %3188 = vmatprep.subr.mxu0 0.0
    %3189 = vmatpush1.msra.mxu0 0.0
    %3190 = vmatprep.subr.mxu0 0.0
    %3191 = vmatpush1.msra.mxu0 0.0
    %3192 = vmatprep.subr.mxu0 0.0
    %3193 = vmatpush1.msra.mxu0 0.0
    %3194 = vmatprep.subr.mxu0 0.0
    %3195 = vmatpush1.msra.mxu0 0.0
    %3196 = vmatprep.subr.mxu0 0.0
    %3197 = vmatpush1.msra.mxu0 0.0
    %3198 = vmatprep.subr.mxu0 0.0
    %3199 = vmatpush1.msra.mxu0 0.0
    %3200 = vmatprep.mubr.f32.mxu0 0.0
    %3201 = vmatmul.mubr.f32.gmra.mrb[0].mxu0 %v3134
    %v3202 = vpop.f32.mrb[0].mxu0
    %v3203 = vadd.f32 0.0, %v3202
    %v3204 = vpop.f32.mrb[0].mxu0
    %3205 = vdwg.mxu0
    %v3206 = vld [vmem:[%s11] sm:$0xff]
    %v3207 = vld [vmem:[%s11 + $0x8] sm:$0xff]
    %v3208 = vld [vmem:[%s11 + $0x10] sm:$0xff]
    %v3209 = vld [vmem:[%s11 + $0x18] sm:$0xff]
    %v3210 = vld [vmem:[%s11 + $0x20] sm:$0xff]
    %v3211 = vld [vmem:[%s11 + $0x28] sm:$0xff]
    %s3212 = scalar_lea.vmem %s10, 8
    %v3213 = vld [vmem:[%s3212] sm:$0xff]
    %v3215 = vsel %vm3132, %v3213, 0
    %3217 = vmatprep.subr.mxu0 0.0
    %3218 = vmatpush1.msra.mxu0 %v3126
    %3219 = vmatprep.subr.mxu0 0.0
    %3220 = vmatpush1.msra.mxu0 %v3128
    %3221 = vmatprep.subr.mxu0 0.0
    %3222 = vmatpush1.msra.mxu0 %v3130
    %3223 = vmatprep.subr.mxu0 0.0
    %3224 = vmatpush1.msra.mxu0 0.0
    %3225 = vmatprep.subr.mxu0 0.0
    %3226 = vmatpush1.msra.mxu0 0.0
    %3227 = vmatprep.subr.mxu0 0.0
    %3228 = vmatpush1.msra.mxu0 0.0
    %3229 = vmatprep.subr.mxu0 0.0
    %3230 = vmatpush1.msra.mxu0 0.0
    %3231 = vmatprep.subr.mxu0 0.0
    %3232 = vmatpush1.msra.mxu0 0.0
    %3233 = vmatprep.subr.mxu0 0.0
    %3234 = vmatpush1.msra.mxu0 0.0
    %3235 = vmatprep.subr.mxu0 0.0
    %3236 = vmatpush1.msra.mxu0 0.0
    %3237 = vmatprep.subr.mxu0 0.0
    %3238 = vmatpush1.msra.mxu0 0.0
    %3239 = vmatprep.subr.mxu0 0.0
    %3240 = vmatpush1.msra.mxu0 0.0
    %3241 = vmatprep.subr.mxu0 0.0
    %3242 = vmatpush1.msra.mxu0 0.0
    %3243 = vmatprep.subr.mxu0 0.0
    %3244 = vmatpush1.msra.mxu0 0.0
    %3245 = vmatprep.subr.mxu0 0.0
    %3246 = vmatpush1.msra.mxu0 0.0
    %3247 = vmatprep.subr.mxu0 0.0
    %3248 = vmatpush1.msra.mxu0 0.0
    %3249 = vmatprep.subr.mxu0 0.0
    %3250 = vmatpush1.msra.mxu0 0.0
    %3251 = vmatprep.subr.mxu0 0.0
    %3252 = vmatpush1.msra.mxu0 0.0
    %3253 = vmatprep.subr.mxu0 0.0
    %3254 = vmatpush1.msra.mxu0 0.0
    %3255 = vmatprep.subr.mxu0 0.0
    %3256 = vmatpush1.msra.mxu0 0.0
    %3257 = vmatprep.subr.mxu0 0.0
    %3258 = vmatpush1.msra.mxu0 0.0
    %3259 = vmatprep.subr.mxu0 0.0
    %3260 = vmatpush1.msra.mxu0 0.0
    %3261 = vmatprep.subr.mxu0 0.0
    %3262 = vmatpush1.msra.mxu0 0.0
    %3263 = vmatprep.subr.mxu0 0.0
    %3264 = vmatpush1.msra.mxu0 0.0
    %3265 = vmatprep.subr.mxu0 0.0
    %3266 = vmatpush1.msra.mxu0 0.0
    %3267 = vmatprep.subr.mxu0 0.0
    %3268 = vmatpush1.msra.mxu0 0.0
    %3269 = vmatprep.subr.mxu0 0.0
    %3270 = vmatpush1.msra.mxu0 0.0
    %3271 = vmatprep.subr.mxu0 0.0
    %3272 = vmatpush1.msra.mxu0 0.0
    %3273 = vmatprep.subr.mxu0 0.0
    %3274 = vmatpush1.msra.mxu0 0.0
    %3275 = vmatprep.subr.mxu0 0.0
    %3276 = vmatpush1.msra.mxu0 0.0
    %3277 = vmatprep.subr.mxu0 0.0
    %3278 = vmatpush1.msra.mxu0 0.0
    %3279 = vmatprep.subr.mxu0 0.0
    %3280 = vmatpush1.msra.mxu0 0.0
    %3281 = vmatprep.mubr.f32.mxu0 0.0
    %3282 = vmatmul.mubr.f32.gmra.mrb[0].mxu0 %v3215
    %v3283 = vpop.f32.mrb[0].mxu0
    %v3284 = vadd.f32 0.0, %v3283
    %v3285 = vpop.f32.mrb[0].mxu0
    %3286 = vdwg.mxu0
    %s3287 = scalar_lea.vmem %s11, 48
    %v3288 = vld [vmem:[%s3287] sm:$0xff]
    %v3289 = vld [vmem:[%s3287 + $0x8] sm:$0xff]
    %v3290 = vld [vmem:[%s3287 + $0x10] sm:$0xff]
    %v3291 = vld [vmem:[%s3287 + $0x18] sm:$0xff]
    %v3292 = vld [vmem:[%s3287 + $0x20] sm:$0xff]
    %v3293 = vld [vmem:[%s3287 + $0x28] sm:$0xff]
    %vm3294 = vcmask 392192
    %v3296 = vsel %vm3294, %v3284, 0
    %3298 = vmatprep.subr.mxu0 0.0
    %3299 = vmatpush1.msra.mxu0 %v3288
    %3300 = vmatprep.subr.mxu0 0.0
    %3301 = vmatpush1.msra.mxu0 %v3289
    %3302 = vmatprep.subr.mxu0 0.0
    %3303 = vmatpush1.msra.mxu0 %v3290
    %3304 = vmatprep.subr.mxu0 0.0
    %3305 = vmatpush1.msra.mxu0 %v3291
    %3306 = vmatprep.subr.mxu0 0.0
    %3307 = vmatpush1.msra.mxu0 %v3292
    %3308 = vmatprep.subr.mxu0 0.0
    %3309 = vmatpush1.msra.mxu0 %v3293
    %3310 = vmatprep.subr.mxu0 0.0
    %3311 = vmatpush1.msra.mxu0 0.0
    %3312 = vmatprep.subr.mxu0 0.0
    %3313 = vmatpush1.msra.mxu0 0.0
    %3314 = vmatprep.subr.mxu0 0.0
    %3315 = vmatpush1.msra.mxu0 0.0
    %3316 = vmatprep.subr.mxu0 0.0
    %3317 = vmatpush1.msra.mxu0 0.0
    %3318 = vmatprep.subr.mxu0 0.0
    %3319 = vmatpush1.msra.mxu0 0.0
    %3320 = vmatprep.subr.mxu0 0.0
    %3321 = vmatpush1.msra.mxu0 0.0
    %3322 = vmatprep.subr.mxu0 0.0
    %3323 = vmatpush1.msra.mxu0 0.0
    %3324 = vmatprep.subr.mxu0 0.0
    %3325 = vmatpush1.msra.mxu0 0.0
    %3326 = vmatprep.subr.mxu0 0.0
    %3327 = vmatpush1.msra.mxu0 0.0
    %3328 = vmatprep.subr.mxu0 0.0
    %3329 = vmatpush1.msra.mxu0 0.0
    %3330 = vmatprep.subr.mxu0 0.0
    %3331 = vmatpush1.msra.mxu0 0.0
    %3332 = vmatprep.subr.mxu0 0.0
    %3333 = vmatpush1.msra.mxu0 0.0
    %3334 = vmatprep.subr.mxu0 0.0
    %3335 = vmatpush1.msra.mxu0 0.0
    %3336 = vmatprep.subr.mxu0 0.0
    %3337 = vmatpush1.msra.mxu0 0.0
    %3338 = vmatprep.subr.mxu0 0.0
    %3339 = vmatpush1.msra.mxu0 0.0
    %3340 = vmatprep.subr.mxu0 0.0
    %3341 = vmatpush1.msra.mxu0 0.0
    %3342 = vmatprep.subr.mxu0 0.0
    %3343 = vmatpush1.msra.mxu0 0.0
    %3344 = vmatprep.subr.mxu0 0.0
    %3345 = vmatpush1.msra.mxu0 0.0
    %3346 = vmatprep.subr.mxu0 0.0
    %3347 = vmatpush1.msra.mxu0 0.0
    %3348 = vmatprep.subr.mxu0 0.0
    %3349 = vmatpush1.msra.mxu0 0.0
    %3350 = vmatprep.subr.mxu0 0.0
    %3351 = vmatpush1.msra.mxu0 0.0
    %3352 = vmatprep.subr.mxu0 0.0
    %3353 = vmatpush1.msra.mxu0 0.0
    %3354 = vmatprep.subr.mxu0 0.0
    %3355 = vmatpush1.msra.mxu0 0.0
    %3356 = vmatprep.subr.mxu0 0.0
    %3357 = vmatpush1.msra.mxu0 0.0
    %3358 = vmatprep.subr.mxu0 0.0
    %3359 = vmatpush1.msra.mxu0 0.0
    %3360 = vmatprep.subr.mxu0 0.0
    %3361 = vmatpush1.msra.mxu0 0.0
    %3362 = vmatprep.mubr.f32.mxu0 0.0
    %3363 = vmatmul.mubr.f32.gmra.mrb[0].mxu0 %v3296
    %v3364 = vpop.f32.mrb[0].mxu0
    %v3365 = vadd.f32 0.0, %v3364
    %v3366 = vpop.f32.mrb[0].mxu0
    %3367 = vdwg.mxu0
    %v3369 = vsel %vm3294, %v3203, 0
    %3371 = vmatprep.subr.mxu0 0.0
    %3372 = vmatpush1.msra.mxu0 %v3206
    %3373 = vmatprep.subr.mxu0 0.0
    %3374 = vmatpush1.msra.mxu0 %v3207
    %3375 = vmatprep.subr.mxu0 0.0
    %3376 = vmatpush1.msra.mxu0 %v3208
    %3377 = vmatprep.subr.mxu0 0.0
    %3378 = vmatpush1.msra.mxu0 %v3209
    %3379 = vmatprep.subr.mxu0 0.0
    %3380 = vmatpush1.msra.mxu0 %v3210
    %3381 = vmatprep.subr.mxu0 0.0
    %3382 = vmatpush1.msra.mxu0 %v3211
    %3383 = vmatprep.subr.mxu0 0.0
    %3384 = vmatpush1.msra.mxu0 0.0
    %3385 = vmatprep.subr.mxu0 0.0
    %3386 = vmatpush1.msra.mxu0 0.0
    %3387 = vmatprep.subr.mxu0 0.0
    %3388 = vmatpush1.msra.mxu0 0.0
    %3389 = vmatprep.subr.mxu0 0.0
    %3390 = vmatpush1.msra.mxu0 0.0
    %3391 = vmatprep.subr.mxu0 0.0
    %3392 = vmatpush1.msra.mxu0 0.0
    %3393 = vmatprep.subr.mxu0 0.0
    %3394 = vmatpush1.msra.mxu0 0.0
    %3395 = vmatprep.subr.mxu0 0.0
    %3396 = vmatpush1.msra.mxu0 0.0
    %3397 = vmatprep.subr.mxu0 0.0
    %3398 = vmatpush1.msra.mxu0 0.0
    %3399 = vmatprep.subr.mxu0 0.0
    %3400 = vmatpush1.msra.mxu0 0.0
    %3401 = vmatprep.subr.mxu0 0.0
    %3402 = vmatpush1.msra.mxu0 0.0
    %3403 = vmatprep.subr.mxu0 0.0
    %3404 = vmatpush1.msra.mxu0 0.0
    %3405 = vmatprep.subr.mxu0 0.0
    %3406 = vmatpush1.msra.mxu0 0.0
    %3407 = vmatprep.subr.mxu0 0.0
    %3408 = vmatpush1.msra.mxu0 0.0
    %3409 = vmatprep.subr.mxu0 0.0
    %3410 = vmatpush1.msra.mxu0 0.0
    %3411 = vmatprep.subr.mxu0 0.0
    %3412 = vmatpush1.msra.mxu0 0.0
    %3413 = vmatprep.subr.mxu0 0.0
    %3414 = vmatpush1.msra.mxu0 0.0
    %3415 = vmatprep.subr.mxu0 0.0
    %3416 = vmatpush1.msra.mxu0 0.0
    %3417 = vmatprep.subr.mxu0 0.0
    %3418 = vmatpush1.msra.mxu0 0.0
    %3419 = vmatprep.subr.mxu0 0.0
    %3420 = vmatpush1.msra.mxu0 0.0
    %3421 = vmatprep.subr.mxu0 0.0
    %3422 = vmatpush1.msra.mxu0 0.0
    %3423 = vmatprep.subr.mxu0 0.0
    %3424 = vmatpush1.msra.mxu0 0.0
    %3425 = vmatprep.subr.mxu0 0.0
    %3426 = vmatpush1.msra.mxu0 0.0
    %3427 = vmatprep.subr.mxu0 0.0
    %3428 = vmatpush1.msra.mxu0 0.0
    %3429 = vmatprep.subr.mxu0 0.0
    %3430 = vmatpush1.msra.mxu0 0.0
    %3431 = vmatprep.subr.mxu0 0.0
    %3432 = vmatpush1.msra.mxu0 0.0
    %3433 = vmatprep.subr.mxu0 0.0
    %3434 = vmatpush1.msra.mxu0 0.0
    %3435 = vmatprep.mubr.f32.mxu0 0.0
    %3436 = vmatmul.mubr.f32.gmra.mrb[0].mxu0 %v3369
    %v3437 = vpop.f32.mrb[0].mxu0
    %v3438 = vadd.f32 %v3365, %v3437
    %v3439 = vpop.f32.mrb[0].mxu0
    %3440 = vdwg.mxu0
    %s3441 = scalar_lea.vmem %s10, 16
    %v3442 = vld [vmem:[%s3441] sm:$0xff]
    %v3444 = vsel %vm3132, %v3442, 0
    %3446 = vmatprep.subr.mxu0 0.0
    %3447 = vmatpush1.msra.mxu0 %v3126
    %3448 = vmatprep.subr.mxu0 0.0
    %3449 = vmatpush1.msra.mxu0 %v3128
    %3450 = vmatprep.subr.mxu0 0.0
    %3451 = vmatpush1.msra.mxu0 %v3130
    %3452 = vmatprep.subr.mxu0 0.0
    %3453 = vmatpush1.msra.mxu0 0.0
    %3454 = vmatprep.subr.mxu0 0.0
    %3455 = vmatpush1.msra.mxu0 0.0
    %3456 = vmatprep.subr.mxu0 0.0
    %3457 = vmatpush1.msra.mxu0 0.0
    %3458 = vmatprep.subr.mxu0 0.0
    %3459 = vmatpush1.msra.mxu0 0.0
    %3460 = vmatprep.subr.mxu0 0.0
    %3461 = vmatpush1.msra.mxu0 0.0
    %3462 = vmatprep.subr.mxu0 0.0
    %3463 = vmatpush1.msra.mxu0 0.0
    %3464 = vmatprep.subr.mxu0 0.0
    %3465 = vmatpush1.msra.mxu0 0.0
    %3466 = vmatprep.subr.mxu0 0.0
    %3467 = vmatpush1.msra.mxu0 0.0
    %3468 = vmatprep.subr.mxu0 0.0
    %3469 = vmatpush1.msra.mxu0 0.0
    %3470 = vmatprep.subr.mxu0 0.0
    %3471 = vmatpush1.msra.mxu0 0.0
    %3472 = vmatprep.subr.mxu0 0.0
    %3473 = vmatpush1.msra.mxu0 0.0
    %3474 = vmatprep.subr.mxu0 0.0
    %3475 = vmatpush1.msra.mxu0 0.0
    %3476 = vmatprep.subr.mxu0 0.0
    %3477 = vmatpush1.msra.mxu0 0.0
    %3478 = vmatprep.subr.mxu0 0.0
    %3479 = vmatpush1.msra.mxu0 0.0
    %3480 = vmatprep.subr.mxu0 0.0
    %3481 = vmatpush1.msra.mxu0 0.0
    %3482 = vmatprep.subr.mxu0 0.0
    %3483 = vmatpush1.msra.mxu0 0.0
    %3484 = vmatprep.subr.mxu0 0.0
    %3485 = vmatpush1.msra.mxu0 0.0
    %3486 = vmatprep.subr.mxu0 0.0
    %3487 = vmatpush1.msra.mxu0 0.0
    %3488 = vmatprep.subr.mxu0 0.0
    %3489 = vmatpush1.msra.mxu0 0.0
    %3490 = vmatprep.subr.mxu0 0.0
    %3491 = vmatpush1.msra.mxu0 0.0
    %3492 = vmatprep.subr.mxu0 0.0
    %3493 = vmatpush1.msra.mxu0 0.0
    %3494 = vmatprep.subr.mxu0 0.0
    %3495 = vmatpush1.msra.mxu0 0.0
    %3496 = vmatprep.subr.mxu0 0.0
    %3497 = vmatpush1.msra.mxu0 0.0
    %3498 = vmatprep.subr.mxu0 0.0
    %3499 = vmatpush1.msra.mxu0 0.0
    %3500 = vmatprep.subr.mxu0 0.0
    %3501 = vmatpush1.msra.mxu0 0.0
    %3502 = vmatprep.subr.mxu0 0.0
    %3503 = vmatpush1.msra.mxu0 0.0
    %3504 = vmatprep.subr.mxu0 0.0
    %3505 = vmatpush1.msra.mxu0 0.0
    %3506 = vmatprep.subr.mxu0 0.0
    %3507 = vmatpush1.msra.mxu0 0.0
    %3508 = vmatprep.subr.mxu0 0.0
    %3509 = vmatpush1.msra.mxu0 0.0
    %3510 = vmatprep.mubr.f32.mxu0 0.0
    %3511 = vmatmul.mubr.f32.gmra.mrb[0].mxu0 %v3444
    %v3512 = vpop.f32.mrb[0].mxu0
    %v3513 = vadd.f32 0.0, %v3512
    %v3514 = vpop.f32.mrb[0].mxu0
    %3515 = vdwg.mxu0
    %s3516 = scalar_lea.vmem %s11, 96
    %v3517 = vld [vmem:[%s3516] sm:$0xff]
    %v3518 = vld [vmem:[%s3516 + $0x8] sm:$0xff]
    %v3519 = vld [vmem:[%s3516 + $0x10] sm:$0xff]
    %v3520 = vld [vmem:[%s3516 + $0x18] sm:$0xff]
    %v3521 = vld [vmem:[%s3516 + $0x20] sm:$0xff]
    %v3522 = vld [vmem:[%s3516 + $0x28] sm:$0xff]
    %v3524 = vsel %vm3294, %v3513, 0
    %3526 = vmatprep.subr.mxu0 0.0
    %3527 = vmatpush1.msra.mxu0 %v3517
    %3528 = vmatprep.subr.mxu0 0.0
    %3529 = vmatpush1.msra.mxu0 %v3518
    %3530 = vmatprep.subr.mxu0 0.0
    %3531 = vmatpush1.msra.mxu0 %v3519
    %3532 = vmatprep.subr.mxu0 0.0
    %3533 = vmatpush1.msra.mxu0 %v3520
    %3534 = vmatprep.subr.mxu0 0.0
    %3535 = vmatpush1.msra.mxu0 %v3521
    %3536 = vmatprep.subr.mxu0 0.0
    %3537 = vmatpush1.msra.mxu0 %v3522
    %3538 = vmatprep.subr.mxu0 0.0
    %3539 = vmatpush1.msra.mxu0 0.0
    %3540 = vmatprep.subr.mxu0 0.0
    %3541 = vmatpush1.msra.mxu0 0.0
    %3542 = vmatprep.subr.mxu0 0.0
    %3543 = vmatpush1.msra.mxu0 0.0
    %3544 = vmatprep.subr.mxu0 0.0
    %3545 = vmatpush1.msra.mxu0 0.0
    %3546 = vmatprep.subr.mxu0 0.0
    %3547 = vmatpush1.msra.mxu0 0.0
    %3548 = vmatprep.subr.mxu0 0.0
    %3549 = vmatpush1.msra.mxu0 0.0
    %3550 = vmatprep.subr.mxu0 0.0
    %3551 = vmatpush1.msra.mxu0 0.0
    %3552 = vmatprep.subr.mxu0 0.0
    %3553 = vmatpush1.msra.mxu0 0.0
    %3554 = vmatprep.subr.mxu0 0.0
    %3555 = vmatpush1.msra.mxu0 0.0
    %3556 = vmatprep.subr.mxu0 0.0
    %3557 = vmatpush1.msra.mxu0 0.0
    %3558 = vmatprep.subr.mxu0 0.0
    %3559 = vmatpush1.msra.mxu0 0.0
    %3560 = vmatprep.subr.mxu0 0.0
    %3561 = vmatpush1.msra.mxu0 0.0
    %3562 = vmatprep.subr.mxu0 0.0
    %3563 = vmatpush1.msra.mxu0 0.0
    %3564 = vmatprep.subr.mxu0 0.0
    %3565 = vmatpush1.msra.mxu0 0.0
    %3566 = vmatprep.subr.mxu0 0.0
    %3567 = vmatpush1.msra.mxu0 0.0
    %3568 = vmatprep.subr.mxu0 0.0
    %3569 = vmatpush1.msra.mxu0 0.0
    %3570 = vmatprep.subr.mxu0 0.0
    %3571 = vmatpush1.msra.mxu0 0.0
    %3572 = vmatprep.subr.mxu0 0.0
    %3573 = vmatpush1.msra.mxu0 0.0
    %3574 = vmatprep.subr.mxu0 0.0
    %3575 = vmatpush1.msra.mxu0 0.0
    %3576 = vmatprep.subr.mxu0 0.0
    %3577 = vmatpush1.msra.mxu0 0.0
    %3578 = vmatprep.subr.mxu0 0.0
    %3579 = vmatpush1.msra.mxu0 0.0
    %3580 = vmatprep.subr.mxu0 0.0
    %3581 = vmatpush1.msra.mxu0 0.0
    %3582 = vmatprep.subr.mxu0 0.0
    %3583 = vmatpush1.msra.mxu0 0.0
    %3584 = vmatprep.subr.mxu0 0.0
    %3585 = vmatpush1.msra.mxu0 0.0
    %3586 = vmatprep.subr.mxu0 0.0
    %3587 = vmatpush1.msra.mxu0 0.0
    %3588 = vmatprep.subr.mxu0 0.0
    %3589 = vmatpush1.msra.mxu0 0.0
    %3590 = vmatprep.mubr.f32.mxu0 0.0
    %3591 = vmatmul.mubr.f32.gmra.mrb[0].mxu0 %v3524
    %v3592 = vpop.f32.mrb[0].mxu0
    %v3593 = vadd.f32 0.0, %v3592
    %v3594 = vpop.f32.mrb[0].mxu0
    %3595 = vdwg.mxu0
    %v3596 = vadd.f32 %v3438, %v3593
    %v3597 = vld [vmem:[%s12] sm:$0x1]
    %v3599 = vlaneseq
    %v3600 = vshrl.u32 %v3599, 7
    %v3601 = vsub.s32 0, %v3600
    %v3602 = vrot.slane %v3597, %v3601
    %v3604 = vadd.f32 %v3596, %v3602
    %v3605 = vxor.u32 %v3604, 2147483648
    %v3606 = vmul.f32 %v3605, 1.442695
    %v3607 = vpow.pop %v3606
    %v3608 = vadd.f32 %v3607, 1.0
    %v3609 = vrcp.pop %v3608
    %v3610 = vmul.f32 1.0, %v3609
    %v3611 = vld [vmem:[#allocation6] sm:$0xff]
    %v3612 = vld [vmem:[#allocation6 + $0x8] sm:$0xff]
    %v3613 = vld [vmem:[%s14] sm:$0x1]
    %v3615 = vlaneseq
    %v3616 = vshrl.u32 %v3615, 7
    %v3617 = vsub.s32 0, %v3616
    %v3618 = vrot.slane %v3613, %v3617
    %vm3620 = vcmask 130048
    %v3622 = vsel %vm3620, %v3610, 0
    %3624 = vmatprep.subr.mxu0 0.0
    %3625 = vmatpush1.msra.mxu0 %v3611
    %3626 = vmatprep.subr.mxu0 0.0
    %3627 = vmatpush1.msra.mxu0 %v3612
    %3628 = vmatprep.subr.mxu0 0.0
    %3629 = vmatpush1.msra.mxu0 0.0
    %3630 = vmatprep.subr.mxu0 0.0
    %3631 = vmatpush1.msra.mxu0 0.0
    %3632 = vmatprep.subr.mxu0 0.0
    %3633 = vmatpush1.msra.mxu0 0.0
    %3634 = vmatprep.subr.mxu0 0.0
    %3635 = vmatpush1.msra.mxu0 0.0
    %3636 = vmatprep.subr.mxu0 0.0
    %3637 = vmatpush1.msra.mxu0 0.0
    %3638 = vmatprep.subr.mxu0 0.0
    %3639 = vmatpush1.msra.mxu0 0.0
    %3640 = vmatprep.subr.mxu0 0.0
    %3641 = vmatpush1.msra.mxu0 0.0
    %3642 = vmatprep.subr.mxu0 0.0
    %3643 = vmatpush1.msra.mxu0 0.0
    %3644 = vmatprep.subr.mxu0 0.0
    %3645 = vmatpush1.msra.mxu0 0.0
    %3646 = vmatprep.subr.mxu0 0.0
    %3647 = vmatpush1.msra.mxu0 0.0
    %3648 = vmatprep.subr.mxu0 0.0
    %3649 = vmatpush1.msra.mxu0 0.0
    %3650 = vmatprep.subr.mxu0 0.0
    %3651 = vmatpush1.msra.mxu0 0.0
    %3652 = vmatprep.subr.mxu0 0.0
    %3653 = vmatpush1.msra.mxu0 0.0
    %3654 = vmatprep.subr.mxu0 0.0
    %3655 = vmatpush1.msra.mxu0 0.0
    %3656 = vmatprep.subr.mxu0 0.0
    %3657 = vmatpush1.msra.mxu0 0.0
    %3658 = vmatprep.subr.mxu0 0.0
    %3659 = vmatpush1.msra.mxu0 0.0
    %3660 = vmatprep.subr.mxu0 0.0
    %3661 = vmatpush1.msra.mxu0 0.0
    %3662 = vmatprep.subr.mxu0 0.0
    %3663 = vmatpush1.msra.mxu0 0.0
    %3664 = vmatprep.subr.mxu0 0.0
    %3665 = vmatpush1.msra.mxu0 0.0
    %3666 = vmatprep.subr.mxu0 0.0
    %3667 = vmatpush1.msra.mxu0 0.0
    %3668 = vmatprep.subr.mxu0 0.0
    %3669 = vmatpush1.msra.mxu0 0.0
    %3670 = vmatprep.subr.mxu0 0.0
    %3671 = vmatpush1.msra.mxu0 0.0
    %3672 = vmatprep.subr.mxu0 0.0
    %3673 = vmatpush1.msra.mxu0 0.0
    %3674 = vmatprep.subr.mxu0 0.0
    %3675 = vmatpush1.msra.mxu0 0.0
    %3676 = vmatprep.subr.mxu0 0.0
    %3677 = vmatpush1.msra.mxu0 0.0
    %3678 = vmatprep.subr.mxu0 0.0
    %3679 = vmatpush1.msra.mxu0 0.0
    %3680 = vmatprep.subr.mxu0 0.0
    %3681 = vmatpush1.msra.mxu0 0.0
    %3682 = vmatprep.subr.mxu0 0.0
    %3683 = vmatpush1.msra.mxu0 0.0
    %3684 = vmatprep.subr.mxu0 0.0
    %3685 = vmatpush1.msra.mxu0 0.0
    %3686 = vmatprep.subr.mxu0 0.0
    %3687 = vmatpush1.msra.mxu0 0.0
    %3688 = vmatprep.mubr.f32.mxu0 0.0
    %3689 = vmatmul.mubr.f32.gmra.mrb[0].mxu0 %v3622
    %v3690 = vpop.f32.mrb[0].mxu0
    %v3691 = vadd.f32 %v3618, %v3690
    %v3692 = vpop.f32.mrb[0].mxu0
    %3693 = vdwg.mxu0
    %3694 = vst [vmem:[%s15] sm:$0xff] %v3691
    // Predicated region
    $region74: #{mnist_forward.1} parent=1 // pred_check
      _
    $region75: #{mnist_forward.1} parent=1 // pred_check_branch
      %3696 = sbr.rel (0) target = $region77
    $region76: #{mnist_forward.1} parent=1 // pred_region
      _
    $region77: #{mnist_forward.1} parent=1 // pred_fallthru
      _
    // Predicated region
    $region78: #{mnist_forward.1} parent=1 // pred_check
      _
    $region79: #{mnist_forward.1} parent=1 // pred_check_branch
      %3698 = sbr.rel (0) target = $region81
    $region80: #{mnist_forward.1} parent=1 // pred_region
      _
    $region81: #{mnist_forward.1} parent=1 // pred_fallthru
      _
    %3699 = vsyncpa [#allocation3], 1
    %3700 = vsyncpa [#allocation5], 1

</llo_original>
